<compile_context>
chip_gen: v7x
topology: tpu7x:2x2x1
jax: 0.10.0
libtpu: 0.0.40
codegen_flags: <defaults>
</compile_context>

<pallas_src>
import jax
import jax.numpy as jnp
from jax.experimental import pallas as pl
from jax.experimental.pallas import tpu as pltpu  # noqa: F401  (not needed at this size)


# ---------------------------------------------------------------------------
# Model configuration (small, consistent with the module's __init__)
# ---------------------------------------------------------------------------
D_INPUT     = 4                 # continuous features
N_EMBEDDING = (5, 7)            # vocab sizes of the categorical columns
D_EMBEDDING = 6                 # embedding dim per categorical column
D_MODEL     = 32                # LSTM hidden size (4*H = 128 -> one lane tile)
N_LAYERS    = 3
B, T        = 2, 8              # batch, sequence length
D_IN        = D_INPUT + len(N_EMBEDDING) * D_EMBEDDING   # LSTM input size (16)
G           = 4 * D_MODEL                                 # gate width (128)


def _round8(n):
    return -(-n // 8) * 8


def _slab_layout():
    """Row offsets of every weight/bias segment inside the packed slab.

    Each segment starts on an 8-row (sublane-tile) boundary so static ref
    slices are aligned windows.
    """
    offs = {}
    row = 0
    for l in range(N_LAYERS):
        in_rows = D_IN if l == 0 else D_MODEL
        offs[("wih", l)] = row
        row += _round8(in_rows)
        offs[("whh", l)] = row
        row += _round8(D_MODEL)
        offs[("b", l)] = row
        row += 8
    return offs, row


_W_OFFS, W_ROWS = _slab_layout()          # W_ROWS = 200 rows x 128 lanes f32


# ---------------------------------------------------------------------------
# Pallas kernel: whole stacked-LSTM recurrence in one invocation
# ---------------------------------------------------------------------------
def _encoder_lstm_kernel(x_ref,        # (T*B, D_IN)  time-major rows (t*B + b)
                         w_ref,        # (W_ROWS, 4H) packed weight slab
                         o_ref):       # (N_LAYERS, 2*B*H) lane-dense h||c slab
    H = D_MODEL

    def wseg(kind, layer, nrows):
        off = _W_OFFS[(kind, layer)]
        return w_ref[off:off + nrows, :]

    # ---- hoisted weight loads / bias broadcasts (reused by the unrolled loop)
    wih0 = wseg("wih", 0, D_IN)
    whh0 = wseg("whh", 0, H)
    b0   = wseg("b",   0, 1)
    wih1 = wseg("wih", 1, H)
    whh1 = wseg("whh", 1, H)
    wih2 = wseg("wih", 2, H)
    whh2 = wseg("whh", 2, H)
    b1b = jnp.broadcast_to(wseg("b", 1, 1), (B, G))
    b2b = jnp.broadcast_to(wseg("b", 2, 1), (B, G))

    # ---- prologue: batched layer-0 input projection over all time steps ----
    # Rows are time-major, so z0[t*B:(t+1)*B] is a contiguous 2-sublane slice.
    z0 = jnp.dot(x_ref[...], wih0, preferred_element_type=jnp.float32) + b0

    def cell_update(gates, c_prev):
        sg = jax.nn.sigmoid(gates)           # one full-width (B, 4H) sigmoid
        i_g = sg[:, 0 * H:1 * H]
        f_g = sg[:, 1 * H:2 * H]
        o_g = sg[:, 3 * H:4 * H]
        g_g = jnp.tanh(gates[:, 2 * H:3 * H])
        c_new = f_g * c_prev + i_g * g_g
        h_new = o_g * jnp.tanh(c_new)
        return h_new, c_new

    zeros = jnp.zeros((B, H), jnp.float32)
    h = [zeros] * N_LAYERS
    c = [zeros] * N_LAYERS

    # ---- recurrence: fully unrolled static time loop (T is small/static) ---
    # All matmuls use split W_ih / W_hh weights; the W_hh terms depend only on
    # the previous step's hidden state and are scheduled off the critical path.
    for t in range(T):
        # layer 0: precomputed i2h (+bias) + recurrent h2h
        g0 = z0[t * B:(t + 1) * B, :] + jnp.dot(
            h[0], whh0, preferred_element_type=jnp.float32)
        h[0], c[0] = cell_update(g0, c[0])

        # layer 1 (h[1] on the RHS is still the previous step's state)
        g1 = (jnp.dot(h[0], wih1, preferred_element_type=jnp.float32)
              + jnp.dot(h[1], whh1, preferred_element_type=jnp.float32)
              + b1b)
        h[1], c[1] = cell_update(g1, c[1])

        # layer 2
        g2 = (jnp.dot(h[1], wih2, preferred_element_type=jnp.float32)
              + jnp.dot(h[2], whh2, preferred_element_type=jnp.float32)
              + b2b)
        h[2], c[2] = cell_update(g2, c[2])

    # ---- epilogue: one lane-dense packed output ----------------------------
    # Row l lanes: [h_b0 | c_b0 | h_b1 | c_b1]  (each H=32 wide) -> 128 lanes.
    rows = []
    for l in range(N_LAYERS):
        parts = []
        for b in range(B):
            parts.append(h[l][b:b + 1, :])
            parts.append(c[l][b:b + 1, :])
        rows.append(jnp.concatenate(parts, axis=-1))       # (1, 2*B*H)
    o_ref[...] = jnp.concatenate(rows, axis=0)              # (N_LAYERS, 2*B*H)


def lstm_pallas(x_tm, w_slab):
    """x_tm: (T*B, D_IN) f32 time-major rows; w_slab: (W_ROWS, 4H) f32."""
    out_shape = jax.ShapeDtypeStruct((N_LAYERS, 2 * B * D_MODEL), jnp.float32)
    # No grid: single invocation; default BlockSpecs bring each full array
    # into VMEM (total footprint ~0.1 MiB << VMEM on any generation).
    return pl.pallas_call(_encoder_lstm_kernel, out_shape=out_shape)(x_tm, w_slab)


# ---------------------------------------------------------------------------
# Encoder forward (glue in plain JAX + Pallas LSTM hot path), jitted so the
# wrapper gather/concat/transpose/reshape fuse into one XLA dispatch around
# the kernel.
# ---------------------------------------------------------------------------
@jax.jit
def encoder_forward(conti, cate, emb_tables, w_slab):
    emb_parts = [emb_tables[i][cate[:, :, i]] for i in range(len(emb_tables))]
    emb_output = jnp.concatenate(emb_parts, axis=-1)        # (B, T, n_cate*d_emb)
    x = jnp.concatenate([conti, emb_output], axis=-1)        # (B, T, D_IN)
    # Time-major rows (t*B + b) so the kernel's per-step z0 slice is contiguous.
    x_tm = jnp.transpose(x, (1, 0, 2)).reshape(T * B, D_IN).astype(jnp.float32)
    packed = lstm_pallas(x_tm, w_slab)                       # (N_LAYERS, 2*B*H)
    packed = packed.reshape(N_LAYERS, B, 2, D_MODEL)
    hidden = packed[:, :, 0, :]                              # (N_LAYERS, B, H)
    cell = packed[:, :, 1, :]                                # (N_LAYERS, B, H)
    return hidden, cell


# ---------------------------------------------------------------------------
# Weight packing: one (W_ROWS, 4H) slab -> one input DMA, static slices inside
# the kernel.  Layout defined by _slab_layout().
# ---------------------------------------------------------------------------
def pack_kernel_weights(lstm_params):
    slab = jnp.zeros((W_ROWS, G), jnp.float32)
    for l in range(N_LAYERS):
        wih, whh, b = lstm_params[l]
        o = _W_OFFS[("wih", l)]
        slab = slab.at[o:o + wih.shape[0]].set(wih)
        o = _W_OFFS[("whh", l)]
        slab = slab.at[o:o + D_MODEL].set(whh)
        o = _W_OFFS[("b", l)]
        slab = slab.at[o:o + 1].set(b)
    return slab


# ---------------------------------------------------------------------------
# Pure-JAX reference (same math, highest precision, used only for a check)
# ---------------------------------------------------------------------------
def lstm_ref(x_tbd, params):
    H = D_MODEL
    hp = jax.lax.Precision.HIGHEST
    h0 = jnp.zeros((N_LAYERS, B, H), jnp.float32)
    c0 = jnp.zeros((N_LAYERS, B, H), jnp.float32)

    def step(carry, x_t):
        h, c = carry
        inp = x_t
        hs, cs = [], []
        for l in range(N_LAYERS):
            wih, whh, b = params[l]
            gates = (jnp.dot(inp, wih, precision=hp)
                     + jnp.dot(h[l], whh, precision=hp) + b)
            i_g = jax.nn.sigmoid(gates[:, 0 * H:1 * H])
            f_g = jax.nn.sigmoid(gates[:, 1 * H:2 * H])
            g_g = jnp.tanh(gates[:, 2 * H:3 * H])
            o_g = jax.nn.sigmoid(gates[:, 3 * H:4 * H])
            c_new = f_g * c[l] + i_g * g_g
            h_new = o_g * jnp.tanh(c_new)
            hs.append(h_new)
            cs.append(c_new)
            inp = h_new
        return (jnp.stack(hs), jnp.stack(cs)), None

    (h, c), _ = jax.lax.scan(step, (h0, c0), x_tbd)
    return h, c


# ---------------------------------------------------------------------------
# Deterministic parameter init + example run
# ---------------------------------------------------------------------------
def make_params(key):
    keys = jax.random.split(key, 2 + 4 * N_LAYERS)
    # embedding tables ~ N(0, 1)  (PyTorch nn.Embedding default)
    emb_tables = [
        jax.random.normal(keys[i], (n, D_EMBEDDING), jnp.float32)
        for i, n in enumerate(N_EMBEDDING)
    ]
    # LSTM weights ~ U(-1/sqrt(H), 1/sqrt(H)); stored pre-transposed
    # (W_ih^T: (in, 4H), W_hh^T: (H, 4H)); bias = b_ih + b_hh -> (1, 4H)
    bound = 1.0 / jnp.sqrt(jnp.float32(D_MODEL))
    lstm_params = []
    k = 2
    for l in range(N_LAYERS):
        in_size = D_IN if l == 0 else D_MODEL
        wih = jax.random.uniform(keys[k + 0], (in_size, 4 * D_MODEL),
                                 jnp.float32, -bound, bound)
        whh = jax.random.uniform(keys[k + 1], (D_MODEL, 4 * D_MODEL),
                                 jnp.float32, -bound, bound)
        b_ih = jax.random.uniform(keys[k + 2], (1, 4 * D_MODEL),
                                  jnp.float32, -bound, bound)
        b_hh = jax.random.uniform(keys[k + 3], (1, 4 * D_MODEL),
                                  jnp.float32, -bound, bound)
        lstm_params.append((wih, whh, b_ih + b_hh))
        k += 4
    return emb_tables, lstm_params


if __name__ == "__main__":
    root = jax.random.PRNGKey(0)
    k_param, k_conti, k_cate = jax.random.split(root, 3)

    emb_tables, lstm_params = make_params(k_param)
    w_slab = pack_kernel_weights(lstm_params)

    conti = jax.random.normal(k_conti, (B, T, D_INPUT), jnp.float32)
    cate_cols = []
    ck = k_cate
    for n in N_EMBEDDING:
        ck, sub = jax.random.split(ck)
        cate_cols.append(jax.random.randint(sub, (B, T, 1), 0, n, jnp.int32))
    cate = jnp.concatenate(cate_cols, axis=-1)               # (B, T, n_cate)

    hidden, cell = encoder_forward(conti, cate, emb_tables, w_slab)
    hidden = jax.block_until_ready(hidden)
    cell = jax.block_until_ready(cell)

    assert hidden.shape == (N_LAYERS, B, D_MODEL)
    assert cell.shape == (N_LAYERS, B, D_MODEL)

    # Correctness check against a pure-JAX reference of the same math
    # (all-f32 path -> tight tolerance per review feedback).
    emb_parts = [emb_tables[i][cate[:, :, i]] for i in range(len(emb_tables))]
    x = jnp.concatenate([conti, jnp.concatenate(emb_parts, axis=-1)], axis=-1)
    x_tbd = jnp.transpose(x, (1, 0, 2))
    h_ref, c_ref = lstm_ref(x_tbd, lstm_params)
    assert jnp.allclose(hidden, h_ref, rtol=1e-4, atol=1e-4)
    assert jnp.allclose(cell, c_ref, rtol=1e-4, atol=1e-4)

    print("KERNEL_OK")
</pallas_src>

<mosaic_0001>
module attributes {stable_mosaic.version = 11 : i64} {
  func.func @_encoder_lstm_kernel(%arg0: memref<16x16xf32, #tpu.memory_space<vmem>>, %arg1: memref<200x128xf32, #tpu.memory_space<vmem>>, %arg2: memref<3x128xf32, #tpu.memory_space<vmem>>) attributes {dimension_semantics = [], scalar_prefetch = 0 : i64, scratch_operands = 0 : i64, tpu.core_type = #tpu.core_type<tc>} {
    %c0 = arith.constant 0 : index
    %c0_0 = arith.constant 0 : index
    %0 = vector.load %arg1[%c0, %c0_0] : memref<200x128xf32, #tpu.memory_space<vmem>>, vector<16x128xf32>
    %c16 = arith.constant 16 : index
    %c0_1 = arith.constant 0 : index
    %1 = vector.load %arg1[%c16, %c0_1] : memref<200x128xf32, #tpu.memory_space<vmem>>, vector<32x128xf32>
    %c48 = arith.constant 48 : index
    %c0_2 = arith.constant 0 : index
    %2 = vector.load %arg1[%c48, %c0_2] : memref<200x128xf32, #tpu.memory_space<vmem>>, vector<1x128xf32>
    %c56 = arith.constant 56 : index
    %c0_3 = arith.constant 0 : index
    %3 = vector.load %arg1[%c56, %c0_3] : memref<200x128xf32, #tpu.memory_space<vmem>>, vector<32x128xf32>
    %c88 = arith.constant 88 : index
    %c0_4 = arith.constant 0 : index
    %4 = vector.load %arg1[%c88, %c0_4] : memref<200x128xf32, #tpu.memory_space<vmem>>, vector<32x128xf32>
    %c128 = arith.constant 128 : index
    %c0_5 = arith.constant 0 : index
    %5 = vector.load %arg1[%c128, %c0_5] : memref<200x128xf32, #tpu.memory_space<vmem>>, vector<32x128xf32>
    %c160 = arith.constant 160 : index
    %c0_6 = arith.constant 0 : index
    %6 = vector.load %arg1[%c160, %c0_6] : memref<200x128xf32, #tpu.memory_space<vmem>>, vector<32x128xf32>
    %c120 = arith.constant 120 : index
    %c0_7 = arith.constant 0 : index
    %7 = vector.load %arg1[%c120, %c0_7] : memref<200x128xf32, #tpu.memory_space<vmem>>, vector<1x128xf32>
    %8 = vector.shape_cast %7 : vector<1x128xf32> to vector<1x128xf32>
    %9 = vector.broadcast %8 : vector<1x128xf32> to vector<2x128xf32>
    %c192 = arith.constant 192 : index
    %c0_8 = arith.constant 0 : index
    %10 = vector.load %arg1[%c192, %c0_8] : memref<200x128xf32, #tpu.memory_space<vmem>>, vector<1x128xf32>
    %11 = vector.shape_cast %10 : vector<1x128xf32> to vector<1x128xf32>
    %12 = vector.broadcast %11 : vector<1x128xf32> to vector<2x128xf32>
    %c0_9 = arith.constant 0 : index
    %c0_10 = arith.constant 0 : index
    %13 = vector.load %arg0[%c0_9, %c0_10] : memref<16x16xf32, #tpu.memory_space<vmem>>, vector<16x16xf32>
    %cst = arith.constant dense<0.000000e+00> : vector<16x128xf32>
    %14 = tpu.matmul %13, %0, %cst {dimension_numbers = #tpu.dot_dimension_numbers<[1], [0], [0], [1], [0, 0, 1, 1], [], []>} : vector<16x16xf32>, vector<16x128xf32>, vector<16x128xf32> -> vector<16x128xf32>
    %15 = vector.broadcast %2 : vector<1x128xf32> to vector<16x128xf32>
    %16 = arith.addf %14, %15 : vector<16x128xf32>
    %cst_11 = arith.constant 0.000000e+00 : f32
    %17 = vector.broadcast %cst_11 : f32 to vector<2x32xf32>
    %18 = vector.extract_strided_slice %16 {offsets = [0, 0], sizes = [2, 128], strides = [1, 1]} : vector<16x128xf32> to vector<2x128xf32>
    %cst_12 = arith.constant dense<0.000000e+00> : vector<2x128xf32>
    %19 = tpu.matmul %17, %1, %cst_12 {dimension_numbers = #tpu.dot_dimension_numbers<[1], [0], [0], [1], [0, 0, 1, 1], [], []>} : vector<2x32xf32>, vector<32x128xf32>, vector<2x128xf32> -> vector<2x128xf32>
    %20 = arith.addf %18, %19 : vector<2x128xf32>
    %21 = arith.negf %20 : vector<2x128xf32>
    %22 = math.exp %21 : vector<2x128xf32>
    %cst_13 = arith.constant 1.000000e+00 : f32
    %23 = vector.broadcast %cst_13 : f32 to vector<2x128xf32>
    %24 = arith.addf %23, %22 : vector<2x128xf32>
    %25 = arith.divf %23, %24 : vector<2x128xf32>
    %26 = vector.extract_strided_slice %25 {offsets = [0, 0], sizes = [2, 32], strides = [1, 1]} : vector<2x128xf32> to vector<2x32xf32>
    %27 = vector.extract_strided_slice %25 {offsets = [0, 32], sizes = [2, 32], strides = [1, 1]} : vector<2x128xf32> to vector<2x32xf32>
    %28 = vector.extract_strided_slice %25 {offsets = [0, 96], sizes = [2, 32], strides = [1, 1]} : vector<2x128xf32> to vector<2x32xf32>
    %29 = vector.extract_strided_slice %20 {offsets = [0, 64], sizes = [2, 32], strides = [1, 1]} : vector<2x128xf32> to vector<2x32xf32>
    %30 = math.tanh %29 : vector<2x32xf32>
    %31 = arith.mulf %27, %17 : vector<2x32xf32>
    %32 = arith.mulf %26, %30 : vector<2x32xf32>
    %33 = arith.addf %31, %32 : vector<2x32xf32>
    %34 = math.tanh %33 : vector<2x32xf32>
    %35 = arith.mulf %28, %34 : vector<2x32xf32>
    %cst_14 = arith.constant dense<0.000000e+00> : vector<2x128xf32>
    %36 = tpu.matmul %35, %3, %cst_14 {dimension_numbers = #tpu.dot_dimension_numbers<[1], [0], [0], [1], [0, 0, 1, 1], [], []>} : vector<2x32xf32>, vector<32x128xf32>, vector<2x128xf32> -> vector<2x128xf32>
    %cst_15 = arith.constant dense<0.000000e+00> : vector<2x128xf32>
    %37 = tpu.matmul %17, %4, %cst_15 {dimension_numbers = #tpu.dot_dimension_numbers<[1], [0], [0], [1], [0, 0, 1, 1], [], []>} : vector<2x32xf32>, vector<32x128xf32>, vector<2x128xf32> -> vector<2x128xf32>
    %38 = arith.addf %36, %37 : vector<2x128xf32>
    %39 = arith.addf %38, %9 : vector<2x128xf32>
    %40 = arith.negf %39 : vector<2x128xf32>
    %41 = math.exp %40 : vector<2x128xf32>
    %cst_16 = arith.constant 1.000000e+00 : f32
    %42 = vector.broadcast %cst_16 : f32 to vector<2x128xf32>
    %43 = arith.addf %42, %41 : vector<2x128xf32>
    %44 = arith.divf %42, %43 : vector<2x128xf32>
    %45 = vector.extract_strided_slice %44 {offsets = [0, 0], sizes = [2, 32], strides = [1, 1]} : vector<2x128xf32> to vector<2x32xf32>
    %46 = vector.extract_strided_slice %44 {offsets = [0, 32], sizes = [2, 32], strides = [1, 1]} : vector<2x128xf32> to vector<2x32xf32>
    %47 = vector.extract_strided_slice %44 {offsets = [0, 96], sizes = [2, 32], strides = [1, 1]} : vector<2x128xf32> to vector<2x32xf32>
    %48 = vector.extract_strided_slice %39 {offsets = [0, 64], sizes = [2, 32], strides = [1, 1]} : vector<2x128xf32> to vector<2x32xf32>
    %49 = math.tanh %48 : vector<2x32xf32>
    %50 = arith.mulf %46, %17 : vector<2x32xf32>
    %51 = arith.mulf %45, %49 : vector<2x32xf32>
    %52 = arith.addf %50, %51 : vector<2x32xf32>
    %53 = math.tanh %52 : vector<2x32xf32>
    %54 = arith.mulf %47, %53 : vector<2x32xf32>
    %cst_17 = arith.constant dense<0.000000e+00> : vector<2x128xf32>
    %55 = tpu.matmul %54, %5, %cst_17 {dimension_numbers = #tpu.dot_dimension_numbers<[1], [0], [0], [1], [0, 0, 1, 1], [], []>} : vector<2x32xf32>, vector<32x128xf32>, vector<2x128xf32> -> vector<2x128xf32>
    %cst_18 = arith.constant dense<0.000000e+00> : vector<2x128xf32>
    %56 = tpu.matmul %17, %6, %cst_18 {dimension_numbers = #tpu.dot_dimension_numbers<[1], [0], [0], [1], [0, 0, 1, 1], [], []>} : vector<2x32xf32>, vector<32x128xf32>, vector<2x128xf32> -> vector<2x128xf32>
    %57 = arith.addf %55, %56 : vector<2x128xf32>
    %58 = arith.addf %57, %12 : vector<2x128xf32>
    %59 = arith.negf %58 : vector<2x128xf32>
    %60 = math.exp %59 : vector<2x128xf32>
    %cst_19 = arith.constant 1.000000e+00 : f32
    %61 = vector.broadcast %cst_19 : f32 to vector<2x128xf32>
    %62 = arith.addf %61, %60 : vector<2x128xf32>
    %63 = arith.divf %61, %62 : vector<2x128xf32>
    %64 = vector.extract_strided_slice %63 {offsets = [0, 0], sizes = [2, 32], strides = [1, 1]} : vector<2x128xf32> to vector<2x32xf32>
    %65 = vector.extract_strided_slice %63 {offsets = [0, 32], sizes = [2, 32], strides = [1, 1]} : vector<2x128xf32> to vector<2x32xf32>
    %66 = vector.extract_strided_slice %63 {offsets = [0, 96], sizes = [2, 32], strides = [1, 1]} : vector<2x128xf32> to vector<2x32xf32>
    %67 = vector.extract_strided_slice %58 {offsets = [0, 64], sizes = [2, 32], strides = [1, 1]} : vector<2x128xf32> to vector<2x32xf32>
    %68 = math.tanh %67 : vector<2x32xf32>
    %69 = arith.mulf %65, %17 : vector<2x32xf32>
    %70 = arith.mulf %64, %68 : vector<2x32xf32>
    %71 = arith.addf %69, %70 : vector<2x32xf32>
    %72 = math.tanh %71 : vector<2x32xf32>
    %73 = arith.mulf %66, %72 : vector<2x32xf32>
    %74 = vector.extract_strided_slice %16 {offsets = [2, 0], sizes = [2, 128], strides = [1, 1]} : vector<16x128xf32> to vector<2x128xf32>
    %cst_20 = arith.constant dense<0.000000e+00> : vector<2x128xf32>
    %75 = tpu.matmul %35, %1, %cst_20 {dimension_numbers = #tpu.dot_dimension_numbers<[1], [0], [0], [1], [0, 0, 1, 1], [], []>} : vector<2x32xf32>, vector<32x128xf32>, vector<2x128xf32> -> vector<2x128xf32>
    %76 = arith.addf %74, %75 : vector<2x128xf32>
    %77 = arith.negf %76 : vector<2x128xf32>
    %78 = math.exp %77 : vector<2x128xf32>
    %cst_21 = arith.constant 1.000000e+00 : f32
    %79 = vector.broadcast %cst_21 : f32 to vector<2x128xf32>
    %80 = arith.addf %79, %78 : vector<2x128xf32>
    %81 = arith.divf %79, %80 : vector<2x128xf32>
    %82 = vector.extract_strided_slice %81 {offsets = [0, 0], sizes = [2, 32], strides = [1, 1]} : vector<2x128xf32> to vector<2x32xf32>
    %83 = vector.extract_strided_slice %81 {offsets = [0, 32], sizes = [2, 32], strides = [1, 1]} : vector<2x128xf32> to vector<2x32xf32>
    %84 = vector.extract_strided_slice %81 {offsets = [0, 96], sizes = [2, 32], strides = [1, 1]} : vector<2x128xf32> to vector<2x32xf32>
    %85 = vector.extract_strided_slice %76 {offsets = [0, 64], sizes = [2, 32], strides = [1, 1]} : vector<2x128xf32> to vector<2x32xf32>
    %86 = math.tanh %85 : vector<2x32xf32>
    %87 = arith.mulf %83, %33 : vector<2x32xf32>
    %88 = arith.mulf %82, %86 : vector<2x32xf32>
    %89 = arith.addf %87, %88 : vector<2x32xf32>
    %90 = math.tanh %89 : vector<2x32xf32>
    %91 = arith.mulf %84, %90 : vector<2x32xf32>
    %cst_22 = arith.constant dense<0.000000e+00> : vector<2x128xf32>
    %92 = tpu.matmul %91, %3, %cst_22 {dimension_numbers = #tpu.dot_dimension_numbers<[1], [0], [0], [1], [0, 0, 1, 1], [], []>} : vector<2x32xf32>, vector<32x128xf32>, vector<2x128xf32> -> vector<2x128xf32>
    %cst_23 = arith.constant dense<0.000000e+00> : vector<2x128xf32>
    %93 = tpu.matmul %54, %4, %cst_23 {dimension_numbers = #tpu.dot_dimension_numbers<[1], [0], [0], [1], [0, 0, 1, 1], [], []>} : vector<2x32xf32>, vector<32x128xf32>, vector<2x128xf32> -> vector<2x128xf32>
    %94 = arith.addf %92, %93 : vector<2x128xf32>
    %95 = arith.addf %94, %9 : vector<2x128xf32>
    %96 = arith.negf %95 : vector<2x128xf32>
    %97 = math.exp %96 : vector<2x128xf32>
    %cst_24 = arith.constant 1.000000e+00 : f32
    %98 = vector.broadcast %cst_24 : f32 to vector<2x128xf32>
    %99 = arith.addf %98, %97 : vector<2x128xf32>
    %100 = arith.divf %98, %99 : vector<2x128xf32>
    %101 = vector.extract_strided_slice %100 {offsets = [0, 0], sizes = [2, 32], strides = [1, 1]} : vector<2x128xf32> to vector<2x32xf32>
    %102 = vector.extract_strided_slice %100 {offsets = [0, 32], sizes = [2, 32], strides = [1, 1]} : vector<2x128xf32> to vector<2x32xf32>
    %103 = vector.extract_strided_slice %100 {offsets = [0, 96], sizes = [2, 32], strides = [1, 1]} : vector<2x128xf32> to vector<2x32xf32>
    %104 = vector.extract_strided_slice %95 {offsets = [0, 64], sizes = [2, 32], strides = [1, 1]} : vector<2x128xf32> to vector<2x32xf32>
    %105 = math.tanh %104 : vector<2x32xf32>
    %106 = arith.mulf %102, %52 : vector<2x32xf32>
    %107 = arith.mulf %101, %105 : vector<2x32xf32>
    %108 = arith.addf %106, %107 : vector<2x32xf32>
    %109 = math.tanh %108 : vector<2x32xf32>
    %110 = arith.mulf %103, %109 : vector<2x32xf32>
    %cst_25 = arith.constant dense<0.000000e+00> : vector<2x128xf32>
    %111 = tpu.matmul %110, %5, %cst_25 {dimension_numbers = #tpu.dot_dimension_numbers<[1], [0], [0], [1], [0, 0, 1, 1], [], []>} : vector<2x32xf32>, vector<32x128xf32>, vector<2x128xf32> -> vector<2x128xf32>
    %cst_26 = arith.constant dense<0.000000e+00> : vector<2x128xf32>
    %112 = tpu.matmul %73, %6, %cst_26 {dimension_numbers = #tpu.dot_dimension_numbers<[1], [0], [0], [1], [0, 0, 1, 1], [], []>} : vector<2x32xf32>, vector<32x128xf32>, vector<2x128xf32> -> vector<2x128xf32>
    %113 = arith.addf %111, %112 : vector<2x128xf32>
    %114 = arith.addf %113, %12 : vector<2x128xf32>
    %115 = arith.negf %114 : vector<2x128xf32>
    %116 = math.exp %115 : vector<2x128xf32>
    %cst_27 = arith.constant 1.000000e+00 : f32
    %117 = vector.broadcast %cst_27 : f32 to vector<2x128xf32>
    %118 = arith.addf %117, %116 : vector<2x128xf32>
    %119 = arith.divf %117, %118 : vector<2x128xf32>
    %120 = vector.extract_strided_slice %119 {offsets = [0, 0], sizes = [2, 32], strides = [1, 1]} : vector<2x128xf32> to vector<2x32xf32>
    %121 = vector.extract_strided_slice %119 {offsets = [0, 32], sizes = [2, 32], strides = [1, 1]} : vector<2x128xf32> to vector<2x32xf32>
    %122 = vector.extract_strided_slice %119 {offsets = [0, 96], sizes = [2, 32], strides = [1, 1]} : vector<2x128xf32> to vector<2x32xf32>
    %123 = vector.extract_strided_slice %114 {offsets = [0, 64], sizes = [2, 32], strides = [1, 1]} : vector<2x128xf32> to vector<2x32xf32>
    %124 = math.tanh %123 : vector<2x32xf32>
    %125 = arith.mulf %121, %71 : vector<2x32xf32>
    %126 = arith.mulf %120, %124 : vector<2x32xf32>
    %127 = arith.addf %125, %126 : vector<2x32xf32>
    %128 = math.tanh %127 : vector<2x32xf32>
    %129 = arith.mulf %122, %128 : vector<2x32xf32>
    %130 = vector.extract_strided_slice %16 {offsets = [4, 0], sizes = [2, 128], strides = [1, 1]} : vector<16x128xf32> to vector<2x128xf32>
    %cst_28 = arith.constant dense<0.000000e+00> : vector<2x128xf32>
    %131 = tpu.matmul %91, %1, %cst_28 {dimension_numbers = #tpu.dot_dimension_numbers<[1], [0], [0], [1], [0, 0, 1, 1], [], []>} : vector<2x32xf32>, vector<32x128xf32>, vector<2x128xf32> -> vector<2x128xf32>
    %132 = arith.addf %130, %131 : vector<2x128xf32>
    %133 = arith.negf %132 : vector<2x128xf32>
    %134 = math.exp %133 : vector<2x128xf32>
    %cst_29 = arith.constant 1.000000e+00 : f32
    %135 = vector.broadcast %cst_29 : f32 to vector<2x128xf32>
    %136 = arith.addf %135, %134 : vector<2x128xf32>
    %137 = arith.divf %135, %136 : vector<2x128xf32>
    %138 = vector.extract_strided_slice %137 {offsets = [0, 0], sizes = [2, 32], strides = [1, 1]} : vector<2x128xf32> to vector<2x32xf32>
    %139 = vector.extract_strided_slice %137 {offsets = [0, 32], sizes = [2, 32], strides = [1, 1]} : vector<2x128xf32> to vector<2x32xf32>
    %140 = vector.extract_strided_slice %137 {offsets = [0, 96], sizes = [2, 32], strides = [1, 1]} : vector<2x128xf32> to vector<2x32xf32>
    %141 = vector.extract_strided_slice %132 {offsets = [0, 64], sizes = [2, 32], strides = [1, 1]} : vector<2x128xf32> to vector<2x32xf32>
    %142 = math.tanh %141 : vector<2x32xf32>
    %143 = arith.mulf %139, %89 : vector<2x32xf32>
    %144 = arith.mulf %138, %142 : vector<2x32xf32>
    %145 = arith.addf %143, %144 : vector<2x32xf32>
    %146 = math.tanh %145 : vector<2x32xf32>
    %147 = arith.mulf %140, %146 : vector<2x32xf32>
    %cst_30 = arith.constant dense<0.000000e+00> : vector<2x128xf32>
    %148 = tpu.matmul %147, %3, %cst_30 {dimension_numbers = #tpu.dot_dimension_numbers<[1], [0], [0], [1], [0, 0, 1, 1], [], []>} : vector<2x32xf32>, vector<32x128xf32>, vector<2x128xf32> -> vector<2x128xf32>
    %cst_31 = arith.constant dense<0.000000e+00> : vector<2x128xf32>
    %149 = tpu.matmul %110, %4, %cst_31 {dimension_numbers = #tpu.dot_dimension_numbers<[1], [0], [0], [1], [0, 0, 1, 1], [], []>} : vector<2x32xf32>, vector<32x128xf32>, vector<2x128xf32> -> vector<2x128xf32>
    %150 = arith.addf %148, %149 : vector<2x128xf32>
    %151 = arith.addf %150, %9 : vector<2x128xf32>
    %152 = arith.negf %151 : vector<2x128xf32>
    %153 = math.exp %152 : vector<2x128xf32>
    %cst_32 = arith.constant 1.000000e+00 : f32
    %154 = vector.broadcast %cst_32 : f32 to vector<2x128xf32>
    %155 = arith.addf %154, %153 : vector<2x128xf32>
    %156 = arith.divf %154, %155 : vector<2x128xf32>
    %157 = vector.extract_strided_slice %156 {offsets = [0, 0], sizes = [2, 32], strides = [1, 1]} : vector<2x128xf32> to vector<2x32xf32>
    %158 = vector.extract_strided_slice %156 {offsets = [0, 32], sizes = [2, 32], strides = [1, 1]} : vector<2x128xf32> to vector<2x32xf32>
    %159 = vector.extract_strided_slice %156 {offsets = [0, 96], sizes = [2, 32], strides = [1, 1]} : vector<2x128xf32> to vector<2x32xf32>
    %160 = vector.extract_strided_slice %151 {offsets = [0, 64], sizes = [2, 32], strides = [1, 1]} : vector<2x128xf32> to vector<2x32xf32>
    %161 = math.tanh %160 : vector<2x32xf32>
    %162 = arith.mulf %158, %108 : vector<2x32xf32>
    %163 = arith.mulf %157, %161 : vector<2x32xf32>
    %164 = arith.addf %162, %163 : vector<2x32xf32>
    %165 = math.tanh %164 : vector<2x32xf32>
    %166 = arith.mulf %159, %165 : vector<2x32xf32>
    %cst_33 = arith.constant dense<0.000000e+00> : vector<2x128xf32>
    %167 = tpu.matmul %166, %5, %cst_33 {dimension_numbers = #tpu.dot_dimension_numbers<[1], [0], [0], [1], [0, 0, 1, 1], [], []>} : vector<2x32xf32>, vector<32x128xf32>, vector<2x128xf32> -> vector<2x128xf32>
    %cst_34 = arith.constant dense<0.000000e+00> : vector<2x128xf32>
    %168 = tpu.matmul %129, %6, %cst_34 {dimension_numbers = #tpu.dot_dimension_numbers<[1], [0], [0], [1], [0, 0, 1, 1], [], []>} : vector<2x32xf32>, vector<32x128xf32>, vector<2x128xf32> -> vector<2x128xf32>
    %169 = arith.addf %167, %168 : vector<2x128xf32>
    %170 = arith.addf %169, %12 : vector<2x128xf32>
    %171 = arith.negf %170 : vector<2x128xf32>
    %172 = math.exp %171 : vector<2x128xf32>
    %cst_35 = arith.constant 1.000000e+00 : f32
    %173 = vector.broadcast %cst_35 : f32 to vector<2x128xf32>
    %174 = arith.addf %173, %172 : vector<2x128xf32>
    %175 = arith.divf %173, %174 : vector<2x128xf32>
    %176 = vector.extract_strided_slice %175 {offsets = [0, 0], sizes = [2, 32], strides = [1, 1]} : vector<2x128xf32> to vector<2x32xf32>
    %177 = vector.extract_strided_slice %175 {offsets = [0, 32], sizes = [2, 32], strides = [1, 1]} : vector<2x128xf32> to vector<2x32xf32>
    %178 = vector.extract_strided_slice %175 {offsets = [0, 96], sizes = [2, 32], strides = [1, 1]} : vector<2x128xf32> to vector<2x32xf32>
    %179 = vector.extract_strided_slice %170 {offsets = [0, 64], sizes = [2, 32], strides = [1, 1]} : vector<2x128xf32> to vector<2x32xf32>
    %180 = math.tanh %179 : vector<2x32xf32>
    %181 = arith.mulf %177, %127 : vector<2x32xf32>
    %182 = arith.mulf %176, %180 : vector<2x32xf32>
    %183 = arith.addf %181, %182 : vector<2x32xf32>
    %184 = math.tanh %183 : vector<2x32xf32>
    %185 = arith.mulf %178, %184 : vector<2x32xf32>
    %186 = vector.extract_strided_slice %16 {offsets = [6, 0], sizes = [2, 128], strides = [1, 1]} : vector<16x128xf32> to vector<2x128xf32>
    %cst_36 = arith.constant dense<0.000000e+00> : vector<2x128xf32>
    %187 = tpu.matmul %147, %1, %cst_36 {dimension_numbers = #tpu.dot_dimension_numbers<[1], [0], [0], [1], [0, 0, 1, 1], [], []>} : vector<2x32xf32>, vector<32x128xf32>, vector<2x128xf32> -> vector<2x128xf32>
    %188 = arith.addf %186, %187 : vector<2x128xf32>
    %189 = arith.negf %188 : vector<2x128xf32>
    %190 = math.exp %189 : vector<2x128xf32>
    %cst_37 = arith.constant 1.000000e+00 : f32
    %191 = vector.broadcast %cst_37 : f32 to vector<2x128xf32>
    %192 = arith.addf %191, %190 : vector<2x128xf32>
    %193 = arith.divf %191, %192 : vector<2x128xf32>
    %194 = vector.extract_strided_slice %193 {offsets = [0, 0], sizes = [2, 32], strides = [1, 1]} : vector<2x128xf32> to vector<2x32xf32>
    %195 = vector.extract_strided_slice %193 {offsets = [0, 32], sizes = [2, 32], strides = [1, 1]} : vector<2x128xf32> to vector<2x32xf32>
    %196 = vector.extract_strided_slice %193 {offsets = [0, 96], sizes = [2, 32], strides = [1, 1]} : vector<2x128xf32> to vector<2x32xf32>
    %197 = vector.extract_strided_slice %188 {offsets = [0, 64], sizes = [2, 32], strides = [1, 1]} : vector<2x128xf32> to vector<2x32xf32>
    %198 = math.tanh %197 : vector<2x32xf32>
    %199 = arith.mulf %195, %145 : vector<2x32xf32>
    %200 = arith.mulf %194, %198 : vector<2x32xf32>
    %201 = arith.addf %199, %200 : vector<2x32xf32>
    %202 = math.tanh %201 : vector<2x32xf32>
    %203 = arith.mulf %196, %202 : vector<2x32xf32>
    %cst_38 = arith.constant dense<0.000000e+00> : vector<2x128xf32>
    %204 = tpu.matmul %203, %3, %cst_38 {dimension_numbers = #tpu.dot_dimension_numbers<[1], [0], [0], [1], [0, 0, 1, 1], [], []>} : vector<2x32xf32>, vector<32x128xf32>, vector<2x128xf32> -> vector<2x128xf32>
    %cst_39 = arith.constant dense<0.000000e+00> : vector<2x128xf32>
    %205 = tpu.matmul %166, %4, %cst_39 {dimension_numbers = #tpu.dot_dimension_numbers<[1], [0], [0], [1], [0, 0, 1, 1], [], []>} : vector<2x32xf32>, vector<32x128xf32>, vector<2x128xf32> -> vector<2x128xf32>
    %206 = arith.addf %204, %205 : vector<2x128xf32>
    %207 = arith.addf %206, %9 : vector<2x128xf32>
    %208 = arith.negf %207 : vector<2x128xf32>
    %209 = math.exp %208 : vector<2x128xf32>
    %cst_40 = arith.constant 1.000000e+00 : f32
    %210 = vector.broadcast %cst_40 : f32 to vector<2x128xf32>
    %211 = arith.addf %210, %209 : vector<2x128xf32>
    %212 = arith.divf %210, %211 : vector<2x128xf32>
    %213 = vector.extract_strided_slice %212 {offsets = [0, 0], sizes = [2, 32], strides = [1, 1]} : vector<2x128xf32> to vector<2x32xf32>
    %214 = vector.extract_strided_slice %212 {offsets = [0, 32], sizes = [2, 32], strides = [1, 1]} : vector<2x128xf32> to vector<2x32xf32>
    %215 = vector.extract_strided_slice %212 {offsets = [0, 96], sizes = [2, 32], strides = [1, 1]} : vector<2x128xf32> to vector<2x32xf32>
    %216 = vector.extract_strided_slice %207 {offsets = [0, 64], sizes = [2, 32], strides = [1, 1]} : vector<2x128xf32> to vector<2x32xf32>
    %217 = math.tanh %216 : vector<2x32xf32>
    %218 = arith.mulf %214, %164 : vector<2x32xf32>
    %219 = arith.mulf %213, %217 : vector<2x32xf32>
    %220 = arith.addf %218, %219 : vector<2x32xf32>
    %221 = math.tanh %220 : vector<2x32xf32>
    %222 = arith.mulf %215, %221 : vector<2x32xf32>
    %cst_41 = arith.constant dense<0.000000e+00> : vector<2x128xf32>
    %223 = tpu.matmul %222, %5, %cst_41 {dimension_numbers = #tpu.dot_dimension_numbers<[1], [0], [0], [1], [0, 0, 1, 1], [], []>} : vector<2x32xf32>, vector<32x128xf32>, vector<2x128xf32> -> vector<2x128xf32>
    %cst_42 = arith.constant dense<0.000000e+00> : vector<2x128xf32>
    %224 = tpu.matmul %185, %6, %cst_42 {dimension_numbers = #tpu.dot_dimension_numbers<[1], [0], [0], [1], [0, 0, 1, 1], [], []>} : vector<2x32xf32>, vector<32x128xf32>, vector<2x128xf32> -> vector<2x128xf32>
    %225 = arith.addf %223, %224 : vector<2x128xf32>
    %226 = arith.addf %225, %12 : vector<2x128xf32>
    %227 = arith.negf %226 : vector<2x128xf32>
    %228 = math.exp %227 : vector<2x128xf32>
    %cst_43 = arith.constant 1.000000e+00 : f32
    %229 = vector.broadcast %cst_43 : f32 to vector<2x128xf32>
    %230 = arith.addf %229, %228 : vector<2x128xf32>
    %231 = arith.divf %229, %230 : vector<2x128xf32>
    %232 = vector.extract_strided_slice %231 {offsets = [0, 0], sizes = [2, 32], strides = [1, 1]} : vector<2x128xf32> to vector<2x32xf32>
    %233 = vector.extract_strided_slice %231 {offsets = [0, 32], sizes = [2, 32], strides = [1, 1]} : vector<2x128xf32> to vector<2x32xf32>
    %234 = vector.extract_strided_slice %231 {offsets = [0, 96], sizes = [2, 32], strides = [1, 1]} : vector<2x128xf32> to vector<2x32xf32>
    %235 = vector.extract_strided_slice %226 {offsets = [0, 64], sizes = [2, 32], strides = [1, 1]} : vector<2x128xf32> to vector<2x32xf32>
    %236 = math.tanh %235 : vector<2x32xf32>
    %237 = arith.mulf %233, %183 : vector<2x32xf32>
    %238 = arith.mulf %232, %236 : vector<2x32xf32>
    %239 = arith.addf %237, %238 : vector<2x32xf32>
    %240 = math.tanh %239 : vector<2x32xf32>
    %241 = arith.mulf %234, %240 : vector<2x32xf32>
    %242 = vector.extract_strided_slice %16 {offsets = [8, 0], sizes = [2, 128], strides = [1, 1]} : vector<16x128xf32> to vector<2x128xf32>
    %cst_44 = arith.constant dense<0.000000e+00> : vector<2x128xf32>
    %243 = tpu.matmul %203, %1, %cst_44 {dimension_numbers = #tpu.dot_dimension_numbers<[1], [0], [0], [1], [0, 0, 1, 1], [], []>} : vector<2x32xf32>, vector<32x128xf32>, vector<2x128xf32> -> vector<2x128xf32>
    %244 = arith.addf %242, %243 : vector<2x128xf32>
    %245 = arith.negf %244 : vector<2x128xf32>
    %246 = math.exp %245 : vector<2x128xf32>
    %cst_45 = arith.constant 1.000000e+00 : f32
    %247 = vector.broadcast %cst_45 : f32 to vector<2x128xf32>
    %248 = arith.addf %247, %246 : vector<2x128xf32>
    %249 = arith.divf %247, %248 : vector<2x128xf32>
    %250 = vector.extract_strided_slice %249 {offsets = [0, 0], sizes = [2, 32], strides = [1, 1]} : vector<2x128xf32> to vector<2x32xf32>
    %251 = vector.extract_strided_slice %249 {offsets = [0, 32], sizes = [2, 32], strides = [1, 1]} : vector<2x128xf32> to vector<2x32xf32>
    %252 = vector.extract_strided_slice %249 {offsets = [0, 96], sizes = [2, 32], strides = [1, 1]} : vector<2x128xf32> to vector<2x32xf32>
    %253 = vector.extract_strided_slice %244 {offsets = [0, 64], sizes = [2, 32], strides = [1, 1]} : vector<2x128xf32> to vector<2x32xf32>
    %254 = math.tanh %253 : vector<2x32xf32>
    %255 = arith.mulf %251, %201 : vector<2x32xf32>
    %256 = arith.mulf %250, %254 : vector<2x32xf32>
    %257 = arith.addf %255, %256 : vector<2x32xf32>
    %258 = math.tanh %257 : vector<2x32xf32>
    %259 = arith.mulf %252, %258 : vector<2x32xf32>
    %cst_46 = arith.constant dense<0.000000e+00> : vector<2x128xf32>
    %260 = tpu.matmul %259, %3, %cst_46 {dimension_numbers = #tpu.dot_dimension_numbers<[1], [0], [0], [1], [0, 0, 1, 1], [], []>} : vector<2x32xf32>, vector<32x128xf32>, vector<2x128xf32> -> vector<2x128xf32>
    %cst_47 = arith.constant dense<0.000000e+00> : vector<2x128xf32>
    %261 = tpu.matmul %222, %4, %cst_47 {dimension_numbers = #tpu.dot_dimension_numbers<[1], [0], [0], [1], [0, 0, 1, 1], [], []>} : vector<2x32xf32>, vector<32x128xf32>, vector<2x128xf32> -> vector<2x128xf32>
    %262 = arith.addf %260, %261 : vector<2x128xf32>
    %263 = arith.addf %262, %9 : vector<2x128xf32>
    %264 = arith.negf %263 : vector<2x128xf32>
    %265 = math.exp %264 : vector<2x128xf32>
    %cst_48 = arith.constant 1.000000e+00 : f32
    %266 = vector.broadcast %cst_48 : f32 to vector<2x128xf32>
    %267 = arith.addf %266, %265 : vector<2x128xf32>
    %268 = arith.divf %266, %267 : vector<2x128xf32>
    %269 = vector.extract_strided_slice %268 {offsets = [0, 0], sizes = [2, 32], strides = [1, 1]} : vector<2x128xf32> to vector<2x32xf32>
    %270 = vector.extract_strided_slice %268 {offsets = [0, 32], sizes = [2, 32], strides = [1, 1]} : vector<2x128xf32> to vector<2x32xf32>
    %271 = vector.extract_strided_slice %268 {offsets = [0, 96], sizes = [2, 32], strides = [1, 1]} : vector<2x128xf32> to vector<2x32xf32>
    %272 = vector.extract_strided_slice %263 {offsets = [0, 64], sizes = [2, 32], strides = [1, 1]} : vector<2x128xf32> to vector<2x32xf32>
    %273 = math.tanh %272 : vector<2x32xf32>
    %274 = arith.mulf %270, %220 : vector<2x32xf32>
    %275 = arith.mulf %269, %273 : vector<2x32xf32>
    %276 = arith.addf %274, %275 : vector<2x32xf32>
    %277 = math.tanh %276 : vector<2x32xf32>
    %278 = arith.mulf %271, %277 : vector<2x32xf32>
    %cst_49 = arith.constant dense<0.000000e+00> : vector<2x128xf32>
    %279 = tpu.matmul %278, %5, %cst_49 {dimension_numbers = #tpu.dot_dimension_numbers<[1], [0], [0], [1], [0, 0, 1, 1], [], []>} : vector<2x32xf32>, vector<32x128xf32>, vector<2x128xf32> -> vector<2x128xf32>
    %cst_50 = arith.constant dense<0.000000e+00> : vector<2x128xf32>
    %280 = tpu.matmul %241, %6, %cst_50 {dimension_numbers = #tpu.dot_dimension_numbers<[1], [0], [0], [1], [0, 0, 1, 1], [], []>} : vector<2x32xf32>, vector<32x128xf32>, vector<2x128xf32> -> vector<2x128xf32>
    %281 = arith.addf %279, %280 : vector<2x128xf32>
    %282 = arith.addf %281, %12 : vector<2x128xf32>
    %283 = arith.negf %282 : vector<2x128xf32>
    %284 = math.exp %283 : vector<2x128xf32>
    %cst_51 = arith.constant 1.000000e+00 : f32
    %285 = vector.broadcast %cst_51 : f32 to vector<2x128xf32>
    %286 = arith.addf %285, %284 : vector<2x128xf32>
    %287 = arith.divf %285, %286 : vector<2x128xf32>
    %288 = vector.extract_strided_slice %287 {offsets = [0, 0], sizes = [2, 32], strides = [1, 1]} : vector<2x128xf32> to vector<2x32xf32>
    %289 = vector.extract_strided_slice %287 {offsets = [0, 32], sizes = [2, 32], strides = [1, 1]} : vector<2x128xf32> to vector<2x32xf32>
    %290 = vector.extract_strided_slice %287 {offsets = [0, 96], sizes = [2, 32], strides = [1, 1]} : vector<2x128xf32> to vector<2x32xf32>
    %291 = vector.extract_strided_slice %282 {offsets = [0, 64], sizes = [2, 32], strides = [1, 1]} : vector<2x128xf32> to vector<2x32xf32>
    %292 = math.tanh %291 : vector<2x32xf32>
    %293 = arith.mulf %289, %239 : vector<2x32xf32>
    %294 = arith.mulf %288, %292 : vector<2x32xf32>
    %295 = arith.addf %293, %294 : vector<2x32xf32>
    %296 = math.tanh %295 : vector<2x32xf32>
    %297 = arith.mulf %290, %296 : vector<2x32xf32>
    %298 = vector.extract_strided_slice %16 {offsets = [10, 0], sizes = [2, 128], strides = [1, 1]} : vector<16x128xf32> to vector<2x128xf32>
    %cst_52 = arith.constant dense<0.000000e+00> : vector<2x128xf32>
    %299 = tpu.matmul %259, %1, %cst_52 {dimension_numbers = #tpu.dot_dimension_numbers<[1], [0], [0], [1], [0, 0, 1, 1], [], []>} : vector<2x32xf32>, vector<32x128xf32>, vector<2x128xf32> -> vector<2x128xf32>
    %300 = arith.addf %298, %299 : vector<2x128xf32>
    %301 = arith.negf %300 : vector<2x128xf32>
    %302 = math.exp %301 : vector<2x128xf32>
    %cst_53 = arith.constant 1.000000e+00 : f32
    %303 = vector.broadcast %cst_53 : f32 to vector<2x128xf32>
    %304 = arith.addf %303, %302 : vector<2x128xf32>
    %305 = arith.divf %303, %304 : vector<2x128xf32>
    %306 = vector.extract_strided_slice %305 {offsets = [0, 0], sizes = [2, 32], strides = [1, 1]} : vector<2x128xf32> to vector<2x32xf32>
    %307 = vector.extract_strided_slice %305 {offsets = [0, 32], sizes = [2, 32], strides = [1, 1]} : vector<2x128xf32> to vector<2x32xf32>
    %308 = vector.extract_strided_slice %305 {offsets = [0, 96], sizes = [2, 32], strides = [1, 1]} : vector<2x128xf32> to vector<2x32xf32>
    %309 = vector.extract_strided_slice %300 {offsets = [0, 64], sizes = [2, 32], strides = [1, 1]} : vector<2x128xf32> to vector<2x32xf32>
    %310 = math.tanh %309 : vector<2x32xf32>
    %311 = arith.mulf %307, %257 : vector<2x32xf32>
    %312 = arith.mulf %306, %310 : vector<2x32xf32>
    %313 = arith.addf %311, %312 : vector<2x32xf32>
    %314 = math.tanh %313 : vector<2x32xf32>
    %315 = arith.mulf %308, %314 : vector<2x32xf32>
    %cst_54 = arith.constant dense<0.000000e+00> : vector<2x128xf32>
    %316 = tpu.matmul %315, %3, %cst_54 {dimension_numbers = #tpu.dot_dimension_numbers<[1], [0], [0], [1], [0, 0, 1, 1], [], []>} : vector<2x32xf32>, vector<32x128xf32>, vector<2x128xf32> -> vector<2x128xf32>
    %cst_55 = arith.constant dense<0.000000e+00> : vector<2x128xf32>
    %317 = tpu.matmul %278, %4, %cst_55 {dimension_numbers = #tpu.dot_dimension_numbers<[1], [0], [0], [1], [0, 0, 1, 1], [], []>} : vector<2x32xf32>, vector<32x128xf32>, vector<2x128xf32> -> vector<2x128xf32>
    %318 = arith.addf %316, %317 : vector<2x128xf32>
    %319 = arith.addf %318, %9 : vector<2x128xf32>
    %320 = arith.negf %319 : vector<2x128xf32>
    %321 = math.exp %320 : vector<2x128xf32>
    %cst_56 = arith.constant 1.000000e+00 : f32
    %322 = vector.broadcast %cst_56 : f32 to vector<2x128xf32>
    %323 = arith.addf %322, %321 : vector<2x128xf32>
    %324 = arith.divf %322, %323 : vector<2x128xf32>
    %325 = vector.extract_strided_slice %324 {offsets = [0, 0], sizes = [2, 32], strides = [1, 1]} : vector<2x128xf32> to vector<2x32xf32>
    %326 = vector.extract_strided_slice %324 {offsets = [0, 32], sizes = [2, 32], strides = [1, 1]} : vector<2x128xf32> to vector<2x32xf32>
    %327 = vector.extract_strided_slice %324 {offsets = [0, 96], sizes = [2, 32], strides = [1, 1]} : vector<2x128xf32> to vector<2x32xf32>
    %328 = vector.extract_strided_slice %319 {offsets = [0, 64], sizes = [2, 32], strides = [1, 1]} : vector<2x128xf32> to vector<2x32xf32>
    %329 = math.tanh %328 : vector<2x32xf32>
    %330 = arith.mulf %326, %276 : vector<2x32xf32>
    %331 = arith.mulf %325, %329 : vector<2x32xf32>
    %332 = arith.addf %330, %331 : vector<2x32xf32>
    %333 = math.tanh %332 : vector<2x32xf32>
    %334 = arith.mulf %327, %333 : vector<2x32xf32>
    %cst_57 = arith.constant dense<0.000000e+00> : vector<2x128xf32>
    %335 = tpu.matmul %334, %5, %cst_57 {dimension_numbers = #tpu.dot_dimension_numbers<[1], [0], [0], [1], [0, 0, 1, 1], [], []>} : vector<2x32xf32>, vector<32x128xf32>, vector<2x128xf32> -> vector<2x128xf32>
    %cst_58 = arith.constant dense<0.000000e+00> : vector<2x128xf32>
    %336 = tpu.matmul %297, %6, %cst_58 {dimension_numbers = #tpu.dot_dimension_numbers<[1], [0], [0], [1], [0, 0, 1, 1], [], []>} : vector<2x32xf32>, vector<32x128xf32>, vector<2x128xf32> -> vector<2x128xf32>
    %337 = arith.addf %335, %336 : vector<2x128xf32>
    %338 = arith.addf %337, %12 : vector<2x128xf32>
    %339 = arith.negf %338 : vector<2x128xf32>
    %340 = math.exp %339 : vector<2x128xf32>
    %cst_59 = arith.constant 1.000000e+00 : f32
    %341 = vector.broadcast %cst_59 : f32 to vector<2x128xf32>
    %342 = arith.addf %341, %340 : vector<2x128xf32>
    %343 = arith.divf %341, %342 : vector<2x128xf32>
    %344 = vector.extract_strided_slice %343 {offsets = [0, 0], sizes = [2, 32], strides = [1, 1]} : vector<2x128xf32> to vector<2x32xf32>
    %345 = vector.extract_strided_slice %343 {offsets = [0, 32], sizes = [2, 32], strides = [1, 1]} : vector<2x128xf32> to vector<2x32xf32>
    %346 = vector.extract_strided_slice %343 {offsets = [0, 96], sizes = [2, 32], strides = [1, 1]} : vector<2x128xf32> to vector<2x32xf32>
    %347 = vector.extract_strided_slice %338 {offsets = [0, 64], sizes = [2, 32], strides = [1, 1]} : vector<2x128xf32> to vector<2x32xf32>
    %348 = math.tanh %347 : vector<2x32xf32>
    %349 = arith.mulf %345, %295 : vector<2x32xf32>
    %350 = arith.mulf %344, %348 : vector<2x32xf32>
    %351 = arith.addf %349, %350 : vector<2x32xf32>
    %352 = math.tanh %351 : vector<2x32xf32>
    %353 = arith.mulf %346, %352 : vector<2x32xf32>
    %354 = vector.extract_strided_slice %16 {offsets = [12, 0], sizes = [2, 128], strides = [1, 1]} : vector<16x128xf32> to vector<2x128xf32>
    %cst_60 = arith.constant dense<0.000000e+00> : vector<2x128xf32>
    %355 = tpu.matmul %315, %1, %cst_60 {dimension_numbers = #tpu.dot_dimension_numbers<[1], [0], [0], [1], [0, 0, 1, 1], [], []>} : vector<2x32xf32>, vector<32x128xf32>, vector<2x128xf32> -> vector<2x128xf32>
    %356 = arith.addf %354, %355 : vector<2x128xf32>
    %357 = arith.negf %356 : vector<2x128xf32>
    %358 = math.exp %357 : vector<2x128xf32>
    %cst_61 = arith.constant 1.000000e+00 : f32
    %359 = vector.broadcast %cst_61 : f32 to vector<2x128xf32>
    %360 = arith.addf %359, %358 : vector<2x128xf32>
    %361 = arith.divf %359, %360 : vector<2x128xf32>
    %362 = vector.extract_strided_slice %361 {offsets = [0, 0], sizes = [2, 32], strides = [1, 1]} : vector<2x128xf32> to vector<2x32xf32>
    %363 = vector.extract_strided_slice %361 {offsets = [0, 32], sizes = [2, 32], strides = [1, 1]} : vector<2x128xf32> to vector<2x32xf32>
    %364 = vector.extract_strided_slice %361 {offsets = [0, 96], sizes = [2, 32], strides = [1, 1]} : vector<2x128xf32> to vector<2x32xf32>
    %365 = vector.extract_strided_slice %356 {offsets = [0, 64], sizes = [2, 32], strides = [1, 1]} : vector<2x128xf32> to vector<2x32xf32>
    %366 = math.tanh %365 : vector<2x32xf32>
    %367 = arith.mulf %363, %313 : vector<2x32xf32>
    %368 = arith.mulf %362, %366 : vector<2x32xf32>
    %369 = arith.addf %367, %368 : vector<2x32xf32>
    %370 = math.tanh %369 : vector<2x32xf32>
    %371 = arith.mulf %364, %370 : vector<2x32xf32>
    %cst_62 = arith.constant dense<0.000000e+00> : vector<2x128xf32>
    %372 = tpu.matmul %371, %3, %cst_62 {dimension_numbers = #tpu.dot_dimension_numbers<[1], [0], [0], [1], [0, 0, 1, 1], [], []>} : vector<2x32xf32>, vector<32x128xf32>, vector<2x128xf32> -> vector<2x128xf32>
    %cst_63 = arith.constant dense<0.000000e+00> : vector<2x128xf32>
    %373 = tpu.matmul %334, %4, %cst_63 {dimension_numbers = #tpu.dot_dimension_numbers<[1], [0], [0], [1], [0, 0, 1, 1], [], []>} : vector<2x32xf32>, vector<32x128xf32>, vector<2x128xf32> -> vector<2x128xf32>
    %374 = arith.addf %372, %373 : vector<2x128xf32>
    %375 = arith.addf %374, %9 : vector<2x128xf32>
    %376 = arith.negf %375 : vector<2x128xf32>
    %377 = math.exp %376 : vector<2x128xf32>
    %cst_64 = arith.constant 1.000000e+00 : f32
    %378 = vector.broadcast %cst_64 : f32 to vector<2x128xf32>
    %379 = arith.addf %378, %377 : vector<2x128xf32>
    %380 = arith.divf %378, %379 : vector<2x128xf32>
    %381 = vector.extract_strided_slice %380 {offsets = [0, 0], sizes = [2, 32], strides = [1, 1]} : vector<2x128xf32> to vector<2x32xf32>
    %382 = vector.extract_strided_slice %380 {offsets = [0, 32], sizes = [2, 32], strides = [1, 1]} : vector<2x128xf32> to vector<2x32xf32>
    %383 = vector.extract_strided_slice %380 {offsets = [0, 96], sizes = [2, 32], strides = [1, 1]} : vector<2x128xf32> to vector<2x32xf32>
    %384 = vector.extract_strided_slice %375 {offsets = [0, 64], sizes = [2, 32], strides = [1, 1]} : vector<2x128xf32> to vector<2x32xf32>
    %385 = math.tanh %384 : vector<2x32xf32>
    %386 = arith.mulf %382, %332 : vector<2x32xf32>
    %387 = arith.mulf %381, %385 : vector<2x32xf32>
    %388 = arith.addf %386, %387 : vector<2x32xf32>
    %389 = math.tanh %388 : vector<2x32xf32>
    %390 = arith.mulf %383, %389 : vector<2x32xf32>
    %cst_65 = arith.constant dense<0.000000e+00> : vector<2x128xf32>
    %391 = tpu.matmul %390, %5, %cst_65 {dimension_numbers = #tpu.dot_dimension_numbers<[1], [0], [0], [1], [0, 0, 1, 1], [], []>} : vector<2x32xf32>, vector<32x128xf32>, vector<2x128xf32> -> vector<2x128xf32>
    %cst_66 = arith.constant dense<0.000000e+00> : vector<2x128xf32>
    %392 = tpu.matmul %353, %6, %cst_66 {dimension_numbers = #tpu.dot_dimension_numbers<[1], [0], [0], [1], [0, 0, 1, 1], [], []>} : vector<2x32xf32>, vector<32x128xf32>, vector<2x128xf32> -> vector<2x128xf32>
    %393 = arith.addf %391, %392 : vector<2x128xf32>
    %394 = arith.addf %393, %12 : vector<2x128xf32>
    %395 = arith.negf %394 : vector<2x128xf32>
    %396 = math.exp %395 : vector<2x128xf32>
    %cst_67 = arith.constant 1.000000e+00 : f32
    %397 = vector.broadcast %cst_67 : f32 to vector<2x128xf32>
    %398 = arith.addf %397, %396 : vector<2x128xf32>
    %399 = arith.divf %397, %398 : vector<2x128xf32>
    %400 = vector.extract_strided_slice %399 {offsets = [0, 0], sizes = [2, 32], strides = [1, 1]} : vector<2x128xf32> to vector<2x32xf32>
    %401 = vector.extract_strided_slice %399 {offsets = [0, 32], sizes = [2, 32], strides = [1, 1]} : vector<2x128xf32> to vector<2x32xf32>
    %402 = vector.extract_strided_slice %399 {offsets = [0, 96], sizes = [2, 32], strides = [1, 1]} : vector<2x128xf32> to vector<2x32xf32>
    %403 = vector.extract_strided_slice %394 {offsets = [0, 64], sizes = [2, 32], strides = [1, 1]} : vector<2x128xf32> to vector<2x32xf32>
    %404 = math.tanh %403 : vector<2x32xf32>
    %405 = arith.mulf %401, %351 : vector<2x32xf32>
    %406 = arith.mulf %400, %404 : vector<2x32xf32>
    %407 = arith.addf %405, %406 : vector<2x32xf32>
    %408 = math.tanh %407 : vector<2x32xf32>
    %409 = arith.mulf %402, %408 : vector<2x32xf32>
    %410 = vector.extract_strided_slice %16 {offsets = [14, 0], sizes = [2, 128], strides = [1, 1]} : vector<16x128xf32> to vector<2x128xf32>
    %cst_68 = arith.constant dense<0.000000e+00> : vector<2x128xf32>
    %411 = tpu.matmul %371, %1, %cst_68 {dimension_numbers = #tpu.dot_dimension_numbers<[1], [0], [0], [1], [0, 0, 1, 1], [], []>} : vector<2x32xf32>, vector<32x128xf32>, vector<2x128xf32> -> vector<2x128xf32>
    %412 = arith.addf %410, %411 : vector<2x128xf32>
    %413 = arith.negf %412 : vector<2x128xf32>
    %414 = math.exp %413 : vector<2x128xf32>
    %cst_69 = arith.constant 1.000000e+00 : f32
    %415 = vector.broadcast %cst_69 : f32 to vector<2x128xf32>
    %416 = arith.addf %415, %414 : vector<2x128xf32>
    %417 = arith.divf %415, %416 : vector<2x128xf32>
    %418 = vector.extract_strided_slice %417 {offsets = [0, 0], sizes = [2, 32], strides = [1, 1]} : vector<2x128xf32> to vector<2x32xf32>
    %419 = vector.extract_strided_slice %417 {offsets = [0, 32], sizes = [2, 32], strides = [1, 1]} : vector<2x128xf32> to vector<2x32xf32>
    %420 = vector.extract_strided_slice %417 {offsets = [0, 96], sizes = [2, 32], strides = [1, 1]} : vector<2x128xf32> to vector<2x32xf32>
    %421 = vector.extract_strided_slice %412 {offsets = [0, 64], sizes = [2, 32], strides = [1, 1]} : vector<2x128xf32> to vector<2x32xf32>
    %422 = math.tanh %421 : vector<2x32xf32>
    %423 = arith.mulf %419, %369 : vector<2x32xf32>
    %424 = arith.mulf %418, %422 : vector<2x32xf32>
    %425 = arith.addf %423, %424 : vector<2x32xf32>
    %426 = math.tanh %425 : vector<2x32xf32>
    %427 = arith.mulf %420, %426 : vector<2x32xf32>
    %cst_70 = arith.constant dense<0.000000e+00> : vector<2x128xf32>
    %428 = tpu.matmul %427, %3, %cst_70 {dimension_numbers = #tpu.dot_dimension_numbers<[1], [0], [0], [1], [0, 0, 1, 1], [], []>} : vector<2x32xf32>, vector<32x128xf32>, vector<2x128xf32> -> vector<2x128xf32>
    %cst_71 = arith.constant dense<0.000000e+00> : vector<2x128xf32>
    %429 = tpu.matmul %390, %4, %cst_71 {dimension_numbers = #tpu.dot_dimension_numbers<[1], [0], [0], [1], [0, 0, 1, 1], [], []>} : vector<2x32xf32>, vector<32x128xf32>, vector<2x128xf32> -> vector<2x128xf32>
    %430 = arith.addf %428, %429 : vector<2x128xf32>
    %431 = arith.addf %430, %9 : vector<2x128xf32>
    %432 = arith.negf %431 : vector<2x128xf32>
    %433 = math.exp %432 : vector<2x128xf32>
    %cst_72 = arith.constant 1.000000e+00 : f32
    %434 = vector.broadcast %cst_72 : f32 to vector<2x128xf32>
    %435 = arith.addf %434, %433 : vector<2x128xf32>
    %436 = arith.divf %434, %435 : vector<2x128xf32>
    %437 = vector.extract_strided_slice %436 {offsets = [0, 0], sizes = [2, 32], strides = [1, 1]} : vector<2x128xf32> to vector<2x32xf32>
    %438 = vector.extract_strided_slice %436 {offsets = [0, 32], sizes = [2, 32], strides = [1, 1]} : vector<2x128xf32> to vector<2x32xf32>
    %439 = vector.extract_strided_slice %436 {offsets = [0, 96], sizes = [2, 32], strides = [1, 1]} : vector<2x128xf32> to vector<2x32xf32>
    %440 = vector.extract_strided_slice %431 {offsets = [0, 64], sizes = [2, 32], strides = [1, 1]} : vector<2x128xf32> to vector<2x32xf32>
    %441 = math.tanh %440 : vector<2x32xf32>
    %442 = arith.mulf %438, %388 : vector<2x32xf32>
    %443 = arith.mulf %437, %441 : vector<2x32xf32>
    %444 = arith.addf %442, %443 : vector<2x32xf32>
    %445 = math.tanh %444 : vector<2x32xf32>
    %446 = arith.mulf %439, %445 : vector<2x32xf32>
    %cst_73 = arith.constant dense<0.000000e+00> : vector<2x128xf32>
    %447 = tpu.matmul %446, %5, %cst_73 {dimension_numbers = #tpu.dot_dimension_numbers<[1], [0], [0], [1], [0, 0, 1, 1], [], []>} : vector<2x32xf32>, vector<32x128xf32>, vector<2x128xf32> -> vector<2x128xf32>
    %cst_74 = arith.constant dense<0.000000e+00> : vector<2x128xf32>
    %448 = tpu.matmul %409, %6, %cst_74 {dimension_numbers = #tpu.dot_dimension_numbers<[1], [0], [0], [1], [0, 0, 1, 1], [], []>} : vector<2x32xf32>, vector<32x128xf32>, vector<2x128xf32> -> vector<2x128xf32>
    %449 = arith.addf %447, %448 : vector<2x128xf32>
    %450 = arith.addf %449, %12 : vector<2x128xf32>
    %451 = arith.negf %450 : vector<2x128xf32>
    %452 = math.exp %451 : vector<2x128xf32>
    %cst_75 = arith.constant 1.000000e+00 : f32
    %453 = vector.broadcast %cst_75 : f32 to vector<2x128xf32>
    %454 = arith.addf %453, %452 : vector<2x128xf32>
    %455 = arith.divf %453, %454 : vector<2x128xf32>
    %456 = vector.extract_strided_slice %455 {offsets = [0, 0], sizes = [2, 32], strides = [1, 1]} : vector<2x128xf32> to vector<2x32xf32>
    %457 = vector.extract_strided_slice %455 {offsets = [0, 32], sizes = [2, 32], strides = [1, 1]} : vector<2x128xf32> to vector<2x32xf32>
    %458 = vector.extract_strided_slice %455 {offsets = [0, 96], sizes = [2, 32], strides = [1, 1]} : vector<2x128xf32> to vector<2x32xf32>
    %459 = vector.extract_strided_slice %450 {offsets = [0, 64], sizes = [2, 32], strides = [1, 1]} : vector<2x128xf32> to vector<2x32xf32>
    %460 = math.tanh %459 : vector<2x32xf32>
    %461 = arith.mulf %457, %407 : vector<2x32xf32>
    %462 = arith.mulf %456, %460 : vector<2x32xf32>
    %463 = arith.addf %461, %462 : vector<2x32xf32>
    %464 = math.tanh %463 : vector<2x32xf32>
    %465 = arith.mulf %458, %464 : vector<2x32xf32>
    %466 = vector.extract_strided_slice %427 {offsets = [0, 0], sizes = [1, 32], strides = [1, 1]} : vector<2x32xf32> to vector<1x32xf32>
    %467 = vector.extract_strided_slice %425 {offsets = [0, 0], sizes = [1, 32], strides = [1, 1]} : vector<2x32xf32> to vector<1x32xf32>
    %468 = vector.extract_strided_slice %427 {offsets = [1, 0], sizes = [1, 32], strides = [1, 1]} : vector<2x32xf32> to vector<1x32xf32>
    %469 = vector.extract_strided_slice %425 {offsets = [1, 0], sizes = [1, 32], strides = [1, 1]} : vector<2x32xf32> to vector<1x32xf32>
    %470 = tpu.concatenate %466, %467, %468, %469 in 1 : vector<1x32xf32>, vector<1x32xf32>, vector<1x32xf32>, vector<1x32xf32> -> vector<1x128xf32>
    %471 = vector.extract_strided_slice %446 {offsets = [0, 0], sizes = [1, 32], strides = [1, 1]} : vector<2x32xf32> to vector<1x32xf32>
    %472 = vector.extract_strided_slice %444 {offsets = [0, 0], sizes = [1, 32], strides = [1, 1]} : vector<2x32xf32> to vector<1x32xf32>
    %473 = vector.extract_strided_slice %446 {offsets = [1, 0], sizes = [1, 32], strides = [1, 1]} : vector<2x32xf32> to vector<1x32xf32>
    %474 = vector.extract_strided_slice %444 {offsets = [1, 0], sizes = [1, 32], strides = [1, 1]} : vector<2x32xf32> to vector<1x32xf32>
    %475 = tpu.concatenate %471, %472, %473, %474 in 1 : vector<1x32xf32>, vector<1x32xf32>, vector<1x32xf32>, vector<1x32xf32> -> vector<1x128xf32>
    %476 = vector.extract_strided_slice %465 {offsets = [0, 0], sizes = [1, 32], strides = [1, 1]} : vector<2x32xf32> to vector<1x32xf32>
    %477 = vector.extract_strided_slice %463 {offsets = [0, 0], sizes = [1, 32], strides = [1, 1]} : vector<2x32xf32> to vector<1x32xf32>
    %478 = vector.extract_strided_slice %465 {offsets = [1, 0], sizes = [1, 32], strides = [1, 1]} : vector<2x32xf32> to vector<1x32xf32>
    %479 = vector.extract_strided_slice %463 {offsets = [1, 0], sizes = [1, 32], strides = [1, 1]} : vector<2x32xf32> to vector<1x32xf32>
    %480 = tpu.concatenate %476, %477, %478, %479 in 1 : vector<1x32xf32>, vector<1x32xf32>, vector<1x32xf32>, vector<1x32xf32> -> vector<1x128xf32>
    %481 = tpu.concatenate %470, %475, %480 in 0 : vector<1x128xf32>, vector<1x128xf32>, vector<1x128xf32> -> vector<3x128xf32>
    %c0_76 = arith.constant 0 : index
    %c0_77 = arith.constant 0 : index
    %482 = vector.load %arg2[%c0_76, %c0_77] : memref<3x128xf32, #tpu.memory_space<vmem>>, vector<3x128xf32>
    tpu.vector_store %arg2[%c0_76, %c0_77], %481 {strides = array<i32>} : memref<3x128xf32, #tpu.memory_space<vmem>>, vector<3x128xf32>,
    return
  }
}

</mosaic_0001>

<llo_original>
// kernel: encoder_forward.1
$region0: #{encoder_forward.1}
  #allocation0 [shape = 'u32[]', space=smem, size = 0x4, offset = 0x4, fixed_abs, tag = 'smem constant byte address 0x4 - core index']
  #allocation1 [shape = 'u32[144,128]{1,0:T(1,128)}', space=vmem, size = 0x12000, scoped, tag = 'internal scratch']
  %s0 = inlined_call_operand.vmem [shape: f32[16,16], index: 0, kind: input, shape index: {}]
  %s1 = inlined_call_operand.vmem [shape: f32[200,128], index: 1, kind: input, shape index: {}]
  %s2 = inlined_call_operand.vmem [shape: f32[3,128], index: 2, kind: output, shape index: {}]
  %s3 = sld [smem:[#allocation0]]
  $region18: #{encoder_forward.1} parent=0
    _
  %s5 = ssub.s32 1, %s3
  %s6 = scalar_select 0, %s5, %s3
  // Predicated region
  $region2: #{encoder_forward.1} parent=0 // pred_check
    _
  $region3: #{encoder_forward.1} parent=0 // pred_check_branch
    %8 = sbr.rel (0) target = $region5
  $region4: #{encoder_forward.1} parent=0 // pred_region
    _
  $region5: #{encoder_forward.1} parent=0 // pred_fallthru
    _
  // Predicated region
  $region6: #{encoder_forward.1} parent=0 // pred_check
    _
  $region7: #{encoder_forward.1} parent=0 // pred_check_branch
    %10 = sbr.rel (0) target = $region9
  $region8: #{encoder_forward.1} parent=0 // pred_region
    _
  $region9: #{encoder_forward.1} parent=0 // pred_fallthru
    _
  %v11 = vld [vmem:[%s1] sm:$0xff]
  %v12 = vld [vmem:[%s1 + $0x8] sm:$0xff]
  %v13 = vld [vmem:[%s1 + $0x10] sm:$0xff]
  %v14 = vld [vmem:[%s1 + $0x18] sm:$0xff]
  %v15 = vld [vmem:[%s1 + $0x20] sm:$0xff]
  %v16 = vld [vmem:[%s1 + $0x28] sm:$0xff]
  %v17 = vld [vmem:[%s1 + $0x30] sm:$0x1]
  %v18 = vld [vmem:[%s1 + $0x38] sm:$0xff]
  %v19 = vld [vmem:[%s1 + $0x40] sm:$0xff]
  %v20 = vld [vmem:[%s1 + $0x48] sm:$0xff]
  %v21 = vld [vmem:[%s1 + $0x50] sm:$0xff]
  %v22 = vld [vmem:[%s1 + $0x58] sm:$0xff]
  %v23 = vld [vmem:[%s1 + $0x60] sm:$0xff]
  %v24 = vld [vmem:[%s1 + $0x68] sm:$0xff]
  %v25 = vld [vmem:[%s1 + $0x70] sm:$0xff]
  %v26 = vld [vmem:[%s1 + $0x80] sm:$0xff]
  %v27 = vld [vmem:[%s1 + $0x88] sm:$0xff]
  %v28 = vld [vmem:[%s1 + $0x90] sm:$0xff]
  %v29 = vld [vmem:[%s1 + $0x98] sm:$0xff]
  %v30 = vld [vmem:[%s1 + $0xa0] sm:$0xff]
  %v31 = vld [vmem:[%s1 + $0xa8] sm:$0xff]
  %v32 = vld [vmem:[%s1 + $0xb0] sm:$0xff]
  %v33 = vld [vmem:[%s1 + $0xb8] sm:$0xff]
  %v34 = vld [vmem:[%s1 + $0x78] sm:$0x1]
  %v35 = vlaneseq
  %v36 = vshrl.u32 %v35, 7
  %v37 = vsub.s32 0, %v36
  %v38 = vrot.slane %v34, %v37
  %v39 = vld [vmem:[%s1 + $0xc0] sm:$0x1]
  %v40 = vlaneseq
  %v41 = vshrl.u32 %v40, 7
  %v42 = vsub.s32 0, %v41
  %v43 = vrot.slane %v39, %v42
  %v44 = vld [vmem:[%s0] sm:$0xff]
  %v45 = vld [vmem:[%s0 + $0x8] sm:$0xff]
  %v46 = vlaneseq
  %v47 = vshrl.u32 %v46, 7
  %v48 = vsub.s32 0, %v47
  %v49 = vrot.slane %v17, %v48
  %vm50 = vcmask 130048
  %v52 = vsel %vm50, %v44, 0
  %v55 = vsel %vm50, %v45, 0
  %57 = vmatprep.subr.mxu0 0.0
  %58 = vmatpush1.msra.mxu0 %v11
  %59 = vmatprep.subr.mxu0 0.0
  %60 = vmatpush1.msra.mxu0 %v12
  %61 = vmatprep.subr.mxu0 0.0
  %62 = vmatpush1.msra.mxu0 0.0
  %63 = vmatprep.subr.mxu0 0.0
  %64 = vmatpush1.msra.mxu0 0.0
  %65 = vmatprep.subr.mxu0 0.0
  %66 = vmatpush1.msra.mxu0 0.0
  %67 = vmatprep.subr.mxu0 0.0
  %68 = vmatpush1.msra.mxu0 0.0
  %69 = vmatprep.subr.mxu0 0.0
  %70 = vmatpush1.msra.mxu0 0.0
  %71 = vmatprep.subr.mxu0 0.0
  %72 = vmatpush1.msra.mxu0 0.0
  %73 = vmatprep.subr.mxu0 0.0
  %74 = vmatpush1.msra.mxu0 0.0
  %75 = vmatprep.subr.mxu0 0.0
  %76 = vmatpush1.msra.mxu0 0.0
  %77 = vmatprep.subr.mxu0 0.0
  %78 = vmatpush1.msra.mxu0 0.0
  %79 = vmatprep.subr.mxu0 0.0
  %80 = vmatpush1.msra.mxu0 0.0
  %81 = vmatprep.subr.mxu0 0.0
  %82 = vmatpush1.msra.mxu0 0.0
  %83 = vmatprep.subr.mxu0 0.0
  %84 = vmatpush1.msra.mxu0 0.0
  %85 = vmatprep.subr.mxu0 0.0
  %86 = vmatpush1.msra.mxu0 0.0
  %87 = vmatprep.subr.mxu0 0.0
  %88 = vmatpush1.msra.mxu0 0.0
  %89 = vmatprep.subr.mxu0 0.0
  %90 = vmatpush1.msra.mxu0 0.0
  %91 = vmatprep.subr.mxu0 0.0
  %92 = vmatpush1.msra.mxu0 0.0
  %93 = vmatprep.subr.mxu0 0.0
  %94 = vmatpush1.msra.mxu0 0.0
  %95 = vmatprep.subr.mxu0 0.0
  %96 = vmatpush1.msra.mxu0 0.0
  %97 = vmatprep.subr.mxu0 0.0
  %98 = vmatpush1.msra.mxu0 0.0
  %99 = vmatprep.subr.mxu0 0.0
  %100 = vmatpush1.msra.mxu0 0.0
  %101 = vmatprep.subr.mxu0 0.0
  %102 = vmatpush1.msra.mxu0 0.0
  %103 = vmatprep.subr.mxu0 0.0
  %104 = vmatpush1.msra.mxu0 0.0
  %105 = vmatprep.subr.mxu0 0.0
  %106 = vmatpush1.msra.mxu0 0.0
  %107 = vmatprep.subr.mxu0 0.0
  %108 = vmatpush1.msra.mxu0 0.0
  %109 = vmatprep.subr.mxu0 0.0
  %110 = vmatpush1.msra.mxu0 0.0
  %111 = vmatprep.subr.mxu0 0.0
  %112 = vmatpush1.msra.mxu0 0.0
  %113 = vmatprep.subr.mxu0 0.0
  %114 = vmatpush1.msra.mxu0 0.0
  %115 = vmatprep.subr.mxu0 0.0
  %116 = vmatpush1.msra.mxu0 0.0
  %117 = vmatprep.subr.mxu0 0.0
  %118 = vmatpush1.msra.mxu0 0.0
  %119 = vmatprep.subr.mxu0 0.0
  %120 = vmatpush1.msra.mxu0 0.0
  %121 = vmatprep.mubr.f32.mxu0 0.0
  %122 = vmatmul.mubr.f32.gmra.mrb[0].mxu0 %v52
  %v123 = vpop.f32.mrb[0].mxu0
  %v124 = vadd.f32 %v49, %v123
  %v125 = vpop.f32.mrb[0].mxu0
  %126 = vmatprep.mubr.f32.mxu0 0.0
  %127 = vmatmul.mubr.f32.gmra.mrb[0].mxu0 %v55
  %v128 = vpop.f32.mrb[0].mxu0
  %v129 = vadd.f32 %v49, %v128
  %v130 = vpop.f32.mrb[0].mxu0
  %131 = vdwg.mxu0
  %vm132 = vcmask 261120
  %v134 = vsel %vm132, 0.0, 0
  %136 = vmatprep.subr.mxu0 0.0
  %137 = vmatpush1.msra.mxu0 %v13
  %138 = vmatprep.subr.mxu0 0.0
  %139 = vmatpush1.msra.mxu0 %v14
  %140 = vmatprep.subr.mxu0 0.0
  %141 = vmatpush1.msra.mxu0 %v15
  %142 = vmatprep.subr.mxu0 0.0
  %143 = vmatpush1.msra.mxu0 %v16
  %144 = vmatprep.subr.mxu0 0.0
  %145 = vmatpush1.msra.mxu0 0.0
  %146 = vmatprep.subr.mxu0 0.0
  %147 = vmatpush1.msra.mxu0 0.0
  %148 = vmatprep.subr.mxu0 0.0
  %149 = vmatpush1.msra.mxu0 0.0
  %150 = vmatprep.subr.mxu0 0.0
  %151 = vmatpush1.msra.mxu0 0.0
  %152 = vmatprep.subr.mxu0 0.0
  %153 = vmatpush1.msra.mxu0 0.0
  %154 = vmatprep.subr.mxu0 0.0
  %155 = vmatpush1.msra.mxu0 0.0
  %156 = vmatprep.subr.mxu0 0.0
  %157 = vmatpush1.msra.mxu0 0.0
  %158 = vmatprep.subr.mxu0 0.0
  %159 = vmatpush1.msra.mxu0 0.0
  %160 = vmatprep.subr.mxu0 0.0
  %161 = vmatpush1.msra.mxu0 0.0
  %162 = vmatprep.subr.mxu0 0.0
  %163 = vmatpush1.msra.mxu0 0.0
  %164 = vmatprep.subr.mxu0 0.0
  %165 = vmatpush1.msra.mxu0 0.0
  %166 = vmatprep.subr.mxu0 0.0
  %167 = vmatpush1.msra.mxu0 0.0
  %168 = vmatprep.subr.mxu0 0.0
  %169 = vmatpush1.msra.mxu0 0.0
  %170 = vmatprep.subr.mxu0 0.0
  %171 = vmatpush1.msra.mxu0 0.0
  %172 = vmatprep.subr.mxu0 0.0
  %173 = vmatpush1.msra.mxu0 0.0
  %174 = vmatprep.subr.mxu0 0.0
  %175 = vmatpush1.msra.mxu0 0.0
  %176 = vmatprep.subr.mxu0 0.0
  %177 = vmatpush1.msra.mxu0 0.0
  %178 = vmatprep.subr.mxu0 0.0
  %179 = vmatpush1.msra.mxu0 0.0
  %180 = vmatprep.subr.mxu0 0.0
  %181 = vmatpush1.msra.mxu0 0.0
  %182 = vmatprep.subr.mxu0 0.0
  %183 = vmatpush1.msra.mxu0 0.0
  %184 = vmatprep.subr.mxu0 0.0
  %185 = vmatpush1.msra.mxu0 0.0
  %186 = vmatprep.subr.mxu0 0.0
  %187 = vmatpush1.msra.mxu0 0.0
  %188 = vmatprep.subr.mxu0 0.0
  %189 = vmatpush1.msra.mxu0 0.0
  %190 = vmatprep.subr.mxu0 0.0
  %191 = vmatpush1.msra.mxu0 0.0
  %192 = vmatprep.subr.mxu0 0.0
  %193 = vmatpush1.msra.mxu0 0.0
  %194 = vmatprep.subr.mxu0 0.0
  %195 = vmatpush1.msra.mxu0 0.0
  %196 = vmatprep.subr.mxu0 0.0
  %197 = vmatpush1.msra.mxu0 0.0
  %198 = vmatprep.subr.mxu0 0.0
  %199 = vmatpush1.msra.mxu0 0.0
  %200 = vmatprep.mubr.f32.mxu0 0.0
  %201 = vmatmul.mubr.f32.gmra.mrb[0].mxu0 %v134
  %v202 = vpop.f32.mrb[0].mxu0
  %v203 = vadd.f32 0.0, %v202
  %v204 = vpop.f32.mrb[0].mxu0
  %205 = vdwg.mxu0
  %v206 = vadd.f32 %v124, %v203
  %v207 = vxor.u32 %v206, 2147483648
  %v208 = vmul.f32 %v207, 1.442695
  %v209 = vpow.pop %v208
  %v210 = vadd.f32 %v209, 1.0
  %v211 = vrcp.pop %v210
  %v212 = vmul.f32 1.0, %v211
  %v213 = vtanh.pop %v206
  %v214 = vmul.f32 %v212, 0.0
  %216 = vrot.lane.b32.xlu0 %v213, 64
  %v217 = vpop.permute.xlu0 %216
  %v219 = vmul.f32 %v212, %v217
  %221 = vrot.lane.b32.xlu0 %v219, 32
  %v222 = vpop.permute.xlu0 %221
  %v224 = vadd.f32 %v214, %v222
  %v225 = vtanh.pop %v224
  %227 = vrot.lane.b32.xlu0 %v225, 64
  %v228 = vpop.permute.xlu0 %227
  %v230 = vmul.f32 %v212, %v228
  %231 = vmatprep.subr.mxu0 0.0
  %232 = vmatpush1.msra.mxu0 %v22
  %233 = vmatprep.subr.mxu0 0.0
  %234 = vmatpush1.msra.mxu0 %v23
  %235 = vmatprep.subr.mxu0 0.0
  %236 = vmatpush1.msra.mxu0 %v24
  %237 = vmatprep.subr.mxu0 0.0
  %238 = vmatpush1.msra.mxu0 %v25
  %239 = vmatprep.subr.mxu0 0.0
  %240 = vmatpush1.msra.mxu0 0.0
  %241 = vmatprep.subr.mxu0 0.0
  %242 = vmatpush1.msra.mxu0 0.0
  %243 = vmatprep.subr.mxu0 0.0
  %244 = vmatpush1.msra.mxu0 0.0
  %245 = vmatprep.subr.mxu0 0.0
  %246 = vmatpush1.msra.mxu0 0.0
  %247 = vmatprep.subr.mxu0 0.0
  %248 = vmatpush1.msra.mxu0 0.0
  %249 = vmatprep.subr.mxu0 0.0
  %250 = vmatpush1.msra.mxu0 0.0
  %251 = vmatprep.subr.mxu0 0.0
  %252 = vmatpush1.msra.mxu0 0.0
  %253 = vmatprep.subr.mxu0 0.0
  %254 = vmatpush1.msra.mxu0 0.0
  %255 = vmatprep.subr.mxu0 0.0
  %256 = vmatpush1.msra.mxu0 0.0
  %257 = vmatprep.subr.mxu0 0.0
  %258 = vmatpush1.msra.mxu0 0.0
  %259 = vmatprep.subr.mxu0 0.0
  %260 = vmatpush1.msra.mxu0 0.0
  %261 = vmatprep.subr.mxu0 0.0
  %262 = vmatpush1.msra.mxu0 0.0
  %263 = vmatprep.subr.mxu0 0.0
  %264 = vmatpush1.msra.mxu0 0.0
  %265 = vmatprep.subr.mxu0 0.0
  %266 = vmatpush1.msra.mxu0 0.0
  %267 = vmatprep.subr.mxu0 0.0
  %268 = vmatpush1.msra.mxu0 0.0
  %269 = vmatprep.subr.mxu0 0.0
  %270 = vmatpush1.msra.mxu0 0.0
  %271 = vmatprep.subr.mxu0 0.0
  %272 = vmatpush1.msra.mxu0 0.0
  %273 = vmatprep.subr.mxu0 0.0
  %274 = vmatpush1.msra.mxu0 0.0
  %275 = vmatprep.subr.mxu0 0.0
  %276 = vmatpush1.msra.mxu0 0.0
  %277 = vmatprep.subr.mxu0 0.0
  %278 = vmatpush1.msra.mxu0 0.0
  %279 = vmatprep.subr.mxu0 0.0
  %280 = vmatpush1.msra.mxu0 0.0
  %281 = vmatprep.subr.mxu0 0.0
  %282 = vmatpush1.msra.mxu0 0.0
  %283 = vmatprep.subr.mxu0 0.0
  %284 = vmatpush1.msra.mxu0 0.0
  %285 = vmatprep.subr.mxu0 0.0
  %286 = vmatpush1.msra.mxu0 0.0
  %287 = vmatprep.subr.mxu0 0.0
  %288 = vmatpush1.msra.mxu0 0.0
  %289 = vmatprep.subr.mxu0 0.0
  %290 = vmatpush1.msra.mxu0 0.0
  %291 = vmatprep.subr.mxu0 0.0
  %292 = vmatpush1.msra.mxu0 0.0
  %293 = vmatprep.subr.mxu0 0.0
  %294 = vmatpush1.msra.mxu0 0.0
  %295 = vmatprep.mubr.f32.mxu0 0.0
  %296 = vmatmul.mubr.f32.gmra.mrb[0].mxu0 %v134
  %v297 = vpop.f32.mrb[0].mxu0
  %v298 = vadd.f32 0.0, %v297
  %v299 = vpop.f32.mrb[0].mxu0
  %300 = vdwg.mxu0
  %302 = vrot.lane.b32.xlu0 %v230, 32
  %v303 = vpop.permute.xlu0 %302
  %v304 = vsel %vm132, %v303, 0
  %306 = vmatprep.subr.mxu0 0.0
  %307 = vmatpush1.msra.mxu0 %v18
  %308 = vmatprep.subr.mxu0 0.0
  %309 = vmatpush1.msra.mxu0 %v19
  %310 = vmatprep.subr.mxu0 0.0
  %311 = vmatpush1.msra.mxu0 %v20
  %312 = vmatprep.subr.mxu0 0.0
  %313 = vmatpush1.msra.mxu0 %v21
  %314 = vmatprep.subr.mxu0 0.0
  %315 = vmatpush1.msra.mxu0 0.0
  %316 = vmatprep.subr.mxu0 0.0
  %317 = vmatpush1.msra.mxu0 0.0
  %318 = vmatprep.subr.mxu0 0.0
  %319 = vmatpush1.msra.mxu0 0.0
  %320 = vmatprep.subr.mxu0 0.0
  %321 = vmatpush1.msra.mxu0 0.0
  %322 = vmatprep.subr.mxu0 0.0
  %323 = vmatpush1.msra.mxu0 0.0
  %324 = vmatprep.subr.mxu0 0.0
  %325 = vmatpush1.msra.mxu0 0.0
  %326 = vmatprep.subr.mxu0 0.0
  %327 = vmatpush1.msra.mxu0 0.0
  %328 = vmatprep.subr.mxu0 0.0
  %329 = vmatpush1.msra.mxu0 0.0
  %330 = vmatprep.subr.mxu0 0.0
  %331 = vmatpush1.msra.mxu0 0.0
  %332 = vmatprep.subr.mxu0 0.0
  %333 = vmatpush1.msra.mxu0 0.0
  %334 = vmatprep.subr.mxu0 0.0
  %335 = vmatpush1.msra.mxu0 0.0
  %336 = vmatprep.subr.mxu0 0.0
  %337 = vmatpush1.msra.mxu0 0.0
  %338 = vmatprep.subr.mxu0 0.0
  %339 = vmatpush1.msra.mxu0 0.0
  %340 = vmatprep.subr.mxu0 0.0
  %341 = vmatpush1.msra.mxu0 0.0
  %342 = vmatprep.subr.mxu0 0.0
  %343 = vmatpush1.msra.mxu0 0.0
  %344 = vmatprep.subr.mxu0 0.0
  %345 = vmatpush1.msra.mxu0 0.0
  %346 = vmatprep.subr.mxu0 0.0
  %347 = vmatpush1.msra.mxu0 0.0
  %348 = vmatprep.subr.mxu0 0.0
  %349 = vmatpush1.msra.mxu0 0.0
  %350 = vmatprep.subr.mxu0 0.0
  %351 = vmatpush1.msra.mxu0 0.0
  %352 = vmatprep.subr.mxu0 0.0
  %353 = vmatpush1.msra.mxu0 0.0
  %354 = vmatprep.subr.mxu0 0.0
  %355 = vmatpush1.msra.mxu0 0.0
  %356 = vmatprep.subr.mxu0 0.0
  %357 = vmatpush1.msra.mxu0 0.0
  %358 = vmatprep.subr.mxu0 0.0
  %359 = vmatpush1.msra.mxu0 0.0
  %360 = vmatprep.subr.mxu0 0.0
  %361 = vmatpush1.msra.mxu0 0.0
  %362 = vmatprep.subr.mxu0 0.0
  %363 = vmatpush1.msra.mxu0 0.0
  %364 = vmatprep.subr.mxu0 0.0
  %365 = vmatpush1.msra.mxu0 0.0
  %366 = vmatprep.subr.mxu0 0.0
  %367 = vmatpush1.msra.mxu0 0.0
  %368 = vmatprep.subr.mxu0 0.0
  %369 = vmatpush1.msra.mxu0 0.0
  %370 = vmatprep.mubr.f32.mxu0 0.0
  %371 = vmatmul.mubr.f32.gmra.mrb[0].mxu0 %v304
  %v372 = vpop.f32.mrb[0].mxu0
  %v373 = vadd.f32 %v298, %v372
  %v374 = vpop.f32.mrb[0].mxu0
  %375 = vdwg.mxu0
  %v376 = vadd.f32 %v373, %v38
  %v377 = vxor.u32 %v376, 2147483648
  %v378 = vmul.f32 %v377, 1.442695
  %v379 = vpow.pop %v378
  %v380 = vadd.f32 %v379, 1.0
  %v381 = vrcp.pop %v380
  %v382 = vmul.f32 1.0, %v381
  %v383 = vtanh.pop %v376
  %v384 = vmul.f32 %v382, 0.0
  %386 = vrot.lane.b32.xlu0 %v383, 64
  %v387 = vpop.permute.xlu0 %386
  %v389 = vmul.f32 %v382, %v387
  %391 = vrot.lane.b32.xlu0 %v389, 32
  %v392 = vpop.permute.xlu0 %391
  %v394 = vadd.f32 %v384, %v392
  %v395 = vtanh.pop %v394
  %397 = vrot.lane.b32.xlu0 %v395, 64
  %v398 = vpop.permute.xlu0 %397
  %v400 = vmul.f32 %v382, %v398
  %401 = vmatprep.subr.mxu0 0.0
  %402 = vmatpush1.msra.mxu0 %v30
  %403 = vmatprep.subr.mxu0 0.0
  %404 = vmatpush1.msra.mxu0 %v31
  %405 = vmatprep.subr.mxu0 0.0
  %406 = vmatpush1.msra.mxu0 %v32
  %407 = vmatprep.subr.mxu0 0.0
  %408 = vmatpush1.msra.mxu0 %v33
  %409 = vmatprep.subr.mxu0 0.0
  %410 = vmatpush1.msra.mxu0 0.0
  %411 = vmatprep.subr.mxu0 0.0
  %412 = vmatpush1.msra.mxu0 0.0
  %413 = vmatprep.subr.mxu0 0.0
  %414 = vmatpush1.msra.mxu0 0.0
  %415 = vmatprep.subr.mxu0 0.0
  %416 = vmatpush1.msra.mxu0 0.0
  %417 = vmatprep.subr.mxu0 0.0
  %418 = vmatpush1.msra.mxu0 0.0
  %419 = vmatprep.subr.mxu0 0.0
  %420 = vmatpush1.msra.mxu0 0.0
  %421 = vmatprep.subr.mxu0 0.0
  %422 = vmatpush1.msra.mxu0 0.0
  %423 = vmatprep.subr.mxu0 0.0
  %424 = vmatpush1.msra.mxu0 0.0
  %425 = vmatprep.subr.mxu0 0.0
  %426 = vmatpush1.msra.mxu0 0.0
  %427 = vmatprep.subr.mxu0 0.0
  %428 = vmatpush1.msra.mxu0 0.0
  %429 = vmatprep.subr.mxu0 0.0
  %430 = vmatpush1.msra.mxu0 0.0
  %431 = vmatprep.subr.mxu0 0.0
  %432 = vmatpush1.msra.mxu0 0.0
  %433 = vmatprep.subr.mxu0 0.0
  %434 = vmatpush1.msra.mxu0 0.0
  %435 = vmatprep.subr.mxu0 0.0
  %436 = vmatpush1.msra.mxu0 0.0
  %437 = vmatprep.subr.mxu0 0.0
  %438 = vmatpush1.msra.mxu0 0.0
  %439 = vmatprep.subr.mxu0 0.0
  %440 = vmatpush1.msra.mxu0 0.0
  %441 = vmatprep.subr.mxu0 0.0
  %442 = vmatpush1.msra.mxu0 0.0
  %443 = vmatprep.subr.mxu0 0.0
  %444 = vmatpush1.msra.mxu0 0.0
  %445 = vmatprep.subr.mxu0 0.0
  %446 = vmatpush1.msra.mxu0 0.0
  %447 = vmatprep.subr.mxu0 0.0
  %448 = vmatpush1.msra.mxu0 0.0
  %449 = vmatprep.subr.mxu0 0.0
  %450 = vmatpush1.msra.mxu0 0.0
  %451 = vmatprep.subr.mxu0 0.0
  %452 = vmatpush1.msra.mxu0 0.0
  %453 = vmatprep.subr.mxu0 0.0
  %454 = vmatpush1.msra.mxu0 0.0
  %455 = vmatprep.subr.mxu0 0.0
  %456 = vmatpush1.msra.mxu0 0.0
  %457 = vmatprep.subr.mxu0 0.0
  %458 = vmatpush1.msra.mxu0 0.0
  %459 = vmatprep.subr.mxu0 0.0
  %460 = vmatpush1.msra.mxu0 0.0
  %461 = vmatprep.subr.mxu0 0.0
  %462 = vmatpush1.msra.mxu0 0.0
  %463 = vmatprep.subr.mxu0 0.0
  %464 = vmatpush1.msra.mxu0 0.0
  %465 = vmatprep.mubr.f32.mxu0 0.0
  %466 = vmatmul.mubr.f32.gmra.mrb[0].mxu0 %v134
  %v467 = vpop.f32.mrb[0].mxu0
  %v468 = vadd.f32 0.0, %v467
  %v469 = vpop.f32.mrb[0].mxu0
  %470 = vdwg.mxu0
  %472 = vrot.lane.b32.xlu0 %v400, 32
  %v473 = vpop.permute.xlu0 %472
  %v474 = vsel %vm132, %v473, 0
  %476 = vmatprep.subr.mxu0 0.0
  %477 = vmatpush1.msra.mxu0 %v26
  %478 = vmatprep.subr.mxu0 0.0
  %479 = vmatpush1.msra.mxu0 %v27
  %480 = vmatprep.subr.mxu0 0.0
  %481 = vmatpush1.msra.mxu0 %v28
  %482 = vmatprep.subr.mxu0 0.0
  %483 = vmatpush1.msra.mxu0 %v29
  %484 = vmatprep.subr.mxu0 0.0
  %485 = vmatpush1.msra.mxu0 0.0
  %486 = vmatprep.subr.mxu0 0.0
  %487 = vmatpush1.msra.mxu0 0.0
  %488 = vmatprep.subr.mxu0 0.0
  %489 = vmatpush1.msra.mxu0 0.0
  %490 = vmatprep.subr.mxu0 0.0
  %491 = vmatpush1.msra.mxu0 0.0
  %492 = vmatprep.subr.mxu0 0.0
  %493 = vmatpush1.msra.mxu0 0.0
  %494 = vmatprep.subr.mxu0 0.0
  %495 = vmatpush1.msra.mxu0 0.0
  %496 = vmatprep.subr.mxu0 0.0
  %497 = vmatpush1.msra.mxu0 0.0
  %498 = vmatprep.subr.mxu0 0.0
  %499 = vmatpush1.msra.mxu0 0.0
  %500 = vmatprep.subr.mxu0 0.0
  %501 = vmatpush1.msra.mxu0 0.0
  %502 = vmatprep.subr.mxu0 0.0
  %503 = vmatpush1.msra.mxu0 0.0
  %504 = vmatprep.subr.mxu0 0.0
  %505 = vmatpush1.msra.mxu0 0.0
  %506 = vmatprep.subr.mxu0 0.0
  %507 = vmatpush1.msra.mxu0 0.0
  %508 = vmatprep.subr.mxu0 0.0
  %509 = vmatpush1.msra.mxu0 0.0
  %510 = vmatprep.subr.mxu0 0.0
  %511 = vmatpush1.msra.mxu0 0.0
  %512 = vmatprep.subr.mxu0 0.0
  %513 = vmatpush1.msra.mxu0 0.0
  %514 = vmatprep.subr.mxu0 0.0
  %515 = vmatpush1.msra.mxu0 0.0
  %516 = vmatprep.subr.mxu0 0.0
  %517 = vmatpush1.msra.mxu0 0.0
  %518 = vmatprep.subr.mxu0 0.0
  %519 = vmatpush1.msra.mxu0 0.0
  %520 = vmatprep.subr.mxu0 0.0
  %521 = vmatpush1.msra.mxu0 0.0
  %522 = vmatprep.subr.mxu0 0.0
  %523 = vmatpush1.msra.mxu0 0.0
  %524 = vmatprep.subr.mxu0 0.0
  %525 = vmatpush1.msra.mxu0 0.0
  %526 = vmatprep.subr.mxu0 0.0
  %527 = vmatpush1.msra.mxu0 0.0
  %528 = vmatprep.subr.mxu0 0.0
  %529 = vmatpush1.msra.mxu0 0.0
  %530 = vmatprep.subr.mxu0 0.0
  %531 = vmatpush1.msra.mxu0 0.0
  %532 = vmatprep.subr.mxu0 0.0
  %533 = vmatpush1.msra.mxu0 0.0
  %534 = vmatprep.subr.mxu0 0.0
  %535 = vmatpush1.msra.mxu0 0.0
  %536 = vmatprep.subr.mxu0 0.0
  %537 = vmatpush1.msra.mxu0 0.0
  %538 = vmatprep.subr.mxu0 0.0
  %539 = vmatpush1.msra.mxu0 0.0
  %540 = vmatprep.mubr.f32.mxu0 0.0
  %541 = vmatmul.mubr.f32.gmra.mrb[0].mxu0 %v474
  %v542 = vpop.f32.mrb[0].mxu0
  %v543 = vadd.f32 %v468, %v542
  %v544 = vpop.f32.mrb[0].mxu0
  %545 = vdwg.mxu0
  %v546 = vadd.f32 %v543, %v43
  %v547 = vxor.u32 %v546, 2147483648
  %v548 = vmul.f32 %v547, 1.442695
  %v549 = vpow.pop %v548
  %v550 = vadd.f32 %v549, 1.0
  %v551 = vrcp.pop %v550
  %v552 = vmul.f32 1.0, %v551
  %v553 = vtanh.pop %v546
  %v554 = vmul.f32 %v552, 0.0
  %556 = vrot.lane.b32.xlu0 %v553, 64
  %v557 = vpop.permute.xlu0 %556
  %v559 = vmul.f32 %v552, %v557
  %561 = vrot.lane.b32.xlu0 %v559, 32
  %v562 = vpop.permute.xlu0 %561
  %v564 = vadd.f32 %v554, %v562
  %v565 = vtanh.pop %v564
  %567 = vrot.lane.b32.xlu0 %v565, 64
  %v568 = vpop.permute.xlu0 %567
  %v570 = vmul.f32 %v552, %v568
  %571 = vmatprep.subr.mxu0 0.0
  %572 = vmatpush1.msra.mxu0 %v13
  %573 = vmatprep.subr.mxu0 0.0
  %574 = vmatpush1.msra.mxu0 %v14
  %575 = vmatprep.subr.mxu0 0.0
  %576 = vmatpush1.msra.mxu0 %v15
  %577 = vmatprep.subr.mxu0 0.0
  %578 = vmatpush1.msra.mxu0 %v16
  %579 = vmatprep.subr.mxu0 0.0
  %580 = vmatpush1.msra.mxu0 0.0
  %581 = vmatprep.subr.mxu0 0.0
  %582 = vmatpush1.msra.mxu0 0.0
  %583 = vmatprep.subr.mxu0 0.0
  %584 = vmatpush1.msra.mxu0 0.0
  %585 = vmatprep.subr.mxu0 0.0
  %586 = vmatpush1.msra.mxu0 0.0
  %587 = vmatprep.subr.mxu0 0.0
  %588 = vmatpush1.msra.mxu0 0.0
  %589 = vmatprep.subr.mxu0 0.0
  %590 = vmatpush1.msra.mxu0 0.0
  %591 = vmatprep.subr.mxu0 0.0
  %592 = vmatpush1.msra.mxu0 0.0
  %593 = vmatprep.subr.mxu0 0.0
  %594 = vmatpush1.msra.mxu0 0.0
  %595 = vmatprep.subr.mxu0 0.0
  %596 = vmatpush1.msra.mxu0 0.0
  %597 = vmatprep.subr.mxu0 0.0
  %598 = vmatpush1.msra.mxu0 0.0
  %599 = vmatprep.subr.mxu0 0.0
  %600 = vmatpush1.msra.mxu0 0.0
  %601 = vmatprep.subr.mxu0 0.0
  %602 = vmatpush1.msra.mxu0 0.0
  %603 = vmatprep.subr.mxu0 0.0
  %604 = vmatpush1.msra.mxu0 0.0
  %605 = vmatprep.subr.mxu0 0.0
  %606 = vmatpush1.msra.mxu0 0.0
  %607 = vmatprep.subr.mxu0 0.0
  %608 = vmatpush1.msra.mxu0 0.0
  %609 = vmatprep.subr.mxu0 0.0
  %610 = vmatpush1.msra.mxu0 0.0
  %611 = vmatprep.subr.mxu0 0.0
  %612 = vmatpush1.msra.mxu0 0.0
  %613 = vmatprep.subr.mxu0 0.0
  %614 = vmatpush1.msra.mxu0 0.0
  %615 = vmatprep.subr.mxu0 0.0
  %616 = vmatpush1.msra.mxu0 0.0
  %617 = vmatprep.subr.mxu0 0.0
  %618 = vmatpush1.msra.mxu0 0.0
  %619 = vmatprep.subr.mxu0 0.0
  %620 = vmatpush1.msra.mxu0 0.0
  %621 = vmatprep.subr.mxu0 0.0
  %622 = vmatpush1.msra.mxu0 0.0
  %623 = vmatprep.subr.mxu0 0.0
  %624 = vmatpush1.msra.mxu0 0.0
  %625 = vmatprep.subr.mxu0 0.0
  %626 = vmatpush1.msra.mxu0 0.0
  %627 = vmatprep.subr.mxu0 0.0
  %628 = vmatpush1.msra.mxu0 0.0
  %629 = vmatprep.subr.mxu0 0.0
  %630 = vmatpush1.msra.mxu0 0.0
  %631 = vmatprep.subr.mxu0 0.0
  %632 = vmatpush1.msra.mxu0 0.0
  %633 = vmatprep.subr.mxu0 0.0
  %634 = vmatpush1.msra.mxu0 0.0
  %635 = vmatprep.mubr.f32.mxu0 0.0
  %636 = vmatmul.mubr.f32.gmra.mrb[0].mxu0 %v304
  %v637 = vpop.f32.mrb[0].mxu0
  %v638 = vadd.f32 0.0, %v637
  %v639 = vpop.f32.mrb[0].mxu0
  %640 = vdwg.mxu0
  %v642 = vrot.slane %v638, 6
  %v644 = vadd.f32 %v124, %v642
  %v645 = vxor.u32 %v644, 2147483648
  %v646 = vmul.f32 %v645, 1.442695
  %v647 = vpow.pop %v646
  %v648 = vadd.f32 %v647, 1.0
  %v649 = vrcp.pop %v648
  %v650 = vmul.f32 1.0, %v649
  %v651 = vtanh.pop %v644
  %v653 = vrot.slane %v224, 6
  %v655 = vmul.f32 %v650, %v653
  %657 = vrot.lane.b32.xlu0 %v651, 64
  %v658 = vpop.permute.xlu0 %657
  %v660 = vmul.f32 %v650, %v658
  %662 = vrot.lane.b32.xlu0 %v660, 32
  %v663 = vpop.permute.xlu0 %662
  %v665 = vadd.f32 %v655, %v663
  %v666 = vtanh.pop %v665
  %668 = vrot.lane.b32.xlu0 %v666, 64
  %v669 = vpop.permute.xlu0 %668
  %v671 = vmul.f32 %v650, %v669
  %672 = vmatprep.subr.mxu0 0.0
  %673 = vmatpush1.msra.mxu0 %v22
  %674 = vmatprep.subr.mxu0 0.0
  %675 = vmatpush1.msra.mxu0 %v23
  %676 = vmatprep.subr.mxu0 0.0
  %677 = vmatpush1.msra.mxu0 %v24
  %678 = vmatprep.subr.mxu0 0.0
  %679 = vmatpush1.msra.mxu0 %v25
  %680 = vmatprep.subr.mxu0 0.0
  %681 = vmatpush1.msra.mxu0 0.0
  %682 = vmatprep.subr.mxu0 0.0
  %683 = vmatpush1.msra.mxu0 0.0
  %684 = vmatprep.subr.mxu0 0.0
  %685 = vmatpush1.msra.mxu0 0.0
  %686 = vmatprep.subr.mxu0 0.0
  %687 = vmatpush1.msra.mxu0 0.0
  %688 = vmatprep.subr.mxu0 0.0
  %689 = vmatpush1.msra.mxu0 0.0
  %690 = vmatprep.subr.mxu0 0.0
  %691 = vmatpush1.msra.mxu0 0.0
  %692 = vmatprep.subr.mxu0 0.0
  %693 = vmatpush1.msra.mxu0 0.0
  %694 = vmatprep.subr.mxu0 0.0
  %695 = vmatpush1.msra.mxu0 0.0
  %696 = vmatprep.subr.mxu0 0.0
  %697 = vmatpush1.msra.mxu0 0.0
  %698 = vmatprep.subr.mxu0 0.0
  %699 = vmatpush1.msra.mxu0 0.0
  %700 = vmatprep.subr.mxu0 0.0
  %701 = vmatpush1.msra.mxu0 0.0
  %702 = vmatprep.subr.mxu0 0.0
  %703 = vmatpush1.msra.mxu0 0.0
  %704 = vmatprep.subr.mxu0 0.0
  %705 = vmatpush1.msra.mxu0 0.0
  %706 = vmatprep.subr.mxu0 0.0
  %707 = vmatpush1.msra.mxu0 0.0
  %708 = vmatprep.subr.mxu0 0.0
  %709 = vmatpush1.msra.mxu0 0.0
  %710 = vmatprep.subr.mxu0 0.0
  %711 = vmatpush1.msra.mxu0 0.0
  %712 = vmatprep.subr.mxu0 0.0
  %713 = vmatpush1.msra.mxu0 0.0
  %714 = vmatprep.subr.mxu0 0.0
  %715 = vmatpush1.msra.mxu0 0.0
  %716 = vmatprep.subr.mxu0 0.0
  %717 = vmatpush1.msra.mxu0 0.0
  %718 = vmatprep.subr.mxu0 0.0
  %719 = vmatpush1.msra.mxu0 0.0
  %720 = vmatprep.subr.mxu0 0.0
  %721 = vmatpush1.msra.mxu0 0.0
  %722 = vmatprep.subr.mxu0 0.0
  %723 = vmatpush1.msra.mxu0 0.0
  %724 = vmatprep.subr.mxu0 0.0
  %725 = vmatpush1.msra.mxu0 0.0
  %726 = vmatprep.subr.mxu0 0.0
  %727 = vmatpush1.msra.mxu0 0.0
  %728 = vmatprep.subr.mxu0 0.0
  %729 = vmatpush1.msra.mxu0 0.0
  %730 = vmatprep.subr.mxu0 0.0
  %731 = vmatpush1.msra.mxu0 0.0
  %732 = vmatprep.subr.mxu0 0.0
  %733 = vmatpush1.msra.mxu0 0.0
  %734 = vmatprep.subr.mxu0 0.0
  %735 = vmatpush1.msra.mxu0 0.0
  %736 = vmatprep.mubr.f32.mxu0 0.0
  %737 = vmatmul.mubr.f32.gmra.mrb[0].mxu0 %v474
  %v738 = vpop.f32.mrb[0].mxu0
  %v739 = vadd.f32 0.0, %v738
  %v740 = vpop.f32.mrb[0].mxu0
  %741 = vdwg.mxu0
  %v743 = vrot.slane %v671, 2
  %744 = vrot.lane.b32.xlu0 %v743, 32
  %v745 = vpop.permute.xlu0 %744
  %v746 = vsel %vm132, %v745, 0
  %748 = vmatprep.subr.mxu0 0.0
  %749 = vmatpush1.msra.mxu0 %v18
  %750 = vmatprep.subr.mxu0 0.0
  %751 = vmatpush1.msra.mxu0 %v19
  %752 = vmatprep.subr.mxu0 0.0
  %753 = vmatpush1.msra.mxu0 %v20
  %754 = vmatprep.subr.mxu0 0.0
  %755 = vmatpush1.msra.mxu0 %v21
  %756 = vmatprep.subr.mxu0 0.0
  %757 = vmatpush1.msra.mxu0 0.0
  %758 = vmatprep.subr.mxu0 0.0
  %759 = vmatpush1.msra.mxu0 0.0
  %760 = vmatprep.subr.mxu0 0.0
  %761 = vmatpush1.msra.mxu0 0.0
  %762 = vmatprep.subr.mxu0 0.0
  %763 = vmatpush1.msra.mxu0 0.0
  %764 = vmatprep.subr.mxu0 0.0
  %765 = vmatpush1.msra.mxu0 0.0
  %766 = vmatprep.subr.mxu0 0.0
  %767 = vmatpush1.msra.mxu0 0.0
  %768 = vmatprep.subr.mxu0 0.0
  %769 = vmatpush1.msra.mxu0 0.0
  %770 = vmatprep.subr.mxu0 0.0
  %771 = vmatpush1.msra.mxu0 0.0
  %772 = vmatprep.subr.mxu0 0.0
  %773 = vmatpush1.msra.mxu0 0.0
  %774 = vmatprep.subr.mxu0 0.0
  %775 = vmatpush1.msra.mxu0 0.0
  %776 = vmatprep.subr.mxu0 0.0
  %777 = vmatpush1.msra.mxu0 0.0
  %778 = vmatprep.subr.mxu0 0.0
  %779 = vmatpush1.msra.mxu0 0.0
  %780 = vmatprep.subr.mxu0 0.0
  %781 = vmatpush1.msra.mxu0 0.0
  %782 = vmatprep.subr.mxu0 0.0
  %783 = vmatpush1.msra.mxu0 0.0
  %784 = vmatprep.subr.mxu0 0.0
  %785 = vmatpush1.msra.mxu0 0.0
  %786 = vmatprep.subr.mxu0 0.0
  %787 = vmatpush1.msra.mxu0 0.0
  %788 = vmatprep.subr.mxu0 0.0
  %789 = vmatpush1.msra.mxu0 0.0
  %790 = vmatprep.subr.mxu0 0.0
  %791 = vmatpush1.msra.mxu0 0.0
  %792 = vmatprep.subr.mxu0 0.0
  %793 = vmatpush1.msra.mxu0 0.0
  %794 = vmatprep.subr.mxu0 0.0
  %795 = vmatpush1.msra.mxu0 0.0
  %796 = vmatprep.subr.mxu0 0.0
  %797 = vmatpush1.msra.mxu0 0.0
  %798 = vmatprep.subr.mxu0 0.0
  %799 = vmatpush1.msra.mxu0 0.0
  %800 = vmatprep.subr.mxu0 0.0
  %801 = vmatpush1.msra.mxu0 0.0
  %802 = vmatprep.subr.mxu0 0.0
  %803 = vmatpush1.msra.mxu0 0.0
  %804 = vmatprep.subr.mxu0 0.0
  %805 = vmatpush1.msra.mxu0 0.0
  %806 = vmatprep.subr.mxu0 0.0
  %807 = vmatpush1.msra.mxu0 0.0
  %808 = vmatprep.subr.mxu0 0.0
  %809 = vmatpush1.msra.mxu0 0.0
  %810 = vmatprep.subr.mxu0 0.0
  %811 = vmatpush1.msra.mxu0 0.0
  %812 = vmatprep.mubr.f32.mxu0 0.0
  %813 = vmatmul.mubr.f32.gmra.mrb[0].mxu0 %v746
  %v814 = vpop.f32.mrb[0].mxu0
  %v815 = vadd.f32 %v739, %v814
  %v816 = vpop.f32.mrb[0].mxu0
  %817 = vdwg.mxu0
  %v818 = vadd.f32 %v815, %v38
  %v819 = vxor.u32 %v818, 2147483648
  %v820 = vmul.f32 %v819, 1.442695
  %v821 = vpow.pop %v820
  %v822 = vadd.f32 %v821, 1.0
  %v823 = vrcp.pop %v822
  %v824 = vmul.f32 1.0, %v823
  %v825 = vtanh.pop %v818
  %v826 = vmul.f32 %v824, %v394
  %828 = vrot.lane.b32.xlu0 %v825, 64
  %v829 = vpop.permute.xlu0 %828
  %v831 = vmul.f32 %v824, %v829
  %833 = vrot.lane.b32.xlu0 %v831, 32
  %v834 = vpop.permute.xlu0 %833
  %v836 = vadd.f32 %v826, %v834
  %v837 = vtanh.pop %v836
  %839 = vrot.lane.b32.xlu0 %v837, 64
  %v840 = vpop.permute.xlu0 %839
  %v842 = vmul.f32 %v824, %v840
  %844 = vrot.lane.b32.xlu0 %v570, 32
  %v845 = vpop.permute.xlu0 %844
  %v846 = vsel %vm132, %v845, 0
  %848 = vmatprep.subr.mxu0 0.0
  %849 = vmatpush1.msra.mxu0 %v30
  %850 = vmatprep.subr.mxu0 0.0
  %851 = vmatpush1.msra.mxu0 %v31
  %852 = vmatprep.subr.mxu0 0.0
  %853 = vmatpush1.msra.mxu0 %v32
  %854 = vmatprep.subr.mxu0 0.0
  %855 = vmatpush1.msra.mxu0 %v33
  %856 = vmatprep.subr.mxu0 0.0
  %857 = vmatpush1.msra.mxu0 0.0
  %858 = vmatprep.subr.mxu0 0.0
  %859 = vmatpush1.msra.mxu0 0.0
  %860 = vmatprep.subr.mxu0 0.0
  %861 = vmatpush1.msra.mxu0 0.0
  %862 = vmatprep.subr.mxu0 0.0
  %863 = vmatpush1.msra.mxu0 0.0
  %864 = vmatprep.subr.mxu0 0.0
  %865 = vmatpush1.msra.mxu0 0.0
  %866 = vmatprep.subr.mxu0 0.0
  %867 = vmatpush1.msra.mxu0 0.0
  %868 = vmatprep.subr.mxu0 0.0
  %869 = vmatpush1.msra.mxu0 0.0
  %870 = vmatprep.subr.mxu0 0.0
  %871 = vmatpush1.msra.mxu0 0.0
  %872 = vmatprep.subr.mxu0 0.0
  %873 = vmatpush1.msra.mxu0 0.0
  %874 = vmatprep.subr.mxu0 0.0
  %875 = vmatpush1.msra.mxu0 0.0
  %876 = vmatprep.subr.mxu0 0.0
  %877 = vmatpush1.msra.mxu0 0.0
  %878 = vmatprep.subr.mxu0 0.0
  %879 = vmatpush1.msra.mxu0 0.0
  %880 = vmatprep.subr.mxu0 0.0
  %881 = vmatpush1.msra.mxu0 0.0
  %882 = vmatprep.subr.mxu0 0.0
  %883 = vmatpush1.msra.mxu0 0.0
  %884 = vmatprep.subr.mxu0 0.0
  %885 = vmatpush1.msra.mxu0 0.0
  %886 = vmatprep.subr.mxu0 0.0
  %887 = vmatpush1.msra.mxu0 0.0
  %888 = vmatprep.subr.mxu0 0.0
  %889 = vmatpush1.msra.mxu0 0.0
  %890 = vmatprep.subr.mxu0 0.0
  %891 = vmatpush1.msra.mxu0 0.0
  %892 = vmatprep.subr.mxu0 0.0
  %893 = vmatpush1.msra.mxu0 0.0
  %894 = vmatprep.subr.mxu0 0.0
  %895 = vmatpush1.msra.mxu0 0.0
  %896 = vmatprep.subr.mxu0 0.0
  %897 = vmatpush1.msra.mxu0 0.0
  %898 = vmatprep.subr.mxu0 0.0
  %899 = vmatpush1.msra.mxu0 0.0
  %900 = vmatprep.subr.mxu0 0.0
  %901 = vmatpush1.msra.mxu0 0.0
  %902 = vmatprep.subr.mxu0 0.0
  %903 = vmatpush1.msra.mxu0 0.0
  %904 = vmatprep.subr.mxu0 0.0
  %905 = vmatpush1.msra.mxu0 0.0
  %906 = vmatprep.subr.mxu0 0.0
  %907 = vmatpush1.msra.mxu0 0.0
  %908 = vmatprep.subr.mxu0 0.0
  %909 = vmatpush1.msra.mxu0 0.0
  %910 = vmatprep.subr.mxu0 0.0
  %911 = vmatpush1.msra.mxu0 0.0
  %912 = vmatprep.mubr.f32.mxu0 0.0
  %913 = vmatmul.mubr.f32.gmra.mrb[0].mxu0 %v846
  %v914 = vpop.f32.mrb[0].mxu0
  %v915 = vadd.f32 0.0, %v914
  %v916 = vpop.f32.mrb[0].mxu0
  %917 = vdwg.mxu0
  %919 = vrot.lane.b32.xlu0 %v842, 32
  %v920 = vpop.permute.xlu0 %919
  %v921 = vsel %vm132, %v920, 0
  %923 = vmatprep.subr.mxu0 0.0
  %924 = vmatpush1.msra.mxu0 %v26
  %925 = vmatprep.subr.mxu0 0.0
  %926 = vmatpush1.msra.mxu0 %v27
  %927 = vmatprep.subr.mxu0 0.0
  %928 = vmatpush1.msra.mxu0 %v28
  %929 = vmatprep.subr.mxu0 0.0
  %930 = vmatpush1.msra.mxu0 %v29
  %931 = vmatprep.subr.mxu0 0.0
  %932 = vmatpush1.msra.mxu0 0.0
  %933 = vmatprep.subr.mxu0 0.0
  %934 = vmatpush1.msra.mxu0 0.0
  %935 = vmatprep.subr.mxu0 0.0
  %936 = vmatpush1.msra.mxu0 0.0
  %937 = vmatprep.subr.mxu0 0.0
  %938 = vmatpush1.msra.mxu0 0.0
  %939 = vmatprep.subr.mxu0 0.0
  %940 = vmatpush1.msra.mxu0 0.0
  %941 = vmatprep.subr.mxu0 0.0
  %942 = vmatpush1.msra.mxu0 0.0
  %943 = vmatprep.subr.mxu0 0.0
  %944 = vmatpush1.msra.mxu0 0.0
  %945 = vmatprep.subr.mxu0 0.0
  %946 = vmatpush1.msra.mxu0 0.0
  %947 = vmatprep.subr.mxu0 0.0
  %948 = vmatpush1.msra.mxu0 0.0
  %949 = vmatprep.subr.mxu0 0.0
  %950 = vmatpush1.msra.mxu0 0.0
  %951 = vmatprep.subr.mxu0 0.0
  %952 = vmatpush1.msra.mxu0 0.0
  %953 = vmatprep.subr.mxu0 0.0
  %954 = vmatpush1.msra.mxu0 0.0
  %955 = vmatprep.subr.mxu0 0.0
  %956 = vmatpush1.msra.mxu0 0.0
  %957 = vmatprep.subr.mxu0 0.0
  %958 = vmatpush1.msra.mxu0 0.0
  %959 = vmatprep.subr.mxu0 0.0
  %960 = vmatpush1.msra.mxu0 0.0
  %961 = vmatprep.subr.mxu0 0.0
  %962 = vmatpush1.msra.mxu0 0.0
  %963 = vmatprep.subr.mxu0 0.0
  %964 = vmatpush1.msra.mxu0 0.0
  %965 = vmatprep.subr.mxu0 0.0
  %966 = vmatpush1.msra.mxu0 0.0
  %967 = vmatprep.subr.mxu0 0.0
  %968 = vmatpush1.msra.mxu0 0.0
  %969 = vmatprep.subr.mxu0 0.0
  %970 = vmatpush1.msra.mxu0 0.0
  %971 = vmatprep.subr.mxu0 0.0
  %972 = vmatpush1.msra.mxu0 0.0
  %973 = vmatprep.subr.mxu0 0.0
  %974 = vmatpush1.msra.mxu0 0.0
  %975 = vmatprep.subr.mxu0 0.0
  %976 = vmatpush1.msra.mxu0 0.0
  %977 = vmatprep.subr.mxu0 0.0
  %978 = vmatpush1.msra.mxu0 0.0
  %979 = vmatprep.subr.mxu0 0.0
  %980 = vmatpush1.msra.mxu0 0.0
  %981 = vmatprep.subr.mxu0 0.0
  %982 = vmatpush1.msra.mxu0 0.0
  %983 = vmatprep.subr.mxu0 0.0
  %984 = vmatpush1.msra.mxu0 0.0
  %985 = vmatprep.subr.mxu0 0.0
  %986 = vmatpush1.msra.mxu0 0.0
  %987 = vmatprep.mubr.f32.mxu0 0.0
  %988 = vmatmul.mubr.f32.gmra.mrb[0].mxu0 %v921
  %v989 = vpop.f32.mrb[0].mxu0
  %v990 = vadd.f32 %v915, %v989
  %v991 = vpop.f32.mrb[0].mxu0
  %992 = vdwg.mxu0
  %v993 = vadd.f32 %v990, %v43
  %v994 = vxor.u32 %v993, 2147483648
  %v995 = vmul.f32 %v994, 1.442695
  %v996 = vpow.pop %v995
  %v997 = vadd.f32 %v996, 1.0
  %v998 = vrcp.pop %v997
  %v999 = vmul.f32 1.0, %v998
  %v1000 = vtanh.pop %v993
  %v1001 = vmul.f32 %v999, %v564
  %1003 = vrot.lane.b32.xlu0 %v1000, 64
  %v1004 = vpop.permute.xlu0 %1003
  %v1006 = vmul.f32 %v999, %v1004
  %1008 = vrot.lane.b32.xlu0 %v1006, 32
  %v1009 = vpop.permute.xlu0 %1008
  %v1011 = vadd.f32 %v1001, %v1009
  %v1012 = vtanh.pop %v1011
  %1014 = vrot.lane.b32.xlu0 %v1012, 64
  %v1015 = vpop.permute.xlu0 %1014
  %v1017 = vmul.f32 %v999, %v1015
  %1018 = vmatprep.subr.mxu0 0.0
  %1019 = vmatpush1.msra.mxu0 %v13
  %1020 = vmatprep.subr.mxu0 0.0
  %1021 = vmatpush1.msra.mxu0 %v14
  %1022 = vmatprep.subr.mxu0 0.0
  %1023 = vmatpush1.msra.mxu0 %v15
  %1024 = vmatprep.subr.mxu0 0.0
  %1025 = vmatpush1.msra.mxu0 %v16
  %1026 = vmatprep.subr.mxu0 0.0
  %1027 = vmatpush1.msra.mxu0 0.0
  %1028 = vmatprep.subr.mxu0 0.0
  %1029 = vmatpush1.msra.mxu0 0.0
  %1030 = vmatprep.subr.mxu0 0.0
  %1031 = vmatpush1.msra.mxu0 0.0
  %1032 = vmatprep.subr.mxu0 0.0
  %1033 = vmatpush1.msra.mxu0 0.0
  %1034 = vmatprep.subr.mxu0 0.0
  %1035 = vmatpush1.msra.mxu0 0.0
  %1036 = vmatprep.subr.mxu0 0.0
  %1037 = vmatpush1.msra.mxu0 0.0
  %1038 = vmatprep.subr.mxu0 0.0
  %1039 = vmatpush1.msra.mxu0 0.0
  %1040 = vmatprep.subr.mxu0 0.0
  %1041 = vmatpush1.msra.mxu0 0.0
  %1042 = vmatprep.subr.mxu0 0.0
  %1043 = vmatpush1.msra.mxu0 0.0
  %1044 = vmatprep.subr.mxu0 0.0
  %1045 = vmatpush1.msra.mxu0 0.0
  %1046 = vmatprep.subr.mxu0 0.0
  %1047 = vmatpush1.msra.mxu0 0.0
  %1048 = vmatprep.subr.mxu0 0.0
  %1049 = vmatpush1.msra.mxu0 0.0
  %1050 = vmatprep.subr.mxu0 0.0
  %1051 = vmatpush1.msra.mxu0 0.0
  %1052 = vmatprep.subr.mxu0 0.0
  %1053 = vmatpush1.msra.mxu0 0.0
  %1054 = vmatprep.subr.mxu0 0.0
  %1055 = vmatpush1.msra.mxu0 0.0
  %1056 = vmatprep.subr.mxu0 0.0
  %1057 = vmatpush1.msra.mxu0 0.0
  %1058 = vmatprep.subr.mxu0 0.0
  %1059 = vmatpush1.msra.mxu0 0.0
  %1060 = vmatprep.subr.mxu0 0.0
  %1061 = vmatpush1.msra.mxu0 0.0
  %1062 = vmatprep.subr.mxu0 0.0
  %1063 = vmatpush1.msra.mxu0 0.0
  %1064 = vmatprep.subr.mxu0 0.0
  %1065 = vmatpush1.msra.mxu0 0.0
  %1066 = vmatprep.subr.mxu0 0.0
  %1067 = vmatpush1.msra.mxu0 0.0
  %1068 = vmatprep.subr.mxu0 0.0
  %1069 = vmatpush1.msra.mxu0 0.0
  %1070 = vmatprep.subr.mxu0 0.0
  %1071 = vmatpush1.msra.mxu0 0.0
  %1072 = vmatprep.subr.mxu0 0.0
  %1073 = vmatpush1.msra.mxu0 0.0
  %1074 = vmatprep.subr.mxu0 0.0
  %1075 = vmatpush1.msra.mxu0 0.0
  %1076 = vmatprep.subr.mxu0 0.0
  %1077 = vmatpush1.msra.mxu0 0.0
  %1078 = vmatprep.subr.mxu0 0.0
  %1079 = vmatpush1.msra.mxu0 0.0
  %1080 = vmatprep.subr.mxu0 0.0
  %1081 = vmatpush1.msra.mxu0 0.0
  %1082 = vmatprep.mubr.f32.mxu0 0.0
  %1083 = vmatmul.mubr.f32.gmra.mrb[0].mxu0 %v746
  %v1084 = vpop.f32.mrb[0].mxu0
  %v1085 = vadd.f32 0.0, %v1084
  %v1086 = vpop.f32.mrb[0].mxu0
  %1087 = vdwg.mxu0
  %v1089 = vrot.slane %v1085, 4
  %v1091 = vadd.f32 %v124, %v1089
  %v1092 = vxor.u32 %v1091, 2147483648
  %v1093 = vmul.f32 %v1092, 1.442695
  %v1094 = vpow.pop %v1093
  %v1095 = vadd.f32 %v1094, 1.0
  %v1096 = vrcp.pop %v1095
  %v1097 = vmul.f32 1.0, %v1096
  %v1098 = vtanh.pop %v1091
  %v1100 = vrot.slane %v665, 6
  %v1102 = vmul.f32 %v1097, %v1100
  %1104 = vrot.lane.b32.xlu0 %v1098, 64
  %v1105 = vpop.permute.xlu0 %1104
  %v1107 = vmul.f32 %v1097, %v1105
  %1109 = vrot.lane.b32.xlu0 %v1107, 32
  %v1110 = vpop.permute.xlu0 %1109
  %v1112 = vadd.f32 %v1102, %v1110
  %v1113 = vtanh.pop %v1112
  %1115 = vrot.lane.b32.xlu0 %v1113, 64
  %v1116 = vpop.permute.xlu0 %1115
  %v1118 = vmul.f32 %v1097, %v1116
  %1119 = vmatprep.subr.mxu0 0.0
  %1120 = vmatpush1.msra.mxu0 %v22
  %1121 = vmatprep.subr.mxu0 0.0
  %1122 = vmatpush1.msra.mxu0 %v23
  %1123 = vmatprep.subr.mxu0 0.0
  %1124 = vmatpush1.msra.mxu0 %v24
  %1125 = vmatprep.subr.mxu0 0.0
  %1126 = vmatpush1.msra.mxu0 %v25
  %1127 = vmatprep.subr.mxu0 0.0
  %1128 = vmatpush1.msra.mxu0 0.0
  %1129 = vmatprep.subr.mxu0 0.0
  %1130 = vmatpush1.msra.mxu0 0.0
  %1131 = vmatprep.subr.mxu0 0.0
  %1132 = vmatpush1.msra.mxu0 0.0
  %1133 = vmatprep.subr.mxu0 0.0
  %1134 = vmatpush1.msra.mxu0 0.0
  %1135 = vmatprep.subr.mxu0 0.0
  %1136 = vmatpush1.msra.mxu0 0.0
  %1137 = vmatprep.subr.mxu0 0.0
  %1138 = vmatpush1.msra.mxu0 0.0
  %1139 = vmatprep.subr.mxu0 0.0
  %1140 = vmatpush1.msra.mxu0 0.0
  %1141 = vmatprep.subr.mxu0 0.0
  %1142 = vmatpush1.msra.mxu0 0.0
  %1143 = vmatprep.subr.mxu0 0.0
  %1144 = vmatpush1.msra.mxu0 0.0
  %1145 = vmatprep.subr.mxu0 0.0
  %1146 = vmatpush1.msra.mxu0 0.0
  %1147 = vmatprep.subr.mxu0 0.0
  %1148 = vmatpush1.msra.mxu0 0.0
  %1149 = vmatprep.subr.mxu0 0.0
  %1150 = vmatpush1.msra.mxu0 0.0
  %1151 = vmatprep.subr.mxu0 0.0
  %1152 = vmatpush1.msra.mxu0 0.0
  %1153 = vmatprep.subr.mxu0 0.0
  %1154 = vmatpush1.msra.mxu0 0.0
  %1155 = vmatprep.subr.mxu0 0.0
  %1156 = vmatpush1.msra.mxu0 0.0
  %1157 = vmatprep.subr.mxu0 0.0
  %1158 = vmatpush1.msra.mxu0 0.0
  %1159 = vmatprep.subr.mxu0 0.0
  %1160 = vmatpush1.msra.mxu0 0.0
  %1161 = vmatprep.subr.mxu0 0.0
  %1162 = vmatpush1.msra.mxu0 0.0
  %1163 = vmatprep.subr.mxu0 0.0
  %1164 = vmatpush1.msra.mxu0 0.0
  %1165 = vmatprep.subr.mxu0 0.0
  %1166 = vmatpush1.msra.mxu0 0.0
  %1167 = vmatprep.subr.mxu0 0.0
  %1168 = vmatpush1.msra.mxu0 0.0
  %1169 = vmatprep.subr.mxu0 0.0
  %1170 = vmatpush1.msra.mxu0 0.0
  %1171 = vmatprep.subr.mxu0 0.0
  %1172 = vmatpush1.msra.mxu0 0.0
  %1173 = vmatprep.subr.mxu0 0.0
  %1174 = vmatpush1.msra.mxu0 0.0
  %1175 = vmatprep.subr.mxu0 0.0
  %1176 = vmatpush1.msra.mxu0 0.0
  %1177 = vmatprep.subr.mxu0 0.0
  %1178 = vmatpush1.msra.mxu0 0.0
  %1179 = vmatprep.subr.mxu0 0.0
  %1180 = vmatpush1.msra.mxu0 0.0
  %1181 = vmatprep.subr.mxu0 0.0
  %1182 = vmatpush1.msra.mxu0 0.0
  %1183 = vmatprep.mubr.f32.mxu0 0.0
  %1184 = vmatmul.mubr.f32.gmra.mrb[0].mxu0 %v921
  %v1185 = vpop.f32.mrb[0].mxu0
  %v1186 = vadd.f32 0.0, %v1185
  %v1187 = vpop.f32.mrb[0].mxu0
  %1188 = vdwg.mxu0
  %v1190 = vrot.slane %v1118, 4
  %1191 = vrot.lane.b32.xlu0 %v1190, 32
  %v1192 = vpop.permute.xlu0 %1191
  %v1193 = vsel %vm132, %v1192, 0
  %1195 = vmatprep.subr.mxu0 0.0
  %1196 = vmatpush1.msra.mxu0 %v18
  %1197 = vmatprep.subr.mxu0 0.0
  %1198 = vmatpush1.msra.mxu0 %v19
  %1199 = vmatprep.subr.mxu0 0.0
  %1200 = vmatpush1.msra.mxu0 %v20
  %1201 = vmatprep.subr.mxu0 0.0
  %1202 = vmatpush1.msra.mxu0 %v21
  %1203 = vmatprep.subr.mxu0 0.0
  %1204 = vmatpush1.msra.mxu0 0.0
  %1205 = vmatprep.subr.mxu0 0.0
  %1206 = vmatpush1.msra.mxu0 0.0
  %1207 = vmatprep.subr.mxu0 0.0
  %1208 = vmatpush1.msra.mxu0 0.0
  %1209 = vmatprep.subr.mxu0 0.0
  %1210 = vmatpush1.msra.mxu0 0.0
  %1211 = vmatprep.subr.mxu0 0.0
  %1212 = vmatpush1.msra.mxu0 0.0
  %1213 = vmatprep.subr.mxu0 0.0
  %1214 = vmatpush1.msra.mxu0 0.0
  %1215 = vmatprep.subr.mxu0 0.0
  %1216 = vmatpush1.msra.mxu0 0.0
  %1217 = vmatprep.subr.mxu0 0.0
  %1218 = vmatpush1.msra.mxu0 0.0
  %1219 = vmatprep.subr.mxu0 0.0
  %1220 = vmatpush1.msra.mxu0 0.0
  %1221 = vmatprep.subr.mxu0 0.0
  %1222 = vmatpush1.msra.mxu0 0.0
  %1223 = vmatprep.subr.mxu0 0.0
  %1224 = vmatpush1.msra.mxu0 0.0
  %1225 = vmatprep.subr.mxu0 0.0
  %1226 = vmatpush1.msra.mxu0 0.0
  %1227 = vmatprep.subr.mxu0 0.0
  %1228 = vmatpush1.msra.mxu0 0.0
  %1229 = vmatprep.subr.mxu0 0.0
  %1230 = vmatpush1.msra.mxu0 0.0
  %1231 = vmatprep.subr.mxu0 0.0
  %1232 = vmatpush1.msra.mxu0 0.0
  %1233 = vmatprep.subr.mxu0 0.0
  %1234 = vmatpush1.msra.mxu0 0.0
  %1235 = vmatprep.subr.mxu0 0.0
  %1236 = vmatpush1.msra.mxu0 0.0
  %1237 = vmatprep.subr.mxu0 0.0
  %1238 = vmatpush1.msra.mxu0 0.0
  %1239 = vmatprep.subr.mxu0 0.0
  %1240 = vmatpush1.msra.mxu0 0.0
  %1241 = vmatprep.subr.mxu0 0.0
  %1242 = vmatpush1.msra.mxu0 0.0
  %1243 = vmatprep.subr.mxu0 0.0
  %1244 = vmatpush1.msra.mxu0 0.0
  %1245 = vmatprep.subr.mxu0 0.0
  %1246 = vmatpush1.msra.mxu0 0.0
  %1247 = vmatprep.subr.mxu0 0.0
  %1248 = vmatpush1.msra.mxu0 0.0
  %1249 = vmatprep.subr.mxu0 0.0
  %1250 = vmatpush1.msra.mxu0 0.0
  %1251 = vmatprep.subr.mxu0 0.0
  %1252 = vmatpush1.msra.mxu0 0.0
  %1253 = vmatprep.subr.mxu0 0.0
  %1254 = vmatpush1.msra.mxu0 0.0
  %1255 = vmatprep.subr.mxu0 0.0
  %1256 = vmatpush1.msra.mxu0 0.0
  %1257 = vmatprep.subr.mxu0 0.0
  %1258 = vmatpush1.msra.mxu0 0.0
  %1259 = vmatprep.mubr.f32.mxu0 0.0
  %1260 = vmatmul.mubr.f32.gmra.mrb[0].mxu0 %v1193
  %v1261 = vpop.f32.mrb[0].mxu0
  %v1262 = vadd.f32 %v1186, %v1261
  %v1263 = vpop.f32.mrb[0].mxu0
  %1264 = vdwg.mxu0
  %v1265 = vadd.f32 %v1262, %v38
  %v1266 = vxor.u32 %v1265, 2147483648
  %v1267 = vmul.f32 %v1266, 1.442695
  %v1268 = vpow.pop %v1267
  %v1269 = vadd.f32 %v1268, 1.0
  %v1270 = vrcp.pop %v1269
  %v1271 = vmul.f32 1.0, %v1270
  %v1272 = vtanh.pop %v1265
  %v1273 = vmul.f32 %v1271, %v836
  %1275 = vrot.lane.b32.xlu0 %v1272, 64
  %v1276 = vpop.permute.xlu0 %1275
  %v1278 = vmul.f32 %v1271, %v1276
  %1280 = vrot.lane.b32.xlu0 %v1278, 32
  %v1281 = vpop.permute.xlu0 %1280
  %v1283 = vadd.f32 %v1273, %v1281
  %v1284 = vtanh.pop %v1283
  %1286 = vrot.lane.b32.xlu0 %v1284, 64
  %v1287 = vpop.permute.xlu0 %1286
  %v1289 = vmul.f32 %v1271, %v1287
  %1291 = vrot.lane.b32.xlu0 %v1017, 32
  %v1292 = vpop.permute.xlu0 %1291
  %v1293 = vsel %vm132, %v1292, 0
  %1295 = vmatprep.subr.mxu0 0.0
  %1296 = vmatpush1.msra.mxu0 %v30
  %1297 = vmatprep.subr.mxu0 0.0
  %1298 = vmatpush1.msra.mxu0 %v31
  %1299 = vmatprep.subr.mxu0 0.0
  %1300 = vmatpush1.msra.mxu0 %v32
  %1301 = vmatprep.subr.mxu0 0.0
  %1302 = vmatpush1.msra.mxu0 %v33
  %1303 = vmatprep.subr.mxu0 0.0
  %1304 = vmatpush1.msra.mxu0 0.0
  %1305 = vmatprep.subr.mxu0 0.0
  %1306 = vmatpush1.msra.mxu0 0.0
  %1307 = vmatprep.subr.mxu0 0.0
  %1308 = vmatpush1.msra.mxu0 0.0
  %1309 = vmatprep.subr.mxu0 0.0
  %1310 = vmatpush1.msra.mxu0 0.0
  %1311 = vmatprep.subr.mxu0 0.0
  %1312 = vmatpush1.msra.mxu0 0.0
  %1313 = vmatprep.subr.mxu0 0.0
  %1314 = vmatpush1.msra.mxu0 0.0
  %1315 = vmatprep.subr.mxu0 0.0
  %1316 = vmatpush1.msra.mxu0 0.0
  %1317 = vmatprep.subr.mxu0 0.0
  %1318 = vmatpush1.msra.mxu0 0.0
  %1319 = vmatprep.subr.mxu0 0.0
  %1320 = vmatpush1.msra.mxu0 0.0
  %1321 = vmatprep.subr.mxu0 0.0
  %1322 = vmatpush1.msra.mxu0 0.0
  %1323 = vmatprep.subr.mxu0 0.0
  %1324 = vmatpush1.msra.mxu0 0.0
  %1325 = vmatprep.subr.mxu0 0.0
  %1326 = vmatpush1.msra.mxu0 0.0
  %1327 = vmatprep.subr.mxu0 0.0
  %1328 = vmatpush1.msra.mxu0 0.0
  %1329 = vmatprep.subr.mxu0 0.0
  %1330 = vmatpush1.msra.mxu0 0.0
  %1331 = vmatprep.subr.mxu0 0.0
  %1332 = vmatpush1.msra.mxu0 0.0
  %1333 = vmatprep.subr.mxu0 0.0
  %1334 = vmatpush1.msra.mxu0 0.0
  %1335 = vmatprep.subr.mxu0 0.0
  %1336 = vmatpush1.msra.mxu0 0.0
  %1337 = vmatprep.subr.mxu0 0.0
  %1338 = vmatpush1.msra.mxu0 0.0
  %1339 = vmatprep.subr.mxu0 0.0
  %1340 = vmatpush1.msra.mxu0 0.0
  %1341 = vmatprep.subr.mxu0 0.0
  %1342 = vmatpush1.msra.mxu0 0.0
  %1343 = vmatprep.subr.mxu0 0.0
  %1344 = vmatpush1.msra.mxu0 0.0
  %1345 = vmatprep.subr.mxu0 0.0
  %1346 = vmatpush1.msra.mxu0 0.0
  %1347 = vmatprep.subr.mxu0 0.0
  %1348 = vmatpush1.msra.mxu0 0.0
  %1349 = vmatprep.subr.mxu0 0.0
  %1350 = vmatpush1.msra.mxu0 0.0
  %1351 = vmatprep.subr.mxu0 0.0
  %1352 = vmatpush1.msra.mxu0 0.0
  %1353 = vmatprep.subr.mxu0 0.0
  %1354 = vmatpush1.msra.mxu0 0.0
  %1355 = vmatprep.subr.mxu0 0.0
  %1356 = vmatpush1.msra.mxu0 0.0
  %1357 = vmatprep.subr.mxu0 0.0
  %1358 = vmatpush1.msra.mxu0 0.0
  %1359 = vmatprep.mubr.f32.mxu0 0.0
  %1360 = vmatmul.mubr.f32.gmra.mrb[0].mxu0 %v1293
  %v1361 = vpop.f32.mrb[0].mxu0
  %v1362 = vadd.f32 0.0, %v1361
  %v1363 = vpop.f32.mrb[0].mxu0
  %1364 = vdwg.mxu0
  %1366 = vrot.lane.b32.xlu0 %v1289, 32
  %v1367 = vpop.permute.xlu0 %1366
  %v1368 = vsel %vm132, %v1367, 0
  %1370 = vmatprep.subr.mxu0 0.0
  %1371 = vmatpush1.msra.mxu0 %v26
  %1372 = vmatprep.subr.mxu0 0.0
  %1373 = vmatpush1.msra.mxu0 %v27
  %1374 = vmatprep.subr.mxu0 0.0
  %1375 = vmatpush1.msra.mxu0 %v28
  %1376 = vmatprep.subr.mxu0 0.0
  %1377 = vmatpush1.msra.mxu0 %v29
  %1378 = vmatprep.subr.mxu0 0.0
  %1379 = vmatpush1.msra.mxu0 0.0
  %1380 = vmatprep.subr.mxu0 0.0
  %1381 = vmatpush1.msra.mxu0 0.0
  %1382 = vmatprep.subr.mxu0 0.0
  %1383 = vmatpush1.msra.mxu0 0.0
  %1384 = vmatprep.subr.mxu0 0.0
  %1385 = vmatpush1.msra.mxu0 0.0
  %1386 = vmatprep.subr.mxu0 0.0
  %1387 = vmatpush1.msra.mxu0 0.0
  %1388 = vmatprep.subr.mxu0 0.0
  %1389 = vmatpush1.msra.mxu0 0.0
  %1390 = vmatprep.subr.mxu0 0.0
  %1391 = vmatpush1.msra.mxu0 0.0
  %1392 = vmatprep.subr.mxu0 0.0
  %1393 = vmatpush1.msra.mxu0 0.0
  %1394 = vmatprep.subr.mxu0 0.0
  %1395 = vmatpush1.msra.mxu0 0.0
  %1396 = vmatprep.subr.mxu0 0.0
  %1397 = vmatpush1.msra.mxu0 0.0
  %1398 = vmatprep.subr.mxu0 0.0
  %1399 = vmatpush1.msra.mxu0 0.0
  %1400 = vmatprep.subr.mxu0 0.0
  %1401 = vmatpush1.msra.mxu0 0.0
  %1402 = vmatprep.subr.mxu0 0.0
  %1403 = vmatpush1.msra.mxu0 0.0
  %1404 = vmatprep.subr.mxu0 0.0
  %1405 = vmatpush1.msra.mxu0 0.0
  %1406 = vmatprep.subr.mxu0 0.0
  %1407 = vmatpush1.msra.mxu0 0.0
  %1408 = vmatprep.subr.mxu0 0.0
  %1409 = vmatpush1.msra.mxu0 0.0
  %1410 = vmatprep.subr.mxu0 0.0
  %1411 = vmatpush1.msra.mxu0 0.0
  %1412 = vmatprep.subr.mxu0 0.0
  %1413 = vmatpush1.msra.mxu0 0.0
  %1414 = vmatprep.subr.mxu0 0.0
  %1415 = vmatpush1.msra.mxu0 0.0
  %1416 = vmatprep.subr.mxu0 0.0
  %1417 = vmatpush1.msra.mxu0 0.0
  %1418 = vmatprep.subr.mxu0 0.0
  %1419 = vmatpush1.msra.mxu0 0.0
  %1420 = vmatprep.subr.mxu0 0.0
  %1421 = vmatpush1.msra.mxu0 0.0
  %1422 = vmatprep.subr.mxu0 0.0
  %1423 = vmatpush1.msra.mxu0 0.0
  %1424 = vmatprep.subr.mxu0 0.0
  %1425 = vmatpush1.msra.mxu0 0.0
  %1426 = vmatprep.subr.mxu0 0.0
  %1427 = vmatpush1.msra.mxu0 0.0
  %1428 = vmatprep.subr.mxu0 0.0
  %1429 = vmatpush1.msra.mxu0 0.0
  %1430 = vmatprep.subr.mxu0 0.0
  %1431 = vmatpush1.msra.mxu0 0.0
  %1432 = vmatprep.subr.mxu0 0.0
  %1433 = vmatpush1.msra.mxu0 0.0
  %1434 = vmatprep.mubr.f32.mxu0 0.0
  %1435 = vmatmul.mubr.f32.gmra.mrb[0].mxu0 %v1368
  %v1436 = vpop.f32.mrb[0].mxu0
  %v1437 = vadd.f32 %v1362, %v1436
  %v1438 = vpop.f32.mrb[0].mxu0
  %1439 = vdwg.mxu0
  %v1440 = vadd.f32 %v1437, %v43
  %v1441 = vxor.u32 %v1440, 2147483648
  %v1442 = vmul.f32 %v1441, 1.442695
  %v1443 = vpow.pop %v1442
  %v1444 = vadd.f32 %v1443, 1.0
  %v1445 = vrcp.pop %v1444
  %v1446 = vmul.f32 1.0, %v1445
  %v1447 = vtanh.pop %v1440
  %v1448 = vmul.f32 %v1446, %v1011
  %1450 = vrot.lane.b32.xlu0 %v1447, 64
  %v1451 = vpop.permute.xlu0 %1450
  %v1453 = vmul.f32 %v1446, %v1451
  %1455 = vrot.lane.b32.xlu0 %v1453, 32
  %v1456 = vpop.permute.xlu0 %1455
  %v1458 = vadd.f32 %v1448, %v1456
  %v1459 = vtanh.pop %v1458
  %1461 = vrot.lane.b32.xlu0 %v1459, 64
  %v1462 = vpop.permute.xlu0 %1461
  %v1464 = vmul.f32 %v1446, %v1462
  %1465 = vmatprep.subr.mxu0 0.0
  %1466 = vmatpush1.msra.mxu0 %v13
  %1467 = vmatprep.subr.mxu0 0.0
  %1468 = vmatpush1.msra.mxu0 %v14
  %1469 = vmatprep.subr.mxu0 0.0
  %1470 = vmatpush1.msra.mxu0 %v15
  %1471 = vmatprep.subr.mxu0 0.0
  %1472 = vmatpush1.msra.mxu0 %v16
  %1473 = vmatprep.subr.mxu0 0.0
  %1474 = vmatpush1.msra.mxu0 0.0
  %1475 = vmatprep.subr.mxu0 0.0
  %1476 = vmatpush1.msra.mxu0 0.0
  %1477 = vmatprep.subr.mxu0 0.0
  %1478 = vmatpush1.msra.mxu0 0.0
  %1479 = vmatprep.subr.mxu0 0.0
  %1480 = vmatpush1.msra.mxu0 0.0
  %1481 = vmatprep.subr.mxu0 0.0
  %1482 = vmatpush1.msra.mxu0 0.0
  %1483 = vmatprep.subr.mxu0 0.0
  %1484 = vmatpush1.msra.mxu0 0.0
  %1485 = vmatprep.subr.mxu0 0.0
  %1486 = vmatpush1.msra.mxu0 0.0
  %1487 = vmatprep.subr.mxu0 0.0
  %1488 = vmatpush1.msra.mxu0 0.0
  %1489 = vmatprep.subr.mxu0 0.0
  %1490 = vmatpush1.msra.mxu0 0.0
  %1491 = vmatprep.subr.mxu0 0.0
  %1492 = vmatpush1.msra.mxu0 0.0
  %1493 = vmatprep.subr.mxu0 0.0
  %1494 = vmatpush1.msra.mxu0 0.0
  %1495 = vmatprep.subr.mxu0 0.0
  %1496 = vmatpush1.msra.mxu0 0.0
  %1497 = vmatprep.subr.mxu0 0.0
  %1498 = vmatpush1.msra.mxu0 0.0
  %1499 = vmatprep.subr.mxu0 0.0
  %1500 = vmatpush1.msra.mxu0 0.0
  %1501 = vmatprep.subr.mxu0 0.0
  %1502 = vmatpush1.msra.mxu0 0.0
  %1503 = vmatprep.subr.mxu0 0.0
  %1504 = vmatpush1.msra.mxu0 0.0
  %1505 = vmatprep.subr.mxu0 0.0
  %1506 = vmatpush1.msra.mxu0 0.0
  %1507 = vmatprep.subr.mxu0 0.0
  %1508 = vmatpush1.msra.mxu0 0.0
  %1509 = vmatprep.subr.mxu0 0.0
  %1510 = vmatpush1.msra.mxu0 0.0
  %1511 = vmatprep.subr.mxu0 0.0
  %1512 = vmatpush1.msra.mxu0 0.0
  %1513 = vmatprep.subr.mxu0 0.0
  %1514 = vmatpush1.msra.mxu0 0.0
  %1515 = vmatprep.subr.mxu0 0.0
  %1516 = vmatpush1.msra.mxu0 0.0
  %1517 = vmatprep.subr.mxu0 0.0
  %1518 = vmatpush1.msra.mxu0 0.0
  %1519 = vmatprep.subr.mxu0 0.0
  %1520 = vmatpush1.msra.mxu0 0.0
  %1521 = vmatprep.subr.mxu0 0.0
  %1522 = vmatpush1.msra.mxu0 0.0
  %1523 = vmatprep.subr.mxu0 0.0
  %1524 = vmatpush1.msra.mxu0 0.0
  %1525 = vmatprep.subr.mxu0 0.0
  %1526 = vmatpush1.msra.mxu0 0.0
  %1527 = vmatprep.subr.mxu0 0.0
  %1528 = vmatpush1.msra.mxu0 0.0
  %1529 = vmatprep.mubr.f32.mxu0 0.0
  %1530 = vmatmul.mubr.f32.gmra.mrb[0].mxu0 %v1193
  %v1531 = vpop.f32.mrb[0].mxu0
  %v1532 = vadd.f32 0.0, %v1531
  %v1533 = vpop.f32.mrb[0].mxu0
  %1534 = vdwg.mxu0
  %v1536 = vrot.slane %v1532, 2
  %v1538 = vadd.f32 %v124, %v1536
  %v1539 = vxor.u32 %v1538, 2147483648
  %v1540 = vmul.f32 %v1539, 1.442695
  %v1541 = vpow.pop %v1540
  %v1542 = vadd.f32 %v1541, 1.0
  %v1543 = vrcp.pop %v1542
  %v1544 = vmul.f32 1.0, %v1543
  %v1545 = vtanh.pop %v1538
  %v1547 = vrot.slane %v1112, 6
  %v1549 = vmul.f32 %v1544, %v1547
  %1551 = vrot.lane.b32.xlu0 %v1545, 64
  %v1552 = vpop.permute.xlu0 %1551
  %v1554 = vmul.f32 %v1544, %v1552
  %1556 = vrot.lane.b32.xlu0 %v1554, 32
  %v1557 = vpop.permute.xlu0 %1556
  %v1559 = vadd.f32 %v1549, %v1557
  %v1560 = vtanh.pop %v1559
  %1562 = vrot.lane.b32.xlu0 %v1560, 64
  %v1563 = vpop.permute.xlu0 %1562
  %v1565 = vmul.f32 %v1544, %v1563
  %1566 = vmatprep.subr.mxu0 0.0
  %1567 = vmatpush1.msra.mxu0 %v22
  %1568 = vmatprep.subr.mxu0 0.0
  %1569 = vmatpush1.msra.mxu0 %v23
  %1570 = vmatprep.subr.mxu0 0.0
  %1571 = vmatpush1.msra.mxu0 %v24
  %1572 = vmatprep.subr.mxu0 0.0
  %1573 = vmatpush1.msra.mxu0 %v25
  %1574 = vmatprep.subr.mxu0 0.0
  %1575 = vmatpush1.msra.mxu0 0.0
  %1576 = vmatprep.subr.mxu0 0.0
  %1577 = vmatpush1.msra.mxu0 0.0
  %1578 = vmatprep.subr.mxu0 0.0
  %1579 = vmatpush1.msra.mxu0 0.0
  %1580 = vmatprep.subr.mxu0 0.0
  %1581 = vmatpush1.msra.mxu0 0.0
  %1582 = vmatprep.subr.mxu0 0.0
  %1583 = vmatpush1.msra.mxu0 0.0
  %1584 = vmatprep.subr.mxu0 0.0
  %1585 = vmatpush1.msra.mxu0 0.0
  %1586 = vmatprep.subr.mxu0 0.0
  %1587 = vmatpush1.msra.mxu0 0.0
  %1588 = vmatprep.subr.mxu0 0.0
  %1589 = vmatpush1.msra.mxu0 0.0
  %1590 = vmatprep.subr.mxu0 0.0
  %1591 = vmatpush1.msra.mxu0 0.0
  %1592 = vmatprep.subr.mxu0 0.0
  %1593 = vmatpush1.msra.mxu0 0.0
  %1594 = vmatprep.subr.mxu0 0.0
  %1595 = vmatpush1.msra.mxu0 0.0
  %1596 = vmatprep.subr.mxu0 0.0
  %1597 = vmatpush1.msra.mxu0 0.0
  %1598 = vmatprep.subr.mxu0 0.0
  %1599 = vmatpush1.msra.mxu0 0.0
  %1600 = vmatprep.subr.mxu0 0.0
  %1601 = vmatpush1.msra.mxu0 0.0
  %1602 = vmatprep.subr.mxu0 0.0
  %1603 = vmatpush1.msra.mxu0 0.0
  %1604 = vmatprep.subr.mxu0 0.0
  %1605 = vmatpush1.msra.mxu0 0.0
  %1606 = vmatprep.subr.mxu0 0.0
  %1607 = vmatpush1.msra.mxu0 0.0
  %1608 = vmatprep.subr.mxu0 0.0
  %1609 = vmatpush1.msra.mxu0 0.0
  %1610 = vmatprep.subr.mxu0 0.0
  %1611 = vmatpush1.msra.mxu0 0.0
  %1612 = vmatprep.subr.mxu0 0.0
  %1613 = vmatpush1.msra.mxu0 0.0
  %1614 = vmatprep.subr.mxu0 0.0
  %1615 = vmatpush1.msra.mxu0 0.0
  %1616 = vmatprep.subr.mxu0 0.0
  %1617 = vmatpush1.msra.mxu0 0.0
  %1618 = vmatprep.subr.mxu0 0.0
  %1619 = vmatpush1.msra.mxu0 0.0
  %1620 = vmatprep.subr.mxu0 0.0
  %1621 = vmatpush1.msra.mxu0 0.0
  %1622 = vmatprep.subr.mxu0 0.0
  %1623 = vmatpush1.msra.mxu0 0.0
  %1624 = vmatprep.subr.mxu0 0.0
  %1625 = vmatpush1.msra.mxu0 0.0
  %1626 = vmatprep.subr.mxu0 0.0
  %1627 = vmatpush1.msra.mxu0 0.0
  %1628 = vmatprep.subr.mxu0 0.0
  %1629 = vmatpush1.msra.mxu0 0.0
  %1630 = vmatprep.mubr.f32.mxu0 0.0
  %1631 = vmatmul.mubr.f32.gmra.mrb[0].mxu0 %v1368
  %v1632 = vpop.f32.mrb[0].mxu0
  %v1633 = vadd.f32 0.0, %v1632
  %v1634 = vpop.f32.mrb[0].mxu0
  %1635 = vdwg.mxu0
  %v1637 = vrot.slane %v1565, 6
  %1638 = vrot.lane.b32.xlu0 %v1637, 32
  %v1639 = vpop.permute.xlu0 %1638
  %v1640 = vsel %vm132, %v1639, 0
  %1642 = vmatprep.subr.mxu0 0.0
  %1643 = vmatpush1.msra.mxu0 %v18
  %1644 = vmatprep.subr.mxu0 0.0
  %1645 = vmatpush1.msra.mxu0 %v19
  %1646 = vmatprep.subr.mxu0 0.0
  %1647 = vmatpush1.msra.mxu0 %v20
  %1648 = vmatprep.subr.mxu0 0.0
  %1649 = vmatpush1.msra.mxu0 %v21
  %1650 = vmatprep.subr.mxu0 0.0
  %1651 = vmatpush1.msra.mxu0 0.0
  %1652 = vmatprep.subr.mxu0 0.0
  %1653 = vmatpush1.msra.mxu0 0.0
  %1654 = vmatprep.subr.mxu0 0.0
  %1655 = vmatpush1.msra.mxu0 0.0
  %1656 = vmatprep.subr.mxu0 0.0
  %1657 = vmatpush1.msra.mxu0 0.0
  %1658 = vmatprep.subr.mxu0 0.0
  %1659 = vmatpush1.msra.mxu0 0.0
  %1660 = vmatprep.subr.mxu0 0.0
  %1661 = vmatpush1.msra.mxu0 0.0
  %1662 = vmatprep.subr.mxu0 0.0
  %1663 = vmatpush1.msra.mxu0 0.0
  %1664 = vmatprep.subr.mxu0 0.0
  %1665 = vmatpush1.msra.mxu0 0.0
  %1666 = vmatprep.subr.mxu0 0.0
  %1667 = vmatpush1.msra.mxu0 0.0
  %1668 = vmatprep.subr.mxu0 0.0
  %1669 = vmatpush1.msra.mxu0 0.0
  %1670 = vmatprep.subr.mxu0 0.0
  %1671 = vmatpush1.msra.mxu0 0.0
  %1672 = vmatprep.subr.mxu0 0.0
  %1673 = vmatpush1.msra.mxu0 0.0
  %1674 = vmatprep.subr.mxu0 0.0
  %1675 = vmatpush1.msra.mxu0 0.0
  %1676 = vmatprep.subr.mxu0 0.0
  %1677 = vmatpush1.msra.mxu0 0.0
  %1678 = vmatprep.subr.mxu0 0.0
  %1679 = vmatpush1.msra.mxu0 0.0
  %1680 = vmatprep.subr.mxu0 0.0
  %1681 = vmatpush1.msra.mxu0 0.0
  %1682 = vmatprep.subr.mxu0 0.0
  %1683 = vmatpush1.msra.mxu0 0.0
  %1684 = vmatprep.subr.mxu0 0.0
  %1685 = vmatpush1.msra.mxu0 0.0
  %1686 = vmatprep.subr.mxu0 0.0
  %1687 = vmatpush1.msra.mxu0 0.0
  %1688 = vmatprep.subr.mxu0 0.0
  %1689 = vmatpush1.msra.mxu0 0.0
  %1690 = vmatprep.subr.mxu0 0.0
  %1691 = vmatpush1.msra.mxu0 0.0
  %1692 = vmatprep.subr.mxu0 0.0
  %1693 = vmatpush1.msra.mxu0 0.0
  %1694 = vmatprep.subr.mxu0 0.0
  %1695 = vmatpush1.msra.mxu0 0.0
  %1696 = vmatprep.subr.mxu0 0.0
  %1697 = vmatpush1.msra.mxu0 0.0
  %1698 = vmatprep.subr.mxu0 0.0
  %1699 = vmatpush1.msra.mxu0 0.0
  %1700 = vmatprep.subr.mxu0 0.0
  %1701 = vmatpush1.msra.mxu0 0.0
  %1702 = vmatprep.subr.mxu0 0.0
  %1703 = vmatpush1.msra.mxu0 0.0
  %1704 = vmatprep.subr.mxu0 0.0
  %1705 = vmatpush1.msra.mxu0 0.0
  %1706 = vmatprep.mubr.f32.mxu0 0.0
  %1707 = vmatmul.mubr.f32.gmra.mrb[0].mxu0 %v1640
  %v1708 = vpop.f32.mrb[0].mxu0
  %v1709 = vadd.f32 %v1633, %v1708
  %v1710 = vpop.f32.mrb[0].mxu0
  %1711 = vdwg.mxu0
  %v1712 = vadd.f32 %v1709, %v38
  %v1713 = vxor.u32 %v1712, 2147483648
  %v1714 = vmul.f32 %v1713, 1.442695
  %v1715 = vpow.pop %v1714
  %v1716 = vadd.f32 %v1715, 1.0
  %v1717 = vrcp.pop %v1716
  %v1718 = vmul.f32 1.0, %v1717
  %v1719 = vtanh.pop %v1712
  %v1720 = vmul.f32 %v1718, %v1283
  %1722 = vrot.lane.b32.xlu0 %v1719, 64
  %v1723 = vpop.permute.xlu0 %1722
  %v1725 = vmul.f32 %v1718, %v1723
  %1727 = vrot.lane.b32.xlu0 %v1725, 32
  %v1728 = vpop.permute.xlu0 %1727
  %v1730 = vadd.f32 %v1720, %v1728
  %v1731 = vtanh.pop %v1730
  %1733 = vrot.lane.b32.xlu0 %v1731, 64
  %v1734 = vpop.permute.xlu0 %1733
  %v1736 = vmul.f32 %v1718, %v1734
  %1738 = vrot.lane.b32.xlu0 %v1464, 32
  %v1739 = vpop.permute.xlu0 %1738
  %v1740 = vsel %vm132, %v1739, 0
  %1742 = vmatprep.subr.mxu0 0.0
  %1743 = vmatpush1.msra.mxu0 %v30
  %1744 = vmatprep.subr.mxu0 0.0
  %1745 = vmatpush1.msra.mxu0 %v31
  %1746 = vmatprep.subr.mxu0 0.0
  %1747 = vmatpush1.msra.mxu0 %v32
  %1748 = vmatprep.subr.mxu0 0.0
  %1749 = vmatpush1.msra.mxu0 %v33
  %1750 = vmatprep.subr.mxu0 0.0
  %1751 = vmatpush1.msra.mxu0 0.0
  %1752 = vmatprep.subr.mxu0 0.0
  %1753 = vmatpush1.msra.mxu0 0.0
  %1754 = vmatprep.subr.mxu0 0.0
  %1755 = vmatpush1.msra.mxu0 0.0
  %1756 = vmatprep.subr.mxu0 0.0
  %1757 = vmatpush1.msra.mxu0 0.0
  %1758 = vmatprep.subr.mxu0 0.0
  %1759 = vmatpush1.msra.mxu0 0.0
  %1760 = vmatprep.subr.mxu0 0.0
  %1761 = vmatpush1.msra.mxu0 0.0
  %1762 = vmatprep.subr.mxu0 0.0
  %1763 = vmatpush1.msra.mxu0 0.0
  %1764 = vmatprep.subr.mxu0 0.0
  %1765 = vmatpush1.msra.mxu0 0.0
  %1766 = vmatprep.subr.mxu0 0.0
  %1767 = vmatpush1.msra.mxu0 0.0
  %1768 = vmatprep.subr.mxu0 0.0
  %1769 = vmatpush1.msra.mxu0 0.0
  %1770 = vmatprep.subr.mxu0 0.0
  %1771 = vmatpush1.msra.mxu0 0.0
  %1772 = vmatprep.subr.mxu0 0.0
  %1773 = vmatpush1.msra.mxu0 0.0
  %1774 = vmatprep.subr.mxu0 0.0
  %1775 = vmatpush1.msra.mxu0 0.0
  %1776 = vmatprep.subr.mxu0 0.0
  %1777 = vmatpush1.msra.mxu0 0.0
  %1778 = vmatprep.subr.mxu0 0.0
  %1779 = vmatpush1.msra.mxu0 0.0
  %1780 = vmatprep.subr.mxu0 0.0
  %1781 = vmatpush1.msra.mxu0 0.0
  %1782 = vmatprep.subr.mxu0 0.0
  %1783 = vmatpush1.msra.mxu0 0.0
  %1784 = vmatprep.subr.mxu0 0.0
  %1785 = vmatpush1.msra.mxu0 0.0
  %1786 = vmatprep.subr.mxu0 0.0
  %1787 = vmatpush1.msra.mxu0 0.0
  %1788 = vmatprep.subr.mxu0 0.0
  %1789 = vmatpush1.msra.mxu0 0.0
  %1790 = vmatprep.subr.mxu0 0.0
  %1791 = vmatpush1.msra.mxu0 0.0
  %1792 = vmatprep.subr.mxu0 0.0
  %1793 = vmatpush1.msra.mxu0 0.0
  %1794 = vmatprep.subr.mxu0 0.0
  %1795 = vmatpush1.msra.mxu0 0.0
  %1796 = vmatprep.subr.mxu0 0.0
  %1797 = vmatpush1.msra.mxu0 0.0
  %1798 = vmatprep.subr.mxu0 0.0
  %1799 = vmatpush1.msra.mxu0 0.0
  %1800 = vmatprep.subr.mxu0 0.0
  %1801 = vmatpush1.msra.mxu0 0.0
  %1802 = vmatprep.subr.mxu0 0.0
  %1803 = vmatpush1.msra.mxu0 0.0
  %1804 = vmatprep.subr.mxu0 0.0
  %1805 = vmatpush1.msra.mxu0 0.0
  %1806 = vmatprep.mubr.f32.mxu0 0.0
  %1807 = vmatmul.mubr.f32.gmra.mrb[0].mxu0 %v1740
  %v1808 = vpop.f32.mrb[0].mxu0
  %v1809 = vadd.f32 0.0, %v1808
  %v1810 = vpop.f32.mrb[0].mxu0
  %1811 = vdwg.mxu0
  %1813 = vrot.lane.b32.xlu0 %v1736, 32
  %v1814 = vpop.permute.xlu0 %1813
  %v1815 = vsel %vm132, %v1814, 0
  %1817 = vmatprep.subr.mxu0 0.0
  %1818 = vmatpush1.msra.mxu0 %v26
  %1819 = vmatprep.subr.mxu0 0.0
  %1820 = vmatpush1.msra.mxu0 %v27
  %1821 = vmatprep.subr.mxu0 0.0
  %1822 = vmatpush1.msra.mxu0 %v28
  %1823 = vmatprep.subr.mxu0 0.0
  %1824 = vmatpush1.msra.mxu0 %v29
  %1825 = vmatprep.subr.mxu0 0.0
  %1826 = vmatpush1.msra.mxu0 0.0
  %1827 = vmatprep.subr.mxu0 0.0
  %1828 = vmatpush1.msra.mxu0 0.0
  %1829 = vmatprep.subr.mxu0 0.0
  %1830 = vmatpush1.msra.mxu0 0.0
  %1831 = vmatprep.subr.mxu0 0.0
  %1832 = vmatpush1.msra.mxu0 0.0
  %1833 = vmatprep.subr.mxu0 0.0
  %1834 = vmatpush1.msra.mxu0 0.0
  %1835 = vmatprep.subr.mxu0 0.0
  %1836 = vmatpush1.msra.mxu0 0.0
  %1837 = vmatprep.subr.mxu0 0.0
  %1838 = vmatpush1.msra.mxu0 0.0
  %1839 = vmatprep.subr.mxu0 0.0
  %1840 = vmatpush1.msra.mxu0 0.0
  %1841 = vmatprep.subr.mxu0 0.0
  %1842 = vmatpush1.msra.mxu0 0.0
  %1843 = vmatprep.subr.mxu0 0.0
  %1844 = vmatpush1.msra.mxu0 0.0
  %1845 = vmatprep.subr.mxu0 0.0
  %1846 = vmatpush1.msra.mxu0 0.0
  %1847 = vmatprep.subr.mxu0 0.0
  %1848 = vmatpush1.msra.mxu0 0.0
  %1849 = vmatprep.subr.mxu0 0.0
  %1850 = vmatpush1.msra.mxu0 0.0
  %1851 = vmatprep.subr.mxu0 0.0
  %1852 = vmatpush1.msra.mxu0 0.0
  %1853 = vmatprep.subr.mxu0 0.0
  %1854 = vmatpush1.msra.mxu0 0.0
  %1855 = vmatprep.subr.mxu0 0.0
  %1856 = vmatpush1.msra.mxu0 0.0
  %1857 = vmatprep.subr.mxu0 0.0
  %1858 = vmatpush1.msra.mxu0 0.0
  %1859 = vmatprep.subr.mxu0 0.0
  %1860 = vmatpush1.msra.mxu0 0.0
  %1861 = vmatprep.subr.mxu0 0.0
  %1862 = vmatpush1.msra.mxu0 0.0
  %1863 = vmatprep.subr.mxu0 0.0
  %1864 = vmatpush1.msra.mxu0 0.0
  %1865 = vmatprep.subr.mxu0 0.0
  %1866 = vmatpush1.msra.mxu0 0.0
  %1867 = vmatprep.subr.mxu0 0.0
  %1868 = vmatpush1.msra.mxu0 0.0
  %1869 = vmatprep.subr.mxu0 0.0
  %1870 = vmatpush1.msra.mxu0 0.0
  %1871 = vmatprep.subr.mxu0 0.0
  %1872 = vmatpush1.msra.mxu0 0.0
  %1873 = vmatprep.subr.mxu0 0.0
  %1874 = vmatpush1.msra.mxu0 0.0
  %1875 = vmatprep.subr.mxu0 0.0
  %1876 = vmatpush1.msra.mxu0 0.0
  %1877 = vmatprep.subr.mxu0 0.0
  %1878 = vmatpush1.msra.mxu0 0.0
  %1879 = vmatprep.subr.mxu0 0.0
  %1880 = vmatpush1.msra.mxu0 0.0
  %1881 = vmatprep.mubr.f32.mxu0 0.0
  %1882 = vmatmul.mubr.f32.gmra.mrb[0].mxu0 %v1815
  %v1883 = vpop.f32.mrb[0].mxu0
  %v1884 = vadd.f32 %v1809, %v1883
  %v1885 = vpop.f32.mrb[0].mxu0
  %1886 = vdwg.mxu0
  %v1887 = vadd.f32 %v1884, %v43
  %v1888 = vxor.u32 %v1887, 2147483648
  %v1889 = vmul.f32 %v1888, 1.442695
  %v1890 = vpow.pop %v1889
  %v1891 = vadd.f32 %v1890, 1.0
  %v1892 = vrcp.pop %v1891
  %v1893 = vmul.f32 1.0, %v1892
  %v1894 = vtanh.pop %v1887
  %v1895 = vmul.f32 %v1893, %v1458
  %1897 = vrot.lane.b32.xlu0 %v1894, 64
  %v1898 = vpop.permute.xlu0 %1897
  %v1900 = vmul.f32 %v1893, %v1898
  %1902 = vrot.lane.b32.xlu0 %v1900, 32
  %v1903 = vpop.permute.xlu0 %1902
  %v1905 = vadd.f32 %v1895, %v1903
  %v1906 = vtanh.pop %v1905
  %1908 = vrot.lane.b32.xlu0 %v1906, 64
  %v1909 = vpop.permute.xlu0 %1908
  %v1911 = vmul.f32 %v1893, %v1909
  %1912 = vmatprep.subr.mxu0 0.0
  %1913 = vmatpush1.msra.mxu0 %v13
  %1914 = vmatprep.subr.mxu0 0.0
  %1915 = vmatpush1.msra.mxu0 %v14
  %1916 = vmatprep.subr.mxu0 0.0
  %1917 = vmatpush1.msra.mxu0 %v15
  %1918 = vmatprep.subr.mxu0 0.0
  %1919 = vmatpush1.msra.mxu0 %v16
  %1920 = vmatprep.subr.mxu0 0.0
  %1921 = vmatpush1.msra.mxu0 0.0
  %1922 = vmatprep.subr.mxu0 0.0
  %1923 = vmatpush1.msra.mxu0 0.0
  %1924 = vmatprep.subr.mxu0 0.0
  %1925 = vmatpush1.msra.mxu0 0.0
  %1926 = vmatprep.subr.mxu0 0.0
  %1927 = vmatpush1.msra.mxu0 0.0
  %1928 = vmatprep.subr.mxu0 0.0
  %1929 = vmatpush1.msra.mxu0 0.0
  %1930 = vmatprep.subr.mxu0 0.0
  %1931 = vmatpush1.msra.mxu0 0.0
  %1932 = vmatprep.subr.mxu0 0.0
  %1933 = vmatpush1.msra.mxu0 0.0
  %1934 = vmatprep.subr.mxu0 0.0
  %1935 = vmatpush1.msra.mxu0 0.0
  %1936 = vmatprep.subr.mxu0 0.0
  %1937 = vmatpush1.msra.mxu0 0.0
  %1938 = vmatprep.subr.mxu0 0.0
  %1939 = vmatpush1.msra.mxu0 0.0
  %1940 = vmatprep.subr.mxu0 0.0
  %1941 = vmatpush1.msra.mxu0 0.0
  %1942 = vmatprep.subr.mxu0 0.0
  %1943 = vmatpush1.msra.mxu0 0.0
  %1944 = vmatprep.subr.mxu0 0.0
  %1945 = vmatpush1.msra.mxu0 0.0
  %1946 = vmatprep.subr.mxu0 0.0
  %1947 = vmatpush1.msra.mxu0 0.0
  %1948 = vmatprep.subr.mxu0 0.0
  %1949 = vmatpush1.msra.mxu0 0.0
  %1950 = vmatprep.subr.mxu0 0.0
  %1951 = vmatpush1.msra.mxu0 0.0
  %1952 = vmatprep.subr.mxu0 0.0
  %1953 = vmatpush1.msra.mxu0 0.0
  %1954 = vmatprep.subr.mxu0 0.0
  %1955 = vmatpush1.msra.mxu0 0.0
  %1956 = vmatprep.subr.mxu0 0.0
  %1957 = vmatpush1.msra.mxu0 0.0
  %1958 = vmatprep.subr.mxu0 0.0
  %1959 = vmatpush1.msra.mxu0 0.0
  %1960 = vmatprep.subr.mxu0 0.0
  %1961 = vmatpush1.msra.mxu0 0.0
  %1962 = vmatprep.subr.mxu0 0.0
  %1963 = vmatpush1.msra.mxu0 0.0
  %1964 = vmatprep.subr.mxu0 0.0
  %1965 = vmatpush1.msra.mxu0 0.0
  %1966 = vmatprep.subr.mxu0 0.0
  %1967 = vmatpush1.msra.mxu0 0.0
  %1968 = vmatprep.subr.mxu0 0.0
  %1969 = vmatpush1.msra.mxu0 0.0
  %1970 = vmatprep.subr.mxu0 0.0
  %1971 = vmatpush1.msra.mxu0 0.0
  %1972 = vmatprep.subr.mxu0 0.0
  %1973 = vmatpush1.msra.mxu0 0.0
  %1974 = vmatprep.subr.mxu0 0.0
  %1975 = vmatpush1.msra.mxu0 0.0
  %1976 = vmatprep.mubr.f32.mxu0 0.0
  %1977 = vmatmul.mubr.f32.gmra.mrb[0].mxu0 %v1640
  %v1978 = vpop.f32.mrb[0].mxu0
  %v1979 = vadd.f32 0.0, %v1978
  %v1980 = vpop.f32.mrb[0].mxu0
  %1981 = vdwg.mxu0
  %v1982 = vadd.f32 %v129, %v1979
  %v1983 = vxor.u32 %v1982, 2147483648
  %v1984 = vmul.f32 %v1983, 1.442695
  %v1985 = vpow.pop %v1984
  %v1986 = vadd.f32 %v1985, 1.0
  %v1987 = vrcp.pop %v1986
  %v1988 = vmul.f32 1.0, %v1987
  %v1989 = vtanh.pop %v1982
  %v1991 = vrot.slane %v1559, 6
  %v1993 = vmul.f32 %v1988, %v1991
  %1995 = vrot.lane.b32.xlu0 %v1989, 64
  %v1996 = vpop.permute.xlu0 %1995
  %v1998 = vmul.f32 %v1988, %v1996
  %2000 = vrot.lane.b32.xlu0 %v1998, 32
  %v2001 = vpop.permute.xlu0 %2000
  %v2003 = vadd.f32 %v1993, %v2001
  %v2004 = vtanh.pop %v2003
  %2006 = vrot.lane.b32.xlu0 %v2004, 64
  %v2007 = vpop.permute.xlu0 %2006
  %v2009 = vmul.f32 %v1988, %v2007
  %2010 = vmatprep.subr.mxu0 0.0
  %2011 = vmatpush1.msra.mxu0 %v22
  %2012 = vmatprep.subr.mxu0 0.0
  %2013 = vmatpush1.msra.mxu0 %v23
  %2014 = vmatprep.subr.mxu0 0.0
  %2015 = vmatpush1.msra.mxu0 %v24
  %2016 = vmatprep.subr.mxu0 0.0
  %2017 = vmatpush1.msra.mxu0 %v25
  %2018 = vmatprep.subr.mxu0 0.0
  %2019 = vmatpush1.msra.mxu0 0.0
  %2020 = vmatprep.subr.mxu0 0.0
  %2021 = vmatpush1.msra.mxu0 0.0
  %2022 = vmatprep.subr.mxu0 0.0
  %2023 = vmatpush1.msra.mxu0 0.0
  %2024 = vmatprep.subr.mxu0 0.0
  %2025 = vmatpush1.msra.mxu0 0.0
  %2026 = vmatprep.subr.mxu0 0.0
  %2027 = vmatpush1.msra.mxu0 0.0
  %2028 = vmatprep.subr.mxu0 0.0
  %2029 = vmatpush1.msra.mxu0 0.0
  %2030 = vmatprep.subr.mxu0 0.0
  %2031 = vmatpush1.msra.mxu0 0.0
  %2032 = vmatprep.subr.mxu0 0.0
  %2033 = vmatpush1.msra.mxu0 0.0
  %2034 = vmatprep.subr.mxu0 0.0
  %2035 = vmatpush1.msra.mxu0 0.0
  %2036 = vmatprep.subr.mxu0 0.0
  %2037 = vmatpush1.msra.mxu0 0.0
  %2038 = vmatprep.subr.mxu0 0.0
  %2039 = vmatpush1.msra.mxu0 0.0
  %2040 = vmatprep.subr.mxu0 0.0
  %2041 = vmatpush1.msra.mxu0 0.0
  %2042 = vmatprep.subr.mxu0 0.0
  %2043 = vmatpush1.msra.mxu0 0.0
  %2044 = vmatprep.subr.mxu0 0.0
  %2045 = vmatpush1.msra.mxu0 0.0
  %2046 = vmatprep.subr.mxu0 0.0
  %2047 = vmatpush1.msra.mxu0 0.0
  %2048 = vmatprep.subr.mxu0 0.0
  %2049 = vmatpush1.msra.mxu0 0.0
  %2050 = vmatprep.subr.mxu0 0.0
  %2051 = vmatpush1.msra.mxu0 0.0
  %2052 = vmatprep.subr.mxu0 0.0
  %2053 = vmatpush1.msra.mxu0 0.0
  %2054 = vmatprep.subr.mxu0 0.0
  %2055 = vmatpush1.msra.mxu0 0.0
  %2056 = vmatprep.subr.mxu0 0.0
  %2057 = vmatpush1.msra.mxu0 0.0
  %2058 = vmatprep.subr.mxu0 0.0
  %2059 = vmatpush1.msra.mxu0 0.0
  %2060 = vmatprep.subr.mxu0 0.0
  %2061 = vmatpush1.msra.mxu0 0.0
  %2062 = vmatprep.subr.mxu0 0.0
  %2063 = vmatpush1.msra.mxu0 0.0
  %2064 = vmatprep.subr.mxu0 0.0
  %2065 = vmatpush1.msra.mxu0 0.0
  %2066 = vmatprep.subr.mxu0 0.0
  %2067 = vmatpush1.msra.mxu0 0.0
  %2068 = vmatprep.subr.mxu0 0.0
  %2069 = vmatpush1.msra.mxu0 0.0
  %2070 = vmatprep.subr.mxu0 0.0
  %2071 = vmatpush1.msra.mxu0 0.0
  %2072 = vmatprep.subr.mxu0 0.0
  %2073 = vmatpush1.msra.mxu0 0.0
  %2074 = vmatprep.mubr.f32.mxu0 0.0
  %2075 = vmatmul.mubr.f32.gmra.mrb[0].mxu0 %v1815
  %v2076 = vpop.f32.mrb[0].mxu0
  %v2077 = vadd.f32 0.0, %v2076
  %v2078 = vpop.f32.mrb[0].mxu0
  %2079 = vdwg.mxu0
  %2081 = vrot.lane.b32.xlu0 %v2009, 32
  %v2082 = vpop.permute.xlu0 %2081
  %v2083 = vsel %vm132, %v2082, 0
  %2085 = vmatprep.subr.mxu0 0.0
  %2086 = vmatpush1.msra.mxu0 %v18
  %2087 = vmatprep.subr.mxu0 0.0
  %2088 = vmatpush1.msra.mxu0 %v19
  %2089 = vmatprep.subr.mxu0 0.0
  %2090 = vmatpush1.msra.mxu0 %v20
  %2091 = vmatprep.subr.mxu0 0.0
  %2092 = vmatpush1.msra.mxu0 %v21
  %2093 = vmatprep.subr.mxu0 0.0
  %2094 = vmatpush1.msra.mxu0 0.0
  %2095 = vmatprep.subr.mxu0 0.0
  %2096 = vmatpush1.msra.mxu0 0.0
  %2097 = vmatprep.subr.mxu0 0.0
  %2098 = vmatpush1.msra.mxu0 0.0
  %2099 = vmatprep.subr.mxu0 0.0
  %2100 = vmatpush1.msra.mxu0 0.0
  %2101 = vmatprep.subr.mxu0 0.0
  %2102 = vmatpush1.msra.mxu0 0.0
  %2103 = vmatprep.subr.mxu0 0.0
  %2104 = vmatpush1.msra.mxu0 0.0
  %2105 = vmatprep.subr.mxu0 0.0
  %2106 = vmatpush1.msra.mxu0 0.0
  %2107 = vmatprep.subr.mxu0 0.0
  %2108 = vmatpush1.msra.mxu0 0.0
  %2109 = vmatprep.subr.mxu0 0.0
  %2110 = vmatpush1.msra.mxu0 0.0
  %2111 = vmatprep.subr.mxu0 0.0
  %2112 = vmatpush1.msra.mxu0 0.0
  %2113 = vmatprep.subr.mxu0 0.0
  %2114 = vmatpush1.msra.mxu0 0.0
  %2115 = vmatprep.subr.mxu0 0.0
  %2116 = vmatpush1.msra.mxu0 0.0
  %2117 = vmatprep.subr.mxu0 0.0
  %2118 = vmatpush1.msra.mxu0 0.0
  %2119 = vmatprep.subr.mxu0 0.0
  %2120 = vmatpush1.msra.mxu0 0.0
  %2121 = vmatprep.subr.mxu0 0.0
  %2122 = vmatpush1.msra.mxu0 0.0
  %2123 = vmatprep.subr.mxu0 0.0
  %2124 = vmatpush1.msra.mxu0 0.0
  %2125 = vmatprep.subr.mxu0 0.0
  %2126 = vmatpush1.msra.mxu0 0.0
  %2127 = vmatprep.subr.mxu0 0.0
  %2128 = vmatpush1.msra.mxu0 0.0
  %2129 = vmatprep.subr.mxu0 0.0
  %2130 = vmatpush1.msra.mxu0 0.0
  %2131 = vmatprep.subr.mxu0 0.0
  %2132 = vmatpush1.msra.mxu0 0.0
  %2133 = vmatprep.subr.mxu0 0.0
  %2134 = vmatpush1.msra.mxu0 0.0
  %2135 = vmatprep.subr.mxu0 0.0
  %2136 = vmatpush1.msra.mxu0 0.0
  %2137 = vmatprep.subr.mxu0 0.0
  %2138 = vmatpush1.msra.mxu0 0.0
  %2139 = vmatprep.subr.mxu0 0.0
  %2140 = vmatpush1.msra.mxu0 0.0
  %2141 = vmatprep.subr.mxu0 0.0
  %2142 = vmatpush1.msra.mxu0 0.0
  %2143 = vmatprep.subr.mxu0 0.0
  %2144 = vmatpush1.msra.mxu0 0.0
  %2145 = vmatprep.subr.mxu0 0.0
  %2146 = vmatpush1.msra.mxu0 0.0
  %2147 = vmatprep.subr.mxu0 0.0
  %2148 = vmatpush1.msra.mxu0 0.0
  %2149 = vmatprep.mubr.f32.mxu0 0.0
  %2150 = vmatmul.mubr.f32.gmra.mrb[0].mxu0 %v2083
  %v2151 = vpop.f32.mrb[0].mxu0
  %v2152 = vadd.f32 %v2077, %v2151
  %v2153 = vpop.f32.mrb[0].mxu0
  %2154 = vdwg.mxu0
  %v2155 = vadd.f32 %v2152, %v38
  %v2156 = vxor.u32 %v2155, 2147483648
  %v2157 = vmul.f32 %v2156, 1.442695
  %v2158 = vpow.pop %v2157
  %v2159 = vadd.f32 %v2158, 1.0
  %v2160 = vrcp.pop %v2159
  %v2161 = vmul.f32 1.0, %v2160
  %v2162 = vtanh.pop %v2155
  %v2163 = vmul.f32 %v2161, %v1730
  %2165 = vrot.lane.b32.xlu0 %v2162, 64
  %v2166 = vpop.permute.xlu0 %2165
  %v2168 = vmul.f32 %v2161, %v2166
  %2170 = vrot.lane.b32.xlu0 %v2168, 32
  %v2171 = vpop.permute.xlu0 %2170
  %v2173 = vadd.f32 %v2163, %v2171
  %v2174 = vtanh.pop %v2173
  %2176 = vrot.lane.b32.xlu0 %v2174, 64
  %v2177 = vpop.permute.xlu0 %2176
  %v2179 = vmul.f32 %v2161, %v2177
  %2181 = vrot.lane.b32.xlu0 %v1911, 32
  %v2182 = vpop.permute.xlu0 %2181
  %v2183 = vsel %vm132, %v2182, 0
  %2185 = vmatprep.subr.mxu0 0.0
  %2186 = vmatpush1.msra.mxu0 %v30
  %2187 = vmatprep.subr.mxu0 0.0
  %2188 = vmatpush1.msra.mxu0 %v31
  %2189 = vmatprep.subr.mxu0 0.0
  %2190 = vmatpush1.msra.mxu0 %v32
  %2191 = vmatprep.subr.mxu0 0.0
  %2192 = vmatpush1.msra.mxu0 %v33
  %2193 = vmatprep.subr.mxu0 0.0
  %2194 = vmatpush1.msra.mxu0 0.0
  %2195 = vmatprep.subr.mxu0 0.0
  %2196 = vmatpush1.msra.mxu0 0.0
  %2197 = vmatprep.subr.mxu0 0.0
  %2198 = vmatpush1.msra.mxu0 0.0
  %2199 = vmatprep.subr.mxu0 0.0
  %2200 = vmatpush1.msra.mxu0 0.0
  %2201 = vmatprep.subr.mxu0 0.0
  %2202 = vmatpush1.msra.mxu0 0.0
  %2203 = vmatprep.subr.mxu0 0.0
  %2204 = vmatpush1.msra.mxu0 0.0
  %2205 = vmatprep.subr.mxu0 0.0
  %2206 = vmatpush1.msra.mxu0 0.0
  %2207 = vmatprep.subr.mxu0 0.0
  %2208 = vmatpush1.msra.mxu0 0.0
  %2209 = vmatprep.subr.mxu0 0.0
  %2210 = vmatpush1.msra.mxu0 0.0
  %2211 = vmatprep.subr.mxu0 0.0
  %2212 = vmatpush1.msra.mxu0 0.0
  %2213 = vmatprep.subr.mxu0 0.0
  %2214 = vmatpush1.msra.mxu0 0.0
  %2215 = vmatprep.subr.mxu0 0.0
  %2216 = vmatpush1.msra.mxu0 0.0
  %2217 = vmatprep.subr.mxu0 0.0
  %2218 = vmatpush1.msra.mxu0 0.0
  %2219 = vmatprep.subr.mxu0 0.0
  %2220 = vmatpush1.msra.mxu0 0.0
  %2221 = vmatprep.subr.mxu0 0.0
  %2222 = vmatpush1.msra.mxu0 0.0
  %2223 = vmatprep.subr.mxu0 0.0
  %2224 = vmatpush1.msra.mxu0 0.0
  %2225 = vmatprep.subr.mxu0 0.0
  %2226 = vmatpush1.msra.mxu0 0.0
  %2227 = vmatprep.subr.mxu0 0.0
  %2228 = vmatpush1.msra.mxu0 0.0
  %2229 = vmatprep.subr.mxu0 0.0
  %2230 = vmatpush1.msra.mxu0 0.0
  %2231 = vmatprep.subr.mxu0 0.0
  %2232 = vmatpush1.msra.mxu0 0.0
  %2233 = vmatprep.subr.mxu0 0.0
  %2234 = vmatpush1.msra.mxu0 0.0
  %2235 = vmatprep.subr.mxu0 0.0
  %2236 = vmatpush1.msra.mxu0 0.0
  %2237 = vmatprep.subr.mxu0 0.0
  %2238 = vmatpush1.msra.mxu0 0.0
  %2239 = vmatprep.subr.mxu0 0.0
  %2240 = vmatpush1.msra.mxu0 0.0
  %2241 = vmatprep.subr.mxu0 0.0
  %2242 = vmatpush1.msra.mxu0 0.0
  %2243 = vmatprep.subr.mxu0 0.0
  %2244 = vmatpush1.msra.mxu0 0.0
  %2245 = vmatprep.subr.mxu0 0.0
  %2246 = vmatpush1.msra.mxu0 0.0
  %2247 = vmatprep.subr.mxu0 0.0
  %2248 = vmatpush1.msra.mxu0 0.0
  %2249 = vmatprep.mubr.f32.mxu0 0.0
  %2250 = vmatmul.mubr.f32.gmra.mrb[0].mxu0 %v2183
  %v2251 = vpop.f32.mrb[0].mxu0
  %v2252 = vadd.f32 0.0, %v2251
  %v2253 = vpop.f32.mrb[0].mxu0
  %2254 = vdwg.mxu0
  %2256 = vrot.lane.b32.xlu0 %v2179, 32
  %v2257 = vpop.permute.xlu0 %2256
  %v2258 = vsel %vm132, %v2257, 0
  %2260 = vmatprep.subr.mxu0 0.0
  %2261 = vmatpush1.msra.mxu0 %v26
  %2262 = vmatprep.subr.mxu0 0.0
  %2263 = vmatpush1.msra.mxu0 %v27
  %2264 = vmatprep.subr.mxu0 0.0
  %2265 = vmatpush1.msra.mxu0 %v28
  %2266 = vmatprep.subr.mxu0 0.0
  %2267 = vmatpush1.msra.mxu0 %v29
  %2268 = vmatprep.subr.mxu0 0.0
  %2269 = vmatpush1.msra.mxu0 0.0
  %2270 = vmatprep.subr.mxu0 0.0
  %2271 = vmatpush1.msra.mxu0 0.0
  %2272 = vmatprep.subr.mxu0 0.0
  %2273 = vmatpush1.msra.mxu0 0.0
  %2274 = vmatprep.subr.mxu0 0.0
  %2275 = vmatpush1.msra.mxu0 0.0
  %2276 = vmatprep.subr.mxu0 0.0
  %2277 = vmatpush1.msra.mxu0 0.0
  %2278 = vmatprep.subr.mxu0 0.0
  %2279 = vmatpush1.msra.mxu0 0.0
  %2280 = vmatprep.subr.mxu0 0.0
  %2281 = vmatpush1.msra.mxu0 0.0
  %2282 = vmatprep.subr.mxu0 0.0
  %2283 = vmatpush1.msra.mxu0 0.0
  %2284 = vmatprep.subr.mxu0 0.0
  %2285 = vmatpush1.msra.mxu0 0.0
  %2286 = vmatprep.subr.mxu0 0.0
  %2287 = vmatpush1.msra.mxu0 0.0
  %2288 = vmatprep.subr.mxu0 0.0
  %2289 = vmatpush1.msra.mxu0 0.0
  %2290 = vmatprep.subr.mxu0 0.0
  %2291 = vmatpush1.msra.mxu0 0.0
  %2292 = vmatprep.subr.mxu0 0.0
  %2293 = vmatpush1.msra.mxu0 0.0
  %2294 = vmatprep.subr.mxu0 0.0
  %2295 = vmatpush1.msra.mxu0 0.0
  %2296 = vmatprep.subr.mxu0 0.0
  %2297 = vmatpush1.msra.mxu0 0.0
  %2298 = vmatprep.subr.mxu0 0.0
  %2299 = vmatpush1.msra.mxu0 0.0
  %2300 = vmatprep.subr.mxu0 0.0
  %2301 = vmatpush1.msra.mxu0 0.0
  %2302 = vmatprep.subr.mxu0 0.0
  %2303 = vmatpush1.msra.mxu0 0.0
  %2304 = vmatprep.subr.mxu0 0.0
  %2305 = vmatpush1.msra.mxu0 0.0
  %2306 = vmatprep.subr.mxu0 0.0
  %2307 = vmatpush1.msra.mxu0 0.0
  %2308 = vmatprep.subr.mxu0 0.0
  %2309 = vmatpush1.msra.mxu0 0.0
  %2310 = vmatprep.subr.mxu0 0.0
  %2311 = vmatpush1.msra.mxu0 0.0
  %2312 = vmatprep.subr.mxu0 0.0
  %2313 = vmatpush1.msra.mxu0 0.0
  %2314 = vmatprep.subr.mxu0 0.0
  %2315 = vmatpush1.msra.mxu0 0.0
  %2316 = vmatprep.subr.mxu0 0.0
  %2317 = vmatpush1.msra.mxu0 0.0
  %2318 = vmatprep.subr.mxu0 0.0
  %2319 = vmatpush1.msra.mxu0 0.0
  %2320 = vmatprep.subr.mxu0 0.0
  %2321 = vmatpush1.msra.mxu0 0.0
  %2322 = vmatprep.subr.mxu0 0.0
  %2323 = vmatpush1.msra.mxu0 0.0
  %2324 = vmatprep.mubr.f32.mxu0 0.0
  %2325 = vmatmul.mubr.f32.gmra.mrb[0].mxu0 %v2258
  %v2326 = vpop.f32.mrb[0].mxu0
  %v2327 = vadd.f32 %v2252, %v2326
  %v2328 = vpop.f32.mrb[0].mxu0
  %2329 = vdwg.mxu0
  %v2330 = vadd.f32 %v2327, %v43
  %v2331 = vxor.u32 %v2330, 2147483648
  %v2332 = vmul.f32 %v2331, 1.442695
  %v2333 = vpow.pop %v2332
  %v2334 = vadd.f32 %v2333, 1.0
  %v2335 = vrcp.pop %v2334
  %v2336 = vmul.f32 1.0, %v2335
  %v2337 = vtanh.pop %v2330
  %v2338 = vmul.f32 %v2336, %v1905
  %2340 = vrot.lane.b32.xlu0 %v2337, 64
  %v2341 = vpop.permute.xlu0 %2340
  %v2343 = vmul.f32 %v2336, %v2341
  %2345 = vrot.lane.b32.xlu0 %v2343, 32
  %v2346 = vpop.permute.xlu0 %2345
  %v2348 = vadd.f32 %v2338, %v2346
  %v2349 = vtanh.pop %v2348
  %2351 = vrot.lane.b32.xlu0 %v2349, 64
  %v2352 = vpop.permute.xlu0 %2351
  %v2354 = vmul.f32 %v2336, %v2352
  %2355 = vmatprep.subr.mxu0 0.0
  %2356 = vmatpush1.msra.mxu0 %v13
  %2357 = vmatprep.subr.mxu0 0.0
  %2358 = vmatpush1.msra.mxu0 %v14
  %2359 = vmatprep.subr.mxu0 0.0
  %2360 = vmatpush1.msra.mxu0 %v15
  %2361 = vmatprep.subr.mxu0 0.0
  %2362 = vmatpush1.msra.mxu0 %v16
  %2363 = vmatprep.subr.mxu0 0.0
  %2364 = vmatpush1.msra.mxu0 0.0
  %2365 = vmatprep.subr.mxu0 0.0
  %2366 = vmatpush1.msra.mxu0 0.0
  %2367 = vmatprep.subr.mxu0 0.0
  %2368 = vmatpush1.msra.mxu0 0.0
  %2369 = vmatprep.subr.mxu0 0.0
  %2370 = vmatpush1.msra.mxu0 0.0
  %2371 = vmatprep.subr.mxu0 0.0
  %2372 = vmatpush1.msra.mxu0 0.0
  %2373 = vmatprep.subr.mxu0 0.0
  %2374 = vmatpush1.msra.mxu0 0.0
  %2375 = vmatprep.subr.mxu0 0.0
  %2376 = vmatpush1.msra.mxu0 0.0
  %2377 = vmatprep.subr.mxu0 0.0
  %2378 = vmatpush1.msra.mxu0 0.0
  %2379 = vmatprep.subr.mxu0 0.0
  %2380 = vmatpush1.msra.mxu0 0.0
  %2381 = vmatprep.subr.mxu0 0.0
  %2382 = vmatpush1.msra.mxu0 0.0
  %2383 = vmatprep.subr.mxu0 0.0
  %2384 = vmatpush1.msra.mxu0 0.0
  %2385 = vmatprep.subr.mxu0 0.0
  %2386 = vmatpush1.msra.mxu0 0.0
  %2387 = vmatprep.subr.mxu0 0.0
  %2388 = vmatpush1.msra.mxu0 0.0
  %2389 = vmatprep.subr.mxu0 0.0
  %2390 = vmatpush1.msra.mxu0 0.0
  %2391 = vmatprep.subr.mxu0 0.0
  %2392 = vmatpush1.msra.mxu0 0.0
  %2393 = vmatprep.subr.mxu0 0.0
  %2394 = vmatpush1.msra.mxu0 0.0
  %2395 = vmatprep.subr.mxu0 0.0
  %2396 = vmatpush1.msra.mxu0 0.0
  %2397 = vmatprep.subr.mxu0 0.0
  %2398 = vmatpush1.msra.mxu0 0.0
  %2399 = vmatprep.subr.mxu0 0.0
  %2400 = vmatpush1.msra.mxu0 0.0
  %2401 = vmatprep.subr.mxu0 0.0
  %2402 = vmatpush1.msra.mxu0 0.0
  %2403 = vmatprep.subr.mxu0 0.0
  %2404 = vmatpush1.msra.mxu0 0.0
  %2405 = vmatprep.subr.mxu0 0.0
  %2406 = vmatpush1.msra.mxu0 0.0
  %2407 = vmatprep.subr.mxu0 0.0
  %2408 = vmatpush1.msra.mxu0 0.0
  %2409 = vmatprep.subr.mxu0 0.0
  %2410 = vmatpush1.msra.mxu0 0.0
  %2411 = vmatprep.subr.mxu0 0.0
  %2412 = vmatpush1.msra.mxu0 0.0
  %2413 = vmatprep.subr.mxu0 0.0
  %2414 = vmatpush1.msra.mxu0 0.0
  %2415 = vmatprep.subr.mxu0 0.0
  %2416 = vmatpush1.msra.mxu0 0.0
  %2417 = vmatprep.subr.mxu0 0.0
  %2418 = vmatpush1.msra.mxu0 0.0
  %2419 = vmatprep.mubr.f32.mxu0 0.0
  %2420 = vmatmul.mubr.f32.gmra.mrb[0].mxu0 %v2083
  %v2421 = vpop.f32.mrb[0].mxu0
  %v2422 = vadd.f32 0.0, %v2421
  %v2423 = vpop.f32.mrb[0].mxu0
  %2424 = vdwg.mxu0
  %v2426 = vrot.slane %v2422, 6
  %v2428 = vadd.f32 %v129, %v2426
  %v2429 = vxor.u32 %v2428, 2147483648
  %v2430 = vmul.f32 %v2429, 1.442695
  %v2431 = vpow.pop %v2430
  %v2432 = vadd.f32 %v2431, 1.0
  %v2433 = vrcp.pop %v2432
  %v2434 = vmul.f32 1.0, %v2433
  %v2435 = vtanh.pop %v2428
  %v2437 = vrot.slane %v2003, 6
  %v2439 = vmul.f32 %v2434, %v2437
  %2441 = vrot.lane.b32.xlu0 %v2435, 64
  %v2442 = vpop.permute.xlu0 %2441
  %v2444 = vmul.f32 %v2434, %v2442
  %2446 = vrot.lane.b32.xlu0 %v2444, 32
  %v2447 = vpop.permute.xlu0 %2446
  %v2449 = vadd.f32 %v2439, %v2447
  %v2450 = vtanh.pop %v2449
  %2452 = vrot.lane.b32.xlu0 %v2450, 64
  %v2453 = vpop.permute.xlu0 %2452
  %v2455 = vmul.f32 %v2434, %v2453
  %2456 = vmatprep.subr.mxu0 0.0
  %2457 = vmatpush1.msra.mxu0 %v22
  %2458 = vmatprep.subr.mxu0 0.0
  %2459 = vmatpush1.msra.mxu0 %v23
  %2460 = vmatprep.subr.mxu0 0.0
  %2461 = vmatpush1.msra.mxu0 %v24
  %2462 = vmatprep.subr.mxu0 0.0
  %2463 = vmatpush1.msra.mxu0 %v25
  %2464 = vmatprep.subr.mxu0 0.0
  %2465 = vmatpush1.msra.mxu0 0.0
  %2466 = vmatprep.subr.mxu0 0.0
  %2467 = vmatpush1.msra.mxu0 0.0
  %2468 = vmatprep.subr.mxu0 0.0
  %2469 = vmatpush1.msra.mxu0 0.0
  %2470 = vmatprep.subr.mxu0 0.0
  %2471 = vmatpush1.msra.mxu0 0.0
  %2472 = vmatprep.subr.mxu0 0.0
  %2473 = vmatpush1.msra.mxu0 0.0
  %2474 = vmatprep.subr.mxu0 0.0
  %2475 = vmatpush1.msra.mxu0 0.0
  %2476 = vmatprep.subr.mxu0 0.0
  %2477 = vmatpush1.msra.mxu0 0.0
  %2478 = vmatprep.subr.mxu0 0.0
  %2479 = vmatpush1.msra.mxu0 0.0
  %2480 = vmatprep.subr.mxu0 0.0
  %2481 = vmatpush1.msra.mxu0 0.0
  %2482 = vmatprep.subr.mxu0 0.0
  %2483 = vmatpush1.msra.mxu0 0.0
  %2484 = vmatprep.subr.mxu0 0.0
  %2485 = vmatpush1.msra.mxu0 0.0
  %2486 = vmatprep.subr.mxu0 0.0
  %2487 = vmatpush1.msra.mxu0 0.0
  %2488 = vmatprep.subr.mxu0 0.0
  %2489 = vmatpush1.msra.mxu0 0.0
  %2490 = vmatprep.subr.mxu0 0.0
  %2491 = vmatpush1.msra.mxu0 0.0
  %2492 = vmatprep.subr.mxu0 0.0
  %2493 = vmatpush1.msra.mxu0 0.0
  %2494 = vmatprep.subr.mxu0 0.0
  %2495 = vmatpush1.msra.mxu0 0.0
  %2496 = vmatprep.subr.mxu0 0.0
  %2497 = vmatpush1.msra.mxu0 0.0
  %2498 = vmatprep.subr.mxu0 0.0
  %2499 = vmatpush1.msra.mxu0 0.0
  %2500 = vmatprep.subr.mxu0 0.0
  %2501 = vmatpush1.msra.mxu0 0.0
  %2502 = vmatprep.subr.mxu0 0.0
  %2503 = vmatpush1.msra.mxu0 0.0
  %2504 = vmatprep.subr.mxu0 0.0
  %2505 = vmatpush1.msra.mxu0 0.0
  %2506 = vmatprep.subr.mxu0 0.0
  %2507 = vmatpush1.msra.mxu0 0.0
  %2508 = vmatprep.subr.mxu0 0.0
  %2509 = vmatpush1.msra.mxu0 0.0
  %2510 = vmatprep.subr.mxu0 0.0
  %2511 = vmatpush1.msra.mxu0 0.0
  %2512 = vmatprep.subr.mxu0 0.0
  %2513 = vmatpush1.msra.mxu0 0.0
  %2514 = vmatprep.subr.mxu0 0.0
  %2515 = vmatpush1.msra.mxu0 0.0
  %2516 = vmatprep.subr.mxu0 0.0
  %2517 = vmatpush1.msra.mxu0 0.0
  %2518 = vmatprep.subr.mxu0 0.0
  %2519 = vmatpush1.msra.mxu0 0.0
  %2520 = vmatprep.mubr.f32.mxu0 0.0
  %2521 = vmatmul.mubr.f32.gmra.mrb[0].mxu0 %v2258
  %v2522 = vpop.f32.mrb[0].mxu0
  %v2523 = vadd.f32 0.0, %v2522
  %v2524 = vpop.f32.mrb[0].mxu0
  %2525 = vdwg.mxu0
  %v2527 = vrot.slane %v2455, 2
  %2528 = vrot.lane.b32.xlu0 %v2527, 32
  %v2529 = vpop.permute.xlu0 %2528
  %v2530 = vsel %vm132, %v2529, 0
  %2532 = vmatprep.subr.mxu0 0.0
  %2533 = vmatpush1.msra.mxu0 %v18
  %2534 = vmatprep.subr.mxu0 0.0
  %2535 = vmatpush1.msra.mxu0 %v19
  %2536 = vmatprep.subr.mxu0 0.0
  %2537 = vmatpush1.msra.mxu0 %v20
  %2538 = vmatprep.subr.mxu0 0.0
  %2539 = vmatpush1.msra.mxu0 %v21
  %2540 = vmatprep.subr.mxu0 0.0
  %2541 = vmatpush1.msra.mxu0 0.0
  %2542 = vmatprep.subr.mxu0 0.0
  %2543 = vmatpush1.msra.mxu0 0.0
  %2544 = vmatprep.subr.mxu0 0.0
  %2545 = vmatpush1.msra.mxu0 0.0
  %2546 = vmatprep.subr.mxu0 0.0
  %2547 = vmatpush1.msra.mxu0 0.0
  %2548 = vmatprep.subr.mxu0 0.0
  %2549 = vmatpush1.msra.mxu0 0.0
  %2550 = vmatprep.subr.mxu0 0.0
  %2551 = vmatpush1.msra.mxu0 0.0
  %2552 = vmatprep.subr.mxu0 0.0
  %2553 = vmatpush1.msra.mxu0 0.0
  %2554 = vmatprep.subr.mxu0 0.0
  %2555 = vmatpush1.msra.mxu0 0.0
  %2556 = vmatprep.subr.mxu0 0.0
  %2557 = vmatpush1.msra.mxu0 0.0
  %2558 = vmatprep.subr.mxu0 0.0
  %2559 = vmatpush1.msra.mxu0 0.0
  %2560 = vmatprep.subr.mxu0 0.0
  %2561 = vmatpush1.msra.mxu0 0.0
  %2562 = vmatprep.subr.mxu0 0.0
  %2563 = vmatpush1.msra.mxu0 0.0
  %2564 = vmatprep.subr.mxu0 0.0
  %2565 = vmatpush1.msra.mxu0 0.0
  %2566 = vmatprep.subr.mxu0 0.0
  %2567 = vmatpush1.msra.mxu0 0.0
  %2568 = vmatprep.subr.mxu0 0.0
  %2569 = vmatpush1.msra.mxu0 0.0
  %2570 = vmatprep.subr.mxu0 0.0
  %2571 = vmatpush1.msra.mxu0 0.0
  %2572 = vmatprep.subr.mxu0 0.0
  %2573 = vmatpush1.msra.mxu0 0.0
  %2574 = vmatprep.subr.mxu0 0.0
  %2575 = vmatpush1.msra.mxu0 0.0
  %2576 = vmatprep.subr.mxu0 0.0
  %2577 = vmatpush1.msra.mxu0 0.0
  %2578 = vmatprep.subr.mxu0 0.0
  %2579 = vmatpush1.msra.mxu0 0.0
  %2580 = vmatprep.subr.mxu0 0.0
  %2581 = vmatpush1.msra.mxu0 0.0
  %2582 = vmatprep.subr.mxu0 0.0
  %2583 = vmatpush1.msra.mxu0 0.0
  %2584 = vmatprep.subr.mxu0 0.0
  %2585 = vmatpush1.msra.mxu0 0.0
  %2586 = vmatprep.subr.mxu0 0.0
  %2587 = vmatpush1.msra.mxu0 0.0
  %2588 = vmatprep.subr.mxu0 0.0
  %2589 = vmatpush1.msra.mxu0 0.0
  %2590 = vmatprep.subr.mxu0 0.0
  %2591 = vmatpush1.msra.mxu0 0.0
  %2592 = vmatprep.subr.mxu0 0.0
  %2593 = vmatpush1.msra.mxu0 0.0
  %2594 = vmatprep.subr.mxu0 0.0
  %2595 = vmatpush1.msra.mxu0 0.0
  %2596 = vmatprep.mubr.f32.mxu0 0.0
  %2597 = vmatmul.mubr.f32.gmra.mrb[0].mxu0 %v2530
  %v2598 = vpop.f32.mrb[0].mxu0
  %v2599 = vadd.f32 %v2523, %v2598
  %v2600 = vpop.f32.mrb[0].mxu0
  %2601 = vdwg.mxu0
  %v2602 = vadd.f32 %v2599, %v38
  %v2603 = vxor.u32 %v2602, 2147483648
  %v2604 = vmul.f32 %v2603, 1.442695
  %v2605 = vpow.pop %v2604
  %v2606 = vadd.f32 %v2605, 1.0
  %v2607 = vrcp.pop %v2606
  %v2608 = vmul.f32 1.0, %v2607
  %v2609 = vtanh.pop %v2602
  %v2610 = vmul.f32 %v2608, %v2173
  %2612 = vrot.lane.b32.xlu0 %v2609, 64
  %v2613 = vpop.permute.xlu0 %2612
  %v2615 = vmul.f32 %v2608, %v2613
  %2617 = vrot.lane.b32.xlu0 %v2615, 32
  %v2618 = vpop.permute.xlu0 %2617
  %v2620 = vadd.f32 %v2610, %v2618
  %v2621 = vtanh.pop %v2620
  %2623 = vrot.lane.b32.xlu0 %v2621, 64
  %v2624 = vpop.permute.xlu0 %2623
  %v2626 = vmul.f32 %v2608, %v2624
  %2628 = vrot.lane.b32.xlu0 %v2354, 32
  %v2629 = vpop.permute.xlu0 %2628
  %v2630 = vsel %vm132, %v2629, 0
  %2632 = vmatprep.subr.mxu0 0.0
  %2633 = vmatpush1.msra.mxu0 %v30
  %2634 = vmatprep.subr.mxu0 0.0
  %2635 = vmatpush1.msra.mxu0 %v31
  %2636 = vmatprep.subr.mxu0 0.0
  %2637 = vmatpush1.msra.mxu0 %v32
  %2638 = vmatprep.subr.mxu0 0.0
  %2639 = vmatpush1.msra.mxu0 %v33
  %2640 = vmatprep.subr.mxu0 0.0
  %2641 = vmatpush1.msra.mxu0 0.0
  %2642 = vmatprep.subr.mxu0 0.0
  %2643 = vmatpush1.msra.mxu0 0.0
  %2644 = vmatprep.subr.mxu0 0.0
  %2645 = vmatpush1.msra.mxu0 0.0
  %2646 = vmatprep.subr.mxu0 0.0
  %2647 = vmatpush1.msra.mxu0 0.0
  %2648 = vmatprep.subr.mxu0 0.0
  %2649 = vmatpush1.msra.mxu0 0.0
  %2650 = vmatprep.subr.mxu0 0.0
  %2651 = vmatpush1.msra.mxu0 0.0
  %2652 = vmatprep.subr.mxu0 0.0
  %2653 = vmatpush1.msra.mxu0 0.0
  %2654 = vmatprep.subr.mxu0 0.0
  %2655 = vmatpush1.msra.mxu0 0.0
  %2656 = vmatprep.subr.mxu0 0.0
  %2657 = vmatpush1.msra.mxu0 0.0
  %2658 = vmatprep.subr.mxu0 0.0
  %2659 = vmatpush1.msra.mxu0 0.0
  %2660 = vmatprep.subr.mxu0 0.0
  %2661 = vmatpush1.msra.mxu0 0.0
  %2662 = vmatprep.subr.mxu0 0.0
  %2663 = vmatpush1.msra.mxu0 0.0
  %2664 = vmatprep.subr.mxu0 0.0
  %2665 = vmatpush1.msra.mxu0 0.0
  %2666 = vmatprep.subr.mxu0 0.0
  %2667 = vmatpush1.msra.mxu0 0.0
  %2668 = vmatprep.subr.mxu0 0.0
  %2669 = vmatpush1.msra.mxu0 0.0
  %2670 = vmatprep.subr.mxu0 0.0
  %2671 = vmatpush1.msra.mxu0 0.0
  %2672 = vmatprep.subr.mxu0 0.0
  %2673 = vmatpush1.msra.mxu0 0.0
  %2674 = vmatprep.subr.mxu0 0.0
  %2675 = vmatpush1.msra.mxu0 0.0
  %2676 = vmatprep.subr.mxu0 0.0
  %2677 = vmatpush1.msra.mxu0 0.0
  %2678 = vmatprep.subr.mxu0 0.0
  %2679 = vmatpush1.msra.mxu0 0.0
  %2680 = vmatprep.subr.mxu0 0.0
  %2681 = vmatpush1.msra.mxu0 0.0
  %2682 = vmatprep.subr.mxu0 0.0
  %2683 = vmatpush1.msra.mxu0 0.0
  %2684 = vmatprep.subr.mxu0 0.0
  %2685 = vmatpush1.msra.mxu0 0.0
  %2686 = vmatprep.subr.mxu0 0.0
  %2687 = vmatpush1.msra.mxu0 0.0
  %2688 = vmatprep.subr.mxu0 0.0
  %2689 = vmatpush1.msra.mxu0 0.0
  %2690 = vmatprep.subr.mxu0 0.0
  %2691 = vmatpush1.msra.mxu0 0.0
  %2692 = vmatprep.subr.mxu0 0.0
  %2693 = vmatpush1.msra.mxu0 0.0
  %2694 = vmatprep.subr.mxu0 0.0
  %2695 = vmatpush1.msra.mxu0 0.0
  %2696 = vmatprep.mubr.f32.mxu0 0.0
  %2697 = vmatmul.mubr.f32.gmra.mrb[0].mxu0 %v2630
  %v2698 = vpop.f32.mrb[0].mxu0
  %v2699 = vadd.f32 0.0, %v2698
  %v2700 = vpop.f32.mrb[0].mxu0
  %2701 = vdwg.mxu0
  %2703 = vrot.lane.b32.xlu0 %v2626, 32
  %v2704 = vpop.permute.xlu0 %2703
  %v2705 = vsel %vm132, %v2704, 0
  %2707 = vmatprep.subr.mxu0 0.0
  %2708 = vmatpush1.msra.mxu0 %v26
  %2709 = vmatprep.subr.mxu0 0.0
  %2710 = vmatpush1.msra.mxu0 %v27
  %2711 = vmatprep.subr.mxu0 0.0
  %2712 = vmatpush1.msra.mxu0 %v28
  %2713 = vmatprep.subr.mxu0 0.0
  %2714 = vmatpush1.msra.mxu0 %v29
  %2715 = vmatprep.subr.mxu0 0.0
  %2716 = vmatpush1.msra.mxu0 0.0
  %2717 = vmatprep.subr.mxu0 0.0
  %2718 = vmatpush1.msra.mxu0 0.0
  %2719 = vmatprep.subr.mxu0 0.0
  %2720 = vmatpush1.msra.mxu0 0.0
  %2721 = vmatprep.subr.mxu0 0.0
  %2722 = vmatpush1.msra.mxu0 0.0
  %2723 = vmatprep.subr.mxu0 0.0
  %2724 = vmatpush1.msra.mxu0 0.0
  %2725 = vmatprep.subr.mxu0 0.0
  %2726 = vmatpush1.msra.mxu0 0.0
  %2727 = vmatprep.subr.mxu0 0.0
  %2728 = vmatpush1.msra.mxu0 0.0
  %2729 = vmatprep.subr.mxu0 0.0
  %2730 = vmatpush1.msra.mxu0 0.0
  %2731 = vmatprep.subr.mxu0 0.0
  %2732 = vmatpush1.msra.mxu0 0.0
  %2733 = vmatprep.subr.mxu0 0.0
  %2734 = vmatpush1.msra.mxu0 0.0
  %2735 = vmatprep.subr.mxu0 0.0
  %2736 = vmatpush1.msra.mxu0 0.0
  %2737 = vmatprep.subr.mxu0 0.0
  %2738 = vmatpush1.msra.mxu0 0.0
  %2739 = vmatprep.subr.mxu0 0.0
  %2740 = vmatpush1.msra.mxu0 0.0
  %2741 = vmatprep.subr.mxu0 0.0
  %2742 = vmatpush1.msra.mxu0 0.0
  %2743 = vmatprep.subr.mxu0 0.0
  %2744 = vmatpush1.msra.mxu0 0.0
  %2745 = vmatprep.subr.mxu0 0.0
  %2746 = vmatpush1.msra.mxu0 0.0
  %2747 = vmatprep.subr.mxu0 0.0
  %2748 = vmatpush1.msra.mxu0 0.0
  %2749 = vmatprep.subr.mxu0 0.0
  %2750 = vmatpush1.msra.mxu0 0.0
  %2751 = vmatprep.subr.mxu0 0.0
  %2752 = vmatpush1.msra.mxu0 0.0
  %2753 = vmatprep.subr.mxu0 0.0
  %2754 = vmatpush1.msra.mxu0 0.0
  %2755 = vmatprep.subr.mxu0 0.0
  %2756 = vmatpush1.msra.mxu0 0.0
  %2757 = vmatprep.subr.mxu0 0.0
  %2758 = vmatpush1.msra.mxu0 0.0
  %2759 = vmatprep.subr.mxu0 0.0
  %2760 = vmatpush1.msra.mxu0 0.0
  %2761 = vmatprep.subr.mxu0 0.0
  %2762 = vmatpush1.msra.mxu0 0.0
  %2763 = vmatprep.subr.mxu0 0.0
  %2764 = vmatpush1.msra.mxu0 0.0
  %2765 = vmatprep.subr.mxu0 0.0
  %2766 = vmatpush1.msra.mxu0 0.0
  %2767 = vmatprep.subr.mxu0 0.0
  %2768 = vmatpush1.msra.mxu0 0.0
  %2769 = vmatprep.subr.mxu0 0.0
  %2770 = vmatpush1.msra.mxu0 0.0
  %2771 = vmatprep.mubr.f32.mxu0 0.0
  %2772 = vmatmul.mubr.f32.gmra.mrb[0].mxu0 %v2705
  %v2773 = vpop.f32.mrb[0].mxu0
  %v2774 = vadd.f32 %v2699, %v2773
  %v2775 = vpop.f32.mrb[0].mxu0
  %2776 = vdwg.mxu0
  %v2777 = vadd.f32 %v2774, %v43
  %v2778 = vxor.u32 %v2777, 2147483648
  %v2779 = vmul.f32 %v2778, 1.442695
  %v2780 = vpow.pop %v2779
  %v2781 = vadd.f32 %v2780, 1.0
  %v2782 = vrcp.pop %v2781
  %v2783 = vmul.f32 1.0, %v2782
  %v2784 = vtanh.pop %v2777
  %v2785 = vmul.f32 %v2783, %v2348
  %2787 = vrot.lane.b32.xlu0 %v2784, 64
  %v2788 = vpop.permute.xlu0 %2787
  %v2790 = vmul.f32 %v2783, %v2788
  %2792 = vrot.lane.b32.xlu0 %v2790, 32
  %v2793 = vpop.permute.xlu0 %2792
  %v2795 = vadd.f32 %v2785, %v2793
  %v2796 = vtanh.pop %v2795
  %2798 = vrot.lane.b32.xlu0 %v2796, 64
  %v2799 = vpop.permute.xlu0 %2798
  %v2801 = vmul.f32 %v2783, %v2799
  %2802 = vmatprep.subr.mxu0 0.0
  %2803 = vmatpush1.msra.mxu0 %v13
  %2804 = vmatprep.subr.mxu0 0.0
  %2805 = vmatpush1.msra.mxu0 %v14
  %2806 = vmatprep.subr.mxu0 0.0
  %2807 = vmatpush1.msra.mxu0 %v15
  %2808 = vmatprep.subr.mxu0 0.0
  %2809 = vmatpush1.msra.mxu0 %v16
  %2810 = vmatprep.subr.mxu0 0.0
  %2811 = vmatpush1.msra.mxu0 0.0
  %2812 = vmatprep.subr.mxu0 0.0
  %2813 = vmatpush1.msra.mxu0 0.0
  %2814 = vmatprep.subr.mxu0 0.0
  %2815 = vmatpush1.msra.mxu0 0.0
  %2816 = vmatprep.subr.mxu0 0.0
  %2817 = vmatpush1.msra.mxu0 0.0
  %2818 = vmatprep.subr.mxu0 0.0
  %2819 = vmatpush1.msra.mxu0 0.0
  %2820 = vmatprep.subr.mxu0 0.0
  %2821 = vmatpush1.msra.mxu0 0.0
  %2822 = vmatprep.subr.mxu0 0.0
  %2823 = vmatpush1.msra.mxu0 0.0
  %2824 = vmatprep.subr.mxu0 0.0
  %2825 = vmatpush1.msra.mxu0 0.0
  %2826 = vmatprep.subr.mxu0 0.0
  %2827 = vmatpush1.msra.mxu0 0.0
  %2828 = vmatprep.subr.mxu0 0.0
  %2829 = vmatpush1.msra.mxu0 0.0
  %2830 = vmatprep.subr.mxu0 0.0
  %2831 = vmatpush1.msra.mxu0 0.0
  %2832 = vmatprep.subr.mxu0 0.0
  %2833 = vmatpush1.msra.mxu0 0.0
  %2834 = vmatprep.subr.mxu0 0.0
  %2835 = vmatpush1.msra.mxu0 0.0
  %2836 = vmatprep.subr.mxu0 0.0
  %2837 = vmatpush1.msra.mxu0 0.0
  %2838 = vmatprep.subr.mxu0 0.0
  %2839 = vmatpush1.msra.mxu0 0.0
  %2840 = vmatprep.subr.mxu0 0.0
  %2841 = vmatpush1.msra.mxu0 0.0
  %2842 = vmatprep.subr.mxu0 0.0
  %2843 = vmatpush1.msra.mxu0 0.0
  %2844 = vmatprep.subr.mxu0 0.0
  %2845 = vmatpush1.msra.mxu0 0.0
  %2846 = vmatprep.subr.mxu0 0.0
  %2847 = vmatpush1.msra.mxu0 0.0
  %2848 = vmatprep.subr.mxu0 0.0
  %2849 = vmatpush1.msra.mxu0 0.0
  %2850 = vmatprep.subr.mxu0 0.0
  %2851 = vmatpush1.msra.mxu0 0.0
  %2852 = vmatprep.subr.mxu0 0.0
  %2853 = vmatpush1.msra.mxu0 0.0
  %2854 = vmatprep.subr.mxu0 0.0
  %2855 = vmatpush1.msra.mxu0 0.0
  %2856 = vmatprep.subr.mxu0 0.0
  %2857 = vmatpush1.msra.mxu0 0.0
  %2858 = vmatprep.subr.mxu0 0.0
  %2859 = vmatpush1.msra.mxu0 0.0
  %2860 = vmatprep.subr.mxu0 0.0
  %2861 = vmatpush1.msra.mxu0 0.0
  %2862 = vmatprep.subr.mxu0 0.0
  %2863 = vmatpush1.msra.mxu0 0.0
  %2864 = vmatprep.subr.mxu0 0.0
  %2865 = vmatpush1.msra.mxu0 0.0
  %2866 = vmatprep.mubr.f32.mxu0 0.0
  %2867 = vmatmul.mubr.f32.gmra.mrb[0].mxu0 %v2530
  %v2868 = vpop.f32.mrb[0].mxu0
  %v2869 = vadd.f32 0.0, %v2868
  %v2870 = vpop.f32.mrb[0].mxu0
  %2871 = vdwg.mxu0
  %v2873 = vrot.slane %v2869, 4
  %v2875 = vadd.f32 %v129, %v2873
  %v2876 = vxor.u32 %v2875, 2147483648
  %v2877 = vmul.f32 %v2876, 1.442695
  %v2878 = vpow.pop %v2877
  %v2879 = vadd.f32 %v2878, 1.0
  %v2880 = vrcp.pop %v2879
  %v2881 = vmul.f32 1.0, %v2880
  %v2882 = vtanh.pop %v2875
  %v2884 = vrot.slane %v2449, 6
  %v2886 = vmul.f32 %v2881, %v2884
  %2888 = vrot.lane.b32.xlu0 %v2882, 64
  %v2889 = vpop.permute.xlu0 %2888
  %v2891 = vmul.f32 %v2881, %v2889
  %2893 = vrot.lane.b32.xlu0 %v2891, 32
  %v2894 = vpop.permute.xlu0 %2893
  %v2896 = vadd.f32 %v2886, %v2894
  %v2897 = vtanh.pop %v2896
  %2899 = vrot.lane.b32.xlu0 %v2897, 64
  %v2900 = vpop.permute.xlu0 %2899
  %v2902 = vmul.f32 %v2881, %v2900
  %2903 = vmatprep.subr.mxu0 0.0
  %2904 = vmatpush1.msra.mxu0 %v22
  %2905 = vmatprep.subr.mxu0 0.0
  %2906 = vmatpush1.msra.mxu0 %v23
  %2907 = vmatprep.subr.mxu0 0.0
  %2908 = vmatpush1.msra.mxu0 %v24
  %2909 = vmatprep.subr.mxu0 0.0
  %2910 = vmatpush1.msra.mxu0 %v25
  %2911 = vmatprep.subr.mxu0 0.0
  %2912 = vmatpush1.msra.mxu0 0.0
  %2913 = vmatprep.subr.mxu0 0.0
  %2914 = vmatpush1.msra.mxu0 0.0
  %2915 = vmatprep.subr.mxu0 0.0
  %2916 = vmatpush1.msra.mxu0 0.0
  %2917 = vmatprep.subr.mxu0 0.0
  %2918 = vmatpush1.msra.mxu0 0.0
  %2919 = vmatprep.subr.mxu0 0.0
  %2920 = vmatpush1.msra.mxu0 0.0
  %2921 = vmatprep.subr.mxu0 0.0
  %2922 = vmatpush1.msra.mxu0 0.0
  %2923 = vmatprep.subr.mxu0 0.0
  %2924 = vmatpush1.msra.mxu0 0.0
  %2925 = vmatprep.subr.mxu0 0.0
  %2926 = vmatpush1.msra.mxu0 0.0
  %2927 = vmatprep.subr.mxu0 0.0
  %2928 = vmatpush1.msra.mxu0 0.0
  %2929 = vmatprep.subr.mxu0 0.0
  %2930 = vmatpush1.msra.mxu0 0.0
  %2931 = vmatprep.subr.mxu0 0.0
  %2932 = vmatpush1.msra.mxu0 0.0
  %2933 = vmatprep.subr.mxu0 0.0
  %2934 = vmatpush1.msra.mxu0 0.0
  %2935 = vmatprep.subr.mxu0 0.0
  %2936 = vmatpush1.msra.mxu0 0.0
  %2937 = vmatprep.subr.mxu0 0.0
  %2938 = vmatpush1.msra.mxu0 0.0
  %2939 = vmatprep.subr.mxu0 0.0
  %2940 = vmatpush1.msra.mxu0 0.0
  %2941 = vmatprep.subr.mxu0 0.0
  %2942 = vmatpush1.msra.mxu0 0.0
  %2943 = vmatprep.subr.mxu0 0.0
  %2944 = vmatpush1.msra.mxu0 0.0
  %2945 = vmatprep.subr.mxu0 0.0
  %2946 = vmatpush1.msra.mxu0 0.0
  %2947 = vmatprep.subr.mxu0 0.0
  %2948 = vmatpush1.msra.mxu0 0.0
  %2949 = vmatprep.subr.mxu0 0.0
  %2950 = vmatpush1.msra.mxu0 0.0
  %2951 = vmatprep.subr.mxu0 0.0
  %2952 = vmatpush1.msra.mxu0 0.0
  %2953 = vmatprep.subr.mxu0 0.0
  %2954 = vmatpush1.msra.mxu0 0.0
  %2955 = vmatprep.subr.mxu0 0.0
  %2956 = vmatpush1.msra.mxu0 0.0
  %2957 = vmatprep.subr.mxu0 0.0
  %2958 = vmatpush1.msra.mxu0 0.0
  %2959 = vmatprep.subr.mxu0 0.0
  %2960 = vmatpush1.msra.mxu0 0.0
  %2961 = vmatprep.subr.mxu0 0.0
  %2962 = vmatpush1.msra.mxu0 0.0
  %2963 = vmatprep.subr.mxu0 0.0
  %2964 = vmatpush1.msra.mxu0 0.0
  %2965 = vmatprep.subr.mxu0 0.0
  %2966 = vmatpush1.msra.mxu0 0.0
  %2967 = vmatprep.mubr.f32.mxu0 0.0
  %2968 = vmatmul.mubr.f32.gmra.mrb[0].mxu0 %v2705
  %v2969 = vpop.f32.mrb[0].mxu0
  %v2970 = vadd.f32 0.0, %v2969
  %v2971 = vpop.f32.mrb[0].mxu0
  %2972 = vdwg.mxu0
  %v2974 = vrot.slane %v2902, 4
  %2975 = vrot.lane.b32.xlu0 %v2974, 32
  %v2976 = vpop.permute.xlu0 %2975
  %v2977 = vsel %vm132, %v2976, 0
  %2979 = vmatprep.subr.mxu0 0.0
  %2980 = vmatpush1.msra.mxu0 %v18
  %2981 = vmatprep.subr.mxu0 0.0
  %2982 = vmatpush1.msra.mxu0 %v19
  %2983 = vmatprep.subr.mxu0 0.0
  %2984 = vmatpush1.msra.mxu0 %v20
  %2985 = vmatprep.subr.mxu0 0.0
  %2986 = vmatpush1.msra.mxu0 %v21
  %2987 = vmatprep.subr.mxu0 0.0
  %2988 = vmatpush1.msra.mxu0 0.0
  %2989 = vmatprep.subr.mxu0 0.0
  %2990 = vmatpush1.msra.mxu0 0.0
  %2991 = vmatprep.subr.mxu0 0.0
  %2992 = vmatpush1.msra.mxu0 0.0
  %2993 = vmatprep.subr.mxu0 0.0
  %2994 = vmatpush1.msra.mxu0 0.0
  %2995 = vmatprep.subr.mxu0 0.0
  %2996 = vmatpush1.msra.mxu0 0.0
  %2997 = vmatprep.subr.mxu0 0.0
  %2998 = vmatpush1.msra.mxu0 0.0
  %2999 = vmatprep.subr.mxu0 0.0
  %3000 = vmatpush1.msra.mxu0 0.0
  %3001 = vmatprep.subr.mxu0 0.0
  %3002 = vmatpush1.msra.mxu0 0.0
  %3003 = vmatprep.subr.mxu0 0.0
  %3004 = vmatpush1.msra.mxu0 0.0
  %3005 = vmatprep.subr.mxu0 0.0
  %3006 = vmatpush1.msra.mxu0 0.0
  %3007 = vmatprep.subr.mxu0 0.0
  %3008 = vmatpush1.msra.mxu0 0.0
  %3009 = vmatprep.subr.mxu0 0.0
  %3010 = vmatpush1.msra.mxu0 0.0
  %3011 = vmatprep.subr.mxu0 0.0
  %3012 = vmatpush1.msra.mxu0 0.0
  %3013 = vmatprep.subr.mxu0 0.0
  %3014 = vmatpush1.msra.mxu0 0.0
  %3015 = vmatprep.subr.mxu0 0.0
  %3016 = vmatpush1.msra.mxu0 0.0
  %3017 = vmatprep.subr.mxu0 0.0
  %3018 = vmatpush1.msra.mxu0 0.0
  %3019 = vmatprep.subr.mxu0 0.0
  %3020 = vmatpush1.msra.mxu0 0.0
  %3021 = vmatprep.subr.mxu0 0.0
  %3022 = vmatpush1.msra.mxu0 0.0
  %3023 = vmatprep.subr.mxu0 0.0
  %3024 = vmatpush1.msra.mxu0 0.0
  %3025 = vmatprep.subr.mxu0 0.0
  %3026 = vmatpush1.msra.mxu0 0.0
  %3027 = vmatprep.subr.mxu0 0.0
  %3028 = vmatpush1.msra.mxu0 0.0
  %3029 = vmatprep.subr.mxu0 0.0
  %3030 = vmatpush1.msra.mxu0 0.0
  %3031 = vmatprep.subr.mxu0 0.0
  %3032 = vmatpush1.msra.mxu0 0.0
  %3033 = vmatprep.subr.mxu0 0.0
  %3034 = vmatpush1.msra.mxu0 0.0
  %3035 = vmatprep.subr.mxu0 0.0
  %3036 = vmatpush1.msra.mxu0 0.0
  %3037 = vmatprep.subr.mxu0 0.0
  %3038 = vmatpush1.msra.mxu0 0.0
  %3039 = vmatprep.subr.mxu0 0.0
  %3040 = vmatpush1.msra.mxu0 0.0
  %3041 = vmatprep.subr.mxu0 0.0
  %3042 = vmatpush1.msra.mxu0 0.0
  %3043 = vmatprep.mubr.f32.mxu0 0.0
  %3044 = vmatmul.mubr.f32.gmra.mrb[0].mxu0 %v2977
  %v3045 = vpop.f32.mrb[0].mxu0
  %v3046 = vadd.f32 %v2970, %v3045
  %v3047 = vpop.f32.mrb[0].mxu0
  %3048 = vdwg.mxu0
  %v3049 = vadd.f32 %v3046, %v38
  %v3050 = vxor.u32 %v3049, 2147483648
  %v3051 = vmul.f32 %v3050, 1.442695
  %v3052 = vpow.pop %v3051
  %v3053 = vadd.f32 %v3052, 1.0
  %v3054 = vrcp.pop %v3053
  %v3055 = vmul.f32 1.0, %v3054
  %v3056 = vtanh.pop %v3049
  %v3057 = vmul.f32 %v3055, %v2620
  %3059 = vrot.lane.b32.xlu0 %v3056, 64
  %v3060 = vpop.permute.xlu0 %3059
  %v3062 = vmul.f32 %v3055, %v3060
  %3064 = vrot.lane.b32.xlu0 %v3062, 32
  %v3065 = vpop.permute.xlu0 %3064
  %v3067 = vadd.f32 %v3057, %v3065
  %v3068 = vtanh.pop %v3067
  %3070 = vrot.lane.b32.xlu0 %v3068, 64
  %v3071 = vpop.permute.xlu0 %3070
  %v3073 = vmul.f32 %v3055, %v3071
  %3075 = vrot.lane.b32.xlu0 %v2801, 32
  %v3076 = vpop.permute.xlu0 %3075
  %v3077 = vsel %vm132, %v3076, 0
  %3079 = vmatprep.subr.mxu0 0.0
  %3080 = vmatpush1.msra.mxu0 %v30
  %3081 = vmatprep.subr.mxu0 0.0
  %3082 = vmatpush1.msra.mxu0 %v31
  %3083 = vmatprep.subr.mxu0 0.0
  %3084 = vmatpush1.msra.mxu0 %v32
  %3085 = vmatprep.subr.mxu0 0.0
  %3086 = vmatpush1.msra.mxu0 %v33
  %3087 = vmatprep.subr.mxu0 0.0
  %3088 = vmatpush1.msra.mxu0 0.0
  %3089 = vmatprep.subr.mxu0 0.0
  %3090 = vmatpush1.msra.mxu0 0.0
  %3091 = vmatprep.subr.mxu0 0.0
  %3092 = vmatpush1.msra.mxu0 0.0
  %3093 = vmatprep.subr.mxu0 0.0
  %3094 = vmatpush1.msra.mxu0 0.0
  %3095 = vmatprep.subr.mxu0 0.0
  %3096 = vmatpush1.msra.mxu0 0.0
  %3097 = vmatprep.subr.mxu0 0.0
  %3098 = vmatpush1.msra.mxu0 0.0
  %3099 = vmatprep.subr.mxu0 0.0
  %3100 = vmatpush1.msra.mxu0 0.0
  %3101 = vmatprep.subr.mxu0 0.0
  %3102 = vmatpush1.msra.mxu0 0.0
  %3103 = vmatprep.subr.mxu0 0.0
  %3104 = vmatpush1.msra.mxu0 0.0
  %3105 = vmatprep.subr.mxu0 0.0
  %3106 = vmatpush1.msra.mxu0 0.0
  %3107 = vmatprep.subr.mxu0 0.0
  %3108 = vmatpush1.msra.mxu0 0.0
  %3109 = vmatprep.subr.mxu0 0.0
  %3110 = vmatpush1.msra.mxu0 0.0
  %3111 = vmatprep.subr.mxu0 0.0
  %3112 = vmatpush1.msra.mxu0 0.0
  %3113 = vmatprep.subr.mxu0 0.0
  %3114 = vmatpush1.msra.mxu0 0.0
  %3115 = vmatprep.subr.mxu0 0.0
  %3116 = vmatpush1.msra.mxu0 0.0
  %3117 = vmatprep.subr.mxu0 0.0
  %3118 = vmatpush1.msra.mxu0 0.0
  %3119 = vmatprep.subr.mxu0 0.0
  %3120 = vmatpush1.msra.mxu0 0.0
  %3121 = vmatprep.subr.mxu0 0.0
  %3122 = vmatpush1.msra.mxu0 0.0
  %3123 = vmatprep.subr.mxu0 0.0
  %3124 = vmatpush1.msra.mxu0 0.0
  %3125 = vmatprep.subr.mxu0 0.0
  %3126 = vmatpush1.msra.mxu0 0.0
  %3127 = vmatprep.subr.mxu0 0.0
  %3128 = vmatpush1.msra.mxu0 0.0
  %3129 = vmatprep.subr.mxu0 0.0
  %3130 = vmatpush1.msra.mxu0 0.0
  %3131 = vmatprep.subr.mxu0 0.0
  %3132 = vmatpush1.msra.mxu0 0.0
  %3133 = vmatprep.subr.mxu0 0.0
  %3134 = vmatpush1.msra.mxu0 0.0
  %3135 = vmatprep.subr.mxu0 0.0
  %3136 = vmatpush1.msra.mxu0 0.0
  %3137 = vmatprep.subr.mxu0 0.0
  %3138 = vmatpush1.msra.mxu0 0.0
  %3139 = vmatprep.subr.mxu0 0.0
  %3140 = vmatpush1.msra.mxu0 0.0
  %3141 = vmatprep.subr.mxu0 0.0
  %3142 = vmatpush1.msra.mxu0 0.0
  %3143 = vmatprep.mubr.f32.mxu0 0.0
  %3144 = vmatmul.mubr.f32.gmra.mrb[0].mxu0 %v3077
  %v3145 = vpop.f32.mrb[0].mxu0
  %v3146 = vadd.f32 0.0, %v3145
  %v3147 = vpop.f32.mrb[0].mxu0
  %3148 = vdwg.mxu0
  %3150 = vrot.lane.b32.xlu0 %v3073, 32
  %v3151 = vpop.permute.xlu0 %3150
  %v3152 = vsel %vm132, %v3151, 0
  %3154 = vmatprep.subr.mxu0 0.0
  %3155 = vmatpush1.msra.mxu0 %v26
  %3156 = vmatprep.subr.mxu0 0.0
  %3157 = vmatpush1.msra.mxu0 %v27
  %3158 = vmatprep.subr.mxu0 0.0
  %3159 = vmatpush1.msra.mxu0 %v28
  %3160 = vmatprep.subr.mxu0 0.0
  %3161 = vmatpush1.msra.mxu0 %v29
  %3162 = vmatprep.subr.mxu0 0.0
  %3163 = vmatpush1.msra.mxu0 0.0
  %3164 = vmatprep.subr.mxu0 0.0
  %3165 = vmatpush1.msra.mxu0 0.0
  %3166 = vmatprep.subr.mxu0 0.0
  %3167 = vmatpush1.msra.mxu0 0.0
  %3168 = vmatprep.subr.mxu0 0.0
  %3169 = vmatpush1.msra.mxu0 0.0
  %3170 = vmatprep.subr.mxu0 0.0
  %3171 = vmatpush1.msra.mxu0 0.0
  %3172 = vmatprep.subr.mxu0 0.0
  %3173 = vmatpush1.msra.mxu0 0.0
  %3174 = vmatprep.subr.mxu0 0.0
  %3175 = vmatpush1.msra.mxu0 0.0
  %3176 = vmatprep.subr.mxu0 0.0
  %3177 = vmatpush1.msra.mxu0 0.0
  %3178 = vmatprep.subr.mxu0 0.0
  %3179 = vmatpush1.msra.mxu0 0.0
  %3180 = vmatprep.subr.mxu0 0.0
  %3181 = vmatpush1.msra.mxu0 0.0
  %3182 = vmatprep.subr.mxu0 0.0
  %3183 = vmatpush1.msra.mxu0 0.0
  %3184 = vmatprep.subr.mxu0 0.0
  %3185 = vmatpush1.msra.mxu0 0.0
  %3186 = vmatprep.subr.mxu0 0.0
  %3187 = vmatpush1.msra.mxu0 0.0
  %3188 = vmatprep.subr.mxu0 0.0
  %3189 = vmatpush1.msra.mxu0 0.0
  %3190 = vmatprep.subr.mxu0 0.0
  %3191 = vmatpush1.msra.mxu0 0.0
  %3192 = vmatprep.subr.mxu0 0.0
  %3193 = vmatpush1.msra.mxu0 0.0
  %3194 = vmatprep.subr.mxu0 0.0
  %3195 = vmatpush1.msra.mxu0 0.0
  %3196 = vmatprep.subr.mxu0 0.0
  %3197 = vmatpush1.msra.mxu0 0.0
  %3198 = vmatprep.subr.mxu0 0.0
  %3199 = vmatpush1.msra.mxu0 0.0
  %3200 = vmatprep.subr.mxu0 0.0
  %3201 = vmatpush1.msra.mxu0 0.0
  %3202 = vmatprep.subr.mxu0 0.0
  %3203 = vmatpush1.msra.mxu0 0.0
  %3204 = vmatprep.subr.mxu0 0.0
  %3205 = vmatpush1.msra.mxu0 0.0
  %3206 = vmatprep.subr.mxu0 0.0
  %3207 = vmatpush1.msra.mxu0 0.0
  %3208 = vmatprep.subr.mxu0 0.0
  %3209 = vmatpush1.msra.mxu0 0.0
  %3210 = vmatprep.subr.mxu0 0.0
  %3211 = vmatpush1.msra.mxu0 0.0
  %3212 = vmatprep.subr.mxu0 0.0
  %3213 = vmatpush1.msra.mxu0 0.0
  %3214 = vmatprep.subr.mxu0 0.0
  %3215 = vmatpush1.msra.mxu0 0.0
  %3216 = vmatprep.subr.mxu0 0.0
  %3217 = vmatpush1.msra.mxu0 0.0
  %3218 = vmatprep.mubr.f32.mxu0 0.0
  %3219 = vmatmul.mubr.f32.gmra.mrb[0].mxu0 %v3152
  %v3220 = vpop.f32.mrb[0].mxu0
  %v3221 = vadd.f32 %v3146, %v3220
  %v3222 = vpop.f32.mrb[0].mxu0
  %3223 = vdwg.mxu0
  %v3224 = vadd.f32 %v3221, %v43
  %v3225 = vxor.u32 %v3224, 2147483648
  %v3226 = vmul.f32 %v3225, 1.442695
  %v3227 = vpow.pop %v3226
  %v3228 = vadd.f32 %v3227, 1.0
  %v3229 = vrcp.pop %v3228
  %v3230 = vmul.f32 1.0, %v3229
  %v3231 = vtanh.pop %v3224
  %v3232 = vmul.f32 %v3230, %v2795
  %3234 = vrot.lane.b32.xlu0 %v3231, 64
  %v3235 = vpop.permute.xlu0 %3234
  %v3237 = vmul.f32 %v3230, %v3235
  %3239 = vrot.lane.b32.xlu0 %v3237, 32
  %v3240 = vpop.permute.xlu0 %3239
  %v3242 = vadd.f32 %v3232, %v3240
  %v3243 = vtanh.pop %v3242
  %3245 = vrot.lane.b32.xlu0 %v3243, 64
  %v3246 = vpop.permute.xlu0 %3245
  %v3248 = vmul.f32 %v3230, %v3246
  %3249 = vmatprep.subr.mxu0 0.0
  %3250 = vmatpush1.msra.mxu0 %v13
  %3251 = vmatprep.subr.mxu0 0.0
  %3252 = vmatpush1.msra.mxu0 %v14
  %3253 = vmatprep.subr.mxu0 0.0
  %3254 = vmatpush1.msra.mxu0 %v15
  %3255 = vmatprep.subr.mxu0 0.0
  %3256 = vmatpush1.msra.mxu0 %v16
  %3257 = vmatprep.subr.mxu0 0.0
  %3258 = vmatpush1.msra.mxu0 0.0
  %3259 = vmatprep.subr.mxu0 0.0
  %3260 = vmatpush1.msra.mxu0 0.0
  %3261 = vmatprep.subr.mxu0 0.0
  %3262 = vmatpush1.msra.mxu0 0.0
  %3263 = vmatprep.subr.mxu0 0.0
  %3264 = vmatpush1.msra.mxu0 0.0
  %3265 = vmatprep.subr.mxu0 0.0
  %3266 = vmatpush1.msra.mxu0 0.0
  %3267 = vmatprep.subr.mxu0 0.0
  %3268 = vmatpush1.msra.mxu0 0.0
  %3269 = vmatprep.subr.mxu0 0.0
  %3270 = vmatpush1.msra.mxu0 0.0
  %3271 = vmatprep.subr.mxu0 0.0
  %3272 = vmatpush1.msra.mxu0 0.0
  %3273 = vmatprep.subr.mxu0 0.0
  %3274 = vmatpush1.msra.mxu0 0.0
  %3275 = vmatprep.subr.mxu0 0.0
  %3276 = vmatpush1.msra.mxu0 0.0
  %3277 = vmatprep.subr.mxu0 0.0
  %3278 = vmatpush1.msra.mxu0 0.0
  %3279 = vmatprep.subr.mxu0 0.0
  %3280 = vmatpush1.msra.mxu0 0.0
  %3281 = vmatprep.subr.mxu0 0.0
  %3282 = vmatpush1.msra.mxu0 0.0
  %3283 = vmatprep.subr.mxu0 0.0
  %3284 = vmatpush1.msra.mxu0 0.0
  %3285 = vmatprep.subr.mxu0 0.0
  %3286 = vmatpush1.msra.mxu0 0.0
  %3287 = vmatprep.subr.mxu0 0.0
  %3288 = vmatpush1.msra.mxu0 0.0
  %3289 = vmatprep.subr.mxu0 0.0
  %3290 = vmatpush1.msra.mxu0 0.0
  %3291 = vmatprep.subr.mxu0 0.0
  %3292 = vmatpush1.msra.mxu0 0.0
  %3293 = vmatprep.subr.mxu0 0.0
  %3294 = vmatpush1.msra.mxu0 0.0
  %3295 = vmatprep.subr.mxu0 0.0
  %3296 = vmatpush1.msra.mxu0 0.0
  %3297 = vmatprep.subr.mxu0 0.0
  %3298 = vmatpush1.msra.mxu0 0.0
  %3299 = vmatprep.subr.mxu0 0.0
  %3300 = vmatpush1.msra.mxu0 0.0
  %3301 = vmatprep.subr.mxu0 0.0
  %3302 = vmatpush1.msra.mxu0 0.0
  %3303 = vmatprep.subr.mxu0 0.0
  %3304 = vmatpush1.msra.mxu0 0.0
  %3305 = vmatprep.subr.mxu0 0.0
  %3306 = vmatpush1.msra.mxu0 0.0
  %3307 = vmatprep.subr.mxu0 0.0
  %3308 = vmatpush1.msra.mxu0 0.0
  %3309 = vmatprep.subr.mxu0 0.0
  %3310 = vmatpush1.msra.mxu0 0.0
  %3311 = vmatprep.subr.mxu0 0.0
  %3312 = vmatpush1.msra.mxu0 0.0
  %3313 = vmatprep.mubr.f32.mxu0 0.0
  %3314 = vmatmul.mubr.f32.gmra.mrb[0].mxu0 %v2977
  %v3315 = vpop.f32.mrb[0].mxu0
  %v3316 = vadd.f32 0.0, %v3315
  %v3317 = vpop.f32.mrb[0].mxu0
  %3318 = vdwg.mxu0
  %v3320 = vrot.slane %v3316, 2
  %v3322 = vadd.f32 %v129, %v3320
  %v3323 = vxor.u32 %v3322, 2147483648
  %v3324 = vmul.f32 %v3323, 1.442695
  %v3325 = vpow.pop %v3324
  %v3326 = vadd.f32 %v3325, 1.0
  %v3327 = vrcp.pop %v3326
  %v3328 = vmul.f32 1.0, %v3327
  %v3329 = vtanh.pop %v3322
  %v3331 = vrot.slane %v2896, 6
  %v3333 = vmul.f32 %v3328, %v3331
  %3335 = vrot.lane.b32.xlu0 %v3329, 64
  %v3336 = vpop.permute.xlu0 %3335
  %v3338 = vmul.f32 %v3328, %v3336
  %3340 = vrot.lane.b32.xlu0 %v3338, 32
  %v3341 = vpop.permute.xlu0 %3340
  %v3343 = vadd.f32 %v3333, %v3341
  %v3344 = vtanh.pop %v3343
  %3346 = vrot.lane.b32.xlu0 %v3344, 64
  %v3347 = vpop.permute.xlu0 %3346
  %v3349 = vmul.f32 %v3328, %v3347
  %3350 = vmatprep.subr.mxu0 0.0
  %3351 = vmatpush1.msra.mxu0 %v22
  %3352 = vmatprep.subr.mxu0 0.0
  %3353 = vmatpush1.msra.mxu0 %v23
  %3354 = vmatprep.subr.mxu0 0.0
  %3355 = vmatpush1.msra.mxu0 %v24
  %3356 = vmatprep.subr.mxu0 0.0
  %3357 = vmatpush1.msra.mxu0 %v25
  %3358 = vmatprep.subr.mxu0 0.0
  %3359 = vmatpush1.msra.mxu0 0.0
  %3360 = vmatprep.subr.mxu0 0.0
  %3361 = vmatpush1.msra.mxu0 0.0
  %3362 = vmatprep.subr.mxu0 0.0
  %3363 = vmatpush1.msra.mxu0 0.0
  %3364 = vmatprep.subr.mxu0 0.0
  %3365 = vmatpush1.msra.mxu0 0.0
  %3366 = vmatprep.subr.mxu0 0.0
  %3367 = vmatpush1.msra.mxu0 0.0
  %3368 = vmatprep.subr.mxu0 0.0
  %3369 = vmatpush1.msra.mxu0 0.0
  %3370 = vmatprep.subr.mxu0 0.0
  %3371 = vmatpush1.msra.mxu0 0.0
  %3372 = vmatprep.subr.mxu0 0.0
  %3373 = vmatpush1.msra.mxu0 0.0
  %3374 = vmatprep.subr.mxu0 0.0
  %3375 = vmatpush1.msra.mxu0 0.0
  %3376 = vmatprep.subr.mxu0 0.0
  %3377 = vmatpush1.msra.mxu0 0.0
  %3378 = vmatprep.subr.mxu0 0.0
  %3379 = vmatpush1.msra.mxu0 0.0
  %3380 = vmatprep.subr.mxu0 0.0
  %3381 = vmatpush1.msra.mxu0 0.0
  %3382 = vmatprep.subr.mxu0 0.0
  %3383 = vmatpush1.msra.mxu0 0.0
  %3384 = vmatprep.subr.mxu0 0.0
  %3385 = vmatpush1.msra.mxu0 0.0
  %3386 = vmatprep.subr.mxu0 0.0
  %3387 = vmatpush1.msra.mxu0 0.0
  %3388 = vmatprep.subr.mxu0 0.0
  %3389 = vmatpush1.msra.mxu0 0.0
  %3390 = vmatprep.subr.mxu0 0.0
  %3391 = vmatpush1.msra.mxu0 0.0
  %3392 = vmatprep.subr.mxu0 0.0
  %3393 = vmatpush1.msra.mxu0 0.0
  %3394 = vmatprep.subr.mxu0 0.0
  %3395 = vmatpush1.msra.mxu0 0.0
  %3396 = vmatprep.subr.mxu0 0.0
  %3397 = vmatpush1.msra.mxu0 0.0
  %3398 = vmatprep.subr.mxu0 0.0
  %3399 = vmatpush1.msra.mxu0 0.0
  %3400 = vmatprep.subr.mxu0 0.0
  %3401 = vmatpush1.msra.mxu0 0.0
  %3402 = vmatprep.subr.mxu0 0.0
  %3403 = vmatpush1.msra.mxu0 0.0
  %3404 = vmatprep.subr.mxu0 0.0
  %3405 = vmatpush1.msra.mxu0 0.0
  %3406 = vmatprep.subr.mxu0 0.0
  %3407 = vmatpush1.msra.mxu0 0.0
  %3408 = vmatprep.subr.mxu0 0.0
  %3409 = vmatpush1.msra.mxu0 0.0
  %3410 = vmatprep.subr.mxu0 0.0
  %3411 = vmatpush1.msra.mxu0 0.0
  %3412 = vmatprep.subr.mxu0 0.0
  %3413 = vmatpush1.msra.mxu0 0.0
  %3414 = vmatprep.mubr.f32.mxu0 0.0
  %3415 = vmatmul.mubr.f32.gmra.mrb[0].mxu0 %v3152
  %v3416 = vpop.f32.mrb[0].mxu0
  %v3417 = vadd.f32 0.0, %v3416
  %v3418 = vpop.f32.mrb[0].mxu0
  %3419 = vdwg.mxu0
  %v3421 = vrot.slane %v3349, 6
  %3422 = vrot.lane.b32.xlu0 %v3421, 32
  %v3423 = vpop.permute.xlu0 %3422
  %v3424 = vsel %vm132, %v3423, 0
  %3426 = vmatprep.subr.mxu0 0.0
  %3427 = vmatpush1.msra.mxu0 %v18
  %3428 = vmatprep.subr.mxu0 0.0
  %3429 = vmatpush1.msra.mxu0 %v19
  %3430 = vmatprep.subr.mxu0 0.0
  %3431 = vmatpush1.msra.mxu0 %v20
  %3432 = vmatprep.subr.mxu0 0.0
  %3433 = vmatpush1.msra.mxu0 %v21
  %3434 = vmatprep.subr.mxu0 0.0
  %3435 = vmatpush1.msra.mxu0 0.0
  %3436 = vmatprep.subr.mxu0 0.0
  %3437 = vmatpush1.msra.mxu0 0.0
  %3438 = vmatprep.subr.mxu0 0.0
  %3439 = vmatpush1.msra.mxu0 0.0
  %3440 = vmatprep.subr.mxu0 0.0
  %3441 = vmatpush1.msra.mxu0 0.0
  %3442 = vmatprep.subr.mxu0 0.0
  %3443 = vmatpush1.msra.mxu0 0.0
  %3444 = vmatprep.subr.mxu0 0.0
  %3445 = vmatpush1.msra.mxu0 0.0
  %3446 = vmatprep.subr.mxu0 0.0
  %3447 = vmatpush1.msra.mxu0 0.0
  %3448 = vmatprep.subr.mxu0 0.0
  %3449 = vmatpush1.msra.mxu0 0.0
  %3450 = vmatprep.subr.mxu0 0.0
  %3451 = vmatpush1.msra.mxu0 0.0
  %3452 = vmatprep.subr.mxu0 0.0
  %3453 = vmatpush1.msra.mxu0 0.0
  %3454 = vmatprep.subr.mxu0 0.0
  %3455 = vmatpush1.msra.mxu0 0.0
  %3456 = vmatprep.subr.mxu0 0.0
  %3457 = vmatpush1.msra.mxu0 0.0
  %3458 = vmatprep.subr.mxu0 0.0
  %3459 = vmatpush1.msra.mxu0 0.0
  %3460 = vmatprep.subr.mxu0 0.0
  %3461 = vmatpush1.msra.mxu0 0.0
  %3462 = vmatprep.subr.mxu0 0.0
  %3463 = vmatpush1.msra.mxu0 0.0
  %3464 = vmatprep.subr.mxu0 0.0
  %3465 = vmatpush1.msra.mxu0 0.0
  %3466 = vmatprep.subr.mxu0 0.0
  %3467 = vmatpush1.msra.mxu0 0.0
  %3468 = vmatprep.subr.mxu0 0.0
  %3469 = vmatpush1.msra.mxu0 0.0
  %3470 = vmatprep.subr.mxu0 0.0
  %3471 = vmatpush1.msra.mxu0 0.0
  %3472 = vmatprep.subr.mxu0 0.0
  %3473 = vmatpush1.msra.mxu0 0.0
  %3474 = vmatprep.subr.mxu0 0.0
  %3475 = vmatpush1.msra.mxu0 0.0
  %3476 = vmatprep.subr.mxu0 0.0
  %3477 = vmatpush1.msra.mxu0 0.0
  %3478 = vmatprep.subr.mxu0 0.0
  %3479 = vmatpush1.msra.mxu0 0.0
  %3480 = vmatprep.subr.mxu0 0.0
  %3481 = vmatpush1.msra.mxu0 0.0
  %3482 = vmatprep.subr.mxu0 0.0
  %3483 = vmatpush1.msra.mxu0 0.0
  %3484 = vmatprep.subr.mxu0 0.0
  %3485 = vmatpush1.msra.mxu0 0.0
  %3486 = vmatprep.subr.mxu0 0.0
  %3487 = vmatpush1.msra.mxu0 0.0
  %3488 = vmatprep.subr.mxu0 0.0
  %3489 = vmatpush1.msra.mxu0 0.0
  %3490 = vmatprep.mubr.f32.mxu0 0.0
  %3491 = vmatmul.mubr.f32.gmra.mrb[0].mxu0 %v3424
  %v3492 = vpop.f32.mrb[0].mxu0
  %v3493 = vadd.f32 %v3417, %v3492
  %v3494 = vpop.f32.mrb[0].mxu0
  %3495 = vdwg.mxu0
  %v3496 = vadd.f32 %v3493, %v38
  %v3497 = vxor.u32 %v3496, 2147483648
  %v3498 = vmul.f32 %v3497, 1.442695
  %v3499 = vpow.pop %v3498
  %v3500 = vadd.f32 %v3499, 1.0
  %v3501 = vrcp.pop %v3500
  %v3502 = vmul.f32 1.0, %v3501
  %v3503 = vtanh.pop %v3496
  %v3504 = vmul.f32 %v3502, %v3067
  %3506 = vrot.lane.b32.xlu0 %v3503, 64
  %v3507 = vpop.permute.xlu0 %3506
  %v3509 = vmul.f32 %v3502, %v3507
  %3511 = vrot.lane.b32.xlu0 %v3509, 32
  %v3512 = vpop.permute.xlu0 %3511
  %v3514 = vadd.f32 %v3504, %v3512
  %v3515 = vtanh.pop %v3514
  %3517 = vrot.lane.b32.xlu0 %v3515, 64
  %v3518 = vpop.permute.xlu0 %3517
  %v3520 = vmul.f32 %v3502, %v3518
  %3522 = vrot.lane.b32.xlu0 %v3248, 32
  %v3523 = vpop.permute.xlu0 %3522
  %v3524 = vsel %vm132, %v3523, 0
  %3526 = vmatprep.subr.mxu0 0.0
  %3527 = vmatpush1.msra.mxu0 %v30
  %3528 = vmatprep.subr.mxu0 0.0
  %3529 = vmatpush1.msra.mxu0 %v31
  %3530 = vmatprep.subr.mxu0 0.0
  %3531 = vmatpush1.msra.mxu0 %v32
  %3532 = vmatprep.subr.mxu0 0.0
  %3533 = vmatpush1.msra.mxu0 %v33
  %3534 = vmatprep.subr.mxu0 0.0
  %3535 = vmatpush1.msra.mxu0 0.0
  %3536 = vmatprep.subr.mxu0 0.0
  %3537 = vmatpush1.msra.mxu0 0.0
  %3538 = vmatprep.subr.mxu0 0.0
  %3539 = vmatpush1.msra.mxu0 0.0
  %3540 = vmatprep.subr.mxu0 0.0
  %3541 = vmatpush1.msra.mxu0 0.0
  %3542 = vmatprep.subr.mxu0 0.0
  %3543 = vmatpush1.msra.mxu0 0.0
  %3544 = vmatprep.subr.mxu0 0.0
  %3545 = vmatpush1.msra.mxu0 0.0
  %3546 = vmatprep.subr.mxu0 0.0
  %3547 = vmatpush1.msra.mxu0 0.0
  %3548 = vmatprep.subr.mxu0 0.0
  %3549 = vmatpush1.msra.mxu0 0.0
  %3550 = vmatprep.subr.mxu0 0.0
  %3551 = vmatpush1.msra.mxu0 0.0
  %3552 = vmatprep.subr.mxu0 0.0
  %3553 = vmatpush1.msra.mxu0 0.0
  %3554 = vmatprep.subr.mxu0 0.0
  %3555 = vmatpush1.msra.mxu0 0.0
  %3556 = vmatprep.subr.mxu0 0.0
  %3557 = vmatpush1.msra.mxu0 0.0
  %3558 = vmatprep.subr.mxu0 0.0
  %3559 = vmatpush1.msra.mxu0 0.0
  %3560 = vmatprep.subr.mxu0 0.0
  %3561 = vmatpush1.msra.mxu0 0.0
  %3562 = vmatprep.subr.mxu0 0.0
  %3563 = vmatpush1.msra.mxu0 0.0
  %3564 = vmatprep.subr.mxu0 0.0
  %3565 = vmatpush1.msra.mxu0 0.0
  %3566 = vmatprep.subr.mxu0 0.0
  %3567 = vmatpush1.msra.mxu0 0.0
  %3568 = vmatprep.subr.mxu0 0.0
  %3569 = vmatpush1.msra.mxu0 0.0
  %3570 = vmatprep.subr.mxu0 0.0
  %3571 = vmatpush1.msra.mxu0 0.0
  %3572 = vmatprep.subr.mxu0 0.0
  %3573 = vmatpush1.msra.mxu0 0.0
  %3574 = vmatprep.subr.mxu0 0.0
  %3575 = vmatpush1.msra.mxu0 0.0
  %3576 = vmatprep.subr.mxu0 0.0
  %3577 = vmatpush1.msra.mxu0 0.0
  %3578 = vmatprep.subr.mxu0 0.0
  %3579 = vmatpush1.msra.mxu0 0.0
  %3580 = vmatprep.subr.mxu0 0.0
  %3581 = vmatpush1.msra.mxu0 0.0
  %3582 = vmatprep.subr.mxu0 0.0
  %3583 = vmatpush1.msra.mxu0 0.0
  %3584 = vmatprep.subr.mxu0 0.0
  %3585 = vmatpush1.msra.mxu0 0.0
  %3586 = vmatprep.subr.mxu0 0.0
  %3587 = vmatpush1.msra.mxu0 0.0
  %3588 = vmatprep.subr.mxu0 0.0
  %3589 = vmatpush1.msra.mxu0 0.0
  %3590 = vmatprep.mubr.f32.mxu0 0.0
  %3591 = vmatmul.mubr.f32.gmra.mrb[0].mxu0 %v3524
  %v3592 = vpop.f32.mrb[0].mxu0
  %v3593 = vadd.f32 0.0, %v3592
  %v3594 = vpop.f32.mrb[0].mxu0
  %3595 = vdwg.mxu0
  %3597 = vrot.lane.b32.xlu0 %v3520, 32
  %v3598 = vpop.permute.xlu0 %3597
  %v3599 = vsel %vm132, %v3598, 0
  %3601 = vmatprep.subr.mxu0 0.0
  %3602 = vmatpush1.msra.mxu0 %v26
  %3603 = vmatprep.subr.mxu0 0.0
  %3604 = vmatpush1.msra.mxu0 %v27
  %3605 = vmatprep.subr.mxu0 0.0
  %3606 = vmatpush1.msra.mxu0 %v28
  %3607 = vmatprep.subr.mxu0 0.0
  %3608 = vmatpush1.msra.mxu0 %v29
  %3609 = vmatprep.subr.mxu0 0.0
  %3610 = vmatpush1.msra.mxu0 0.0
  %3611 = vmatprep.subr.mxu0 0.0
  %3612 = vmatpush1.msra.mxu0 0.0
  %3613 = vmatprep.subr.mxu0 0.0
  %3614 = vmatpush1.msra.mxu0 0.0
  %3615 = vmatprep.subr.mxu0 0.0
  %3616 = vmatpush1.msra.mxu0 0.0
  %3617 = vmatprep.subr.mxu0 0.0
  %3618 = vmatpush1.msra.mxu0 0.0
  %3619 = vmatprep.subr.mxu0 0.0
  %3620 = vmatpush1.msra.mxu0 0.0
  %3621 = vmatprep.subr.mxu0 0.0
  %3622 = vmatpush1.msra.mxu0 0.0
  %3623 = vmatprep.subr.mxu0 0.0
  %3624 = vmatpush1.msra.mxu0 0.0
  %3625 = vmatprep.subr.mxu0 0.0
  %3626 = vmatpush1.msra.mxu0 0.0
  %3627 = vmatprep.subr.mxu0 0.0
  %3628 = vmatpush1.msra.mxu0 0.0
  %3629 = vmatprep.subr.mxu0 0.0
  %3630 = vmatpush1.msra.mxu0 0.0
  %3631 = vmatprep.subr.mxu0 0.0
  %3632 = vmatpush1.msra.mxu0 0.0
  %3633 = vmatprep.subr.mxu0 0.0
  %3634 = vmatpush1.msra.mxu0 0.0
  %3635 = vmatprep.subr.mxu0 0.0
  %3636 = vmatpush1.msra.mxu0 0.0
  %3637 = vmatprep.subr.mxu0 0.0
  %3638 = vmatpush1.msra.mxu0 0.0
  %3639 = vmatprep.subr.mxu0 0.0
  %3640 = vmatpush1.msra.mxu0 0.0
  %3641 = vmatprep.subr.mxu0 0.0
  %3642 = vmatpush1.msra.mxu0 0.0
  %3643 = vmatprep.subr.mxu0 0.0
  %3644 = vmatpush1.msra.mxu0 0.0
  %3645 = vmatprep.subr.mxu0 0.0
  %3646 = vmatpush1.msra.mxu0 0.0
  %3647 = vmatprep.subr.mxu0 0.0
  %3648 = vmatpush1.msra.mxu0 0.0
  %3649 = vmatprep.subr.mxu0 0.0
  %3650 = vmatpush1.msra.mxu0 0.0
  %3651 = vmatprep.subr.mxu0 0.0
  %3652 = vmatpush1.msra.mxu0 0.0
  %3653 = vmatprep.subr.mxu0 0.0
  %3654 = vmatpush1.msra.mxu0 0.0
  %3655 = vmatprep.subr.mxu0 0.0
  %3656 = vmatpush1.msra.mxu0 0.0
  %3657 = vmatprep.subr.mxu0 0.0
  %3658 = vmatpush1.msra.mxu0 0.0
  %3659 = vmatprep.subr.mxu0 0.0
  %3660 = vmatpush1.msra.mxu0 0.0
  %3661 = vmatprep.subr.mxu0 0.0
  %3662 = vmatpush1.msra.mxu0 0.0
  %3663 = vmatprep.subr.mxu0 0.0
  %3664 = vmatpush1.msra.mxu0 0.0
  %3665 = vmatprep.mubr.f32.mxu0 0.0
  %3666 = vmatmul.mubr.f32.gmra.mrb[0].mxu0 %v3599
  %v3667 = vpop.f32.mrb[0].mxu0
  %v3668 = vadd.f32 %v3593, %v3667
  %v3669 = vpop.f32.mrb[0].mxu0
  %3670 = vdwg.mxu0
  %v3671 = vadd.f32 %v3668, %v43
  %v3672 = vxor.u32 %v3671, 2147483648
  %v3673 = vmul.f32 %v3672, 1.442695
  %v3674 = vpow.pop %v3673
  %v3675 = vadd.f32 %v3674, 1.0
  %v3676 = vrcp.pop %v3675
  %v3677 = vmul.f32 1.0, %v3676
  %v3678 = vtanh.pop %v3671
  %v3679 = vmul.f32 %v3677, %v3242
  %3681 = vrot.lane.b32.xlu0 %v3678, 64
  %v3682 = vpop.permute.xlu0 %3681
  %v3684 = vmul.f32 %v3677, %v3682
  %3686 = vrot.lane.b32.xlu0 %v3684, 32
  %v3687 = vpop.permute.xlu0 %3686
  %v3689 = vadd.f32 %v3679, %v3687
  %v3690 = vtanh.pop %v3689
  %3692 = vrot.lane.b32.xlu0 %v3690, 64
  %v3693 = vpop.permute.xlu0 %3692
  %v3695 = vmul.f32 %v3677, %v3693
  %3696 = vrot.lane.b32.xlu0 %v3349, 32
  %v3697 = vpop.permute.xlu0 %3696
  %v3699 = vrot.slane %v3349, 1
  %3700 = vrot.lane.b32.xlu0 %v3699, 96
  %v3701 = vpop.permute.xlu0 %3700
  %v3704 = vrot.slane %v3343, 1
  %3705 = vrot.lane.b32.xlu0 %v3704, 64
  %v3706 = vpop.permute.xlu0 %3705
  %v3708 = vsel %vm132, %v3697, %v3343
  %vm3709 = vcmask 523264
  %v3710 = vsel %vm3709, %v3708, %v3701
  %vm3711 = vcmask 785408
  %v3712 = vsel %vm3711, %v3710, %v3706
  %v3714 = vrot.slane %v3520, 1
  %3715 = vrot.lane.b32.xlu0 %v3714, 96
  %v3716 = vpop.permute.xlu0 %3715
  %v3719 = vrot.slane %v3514, 1
  %3720 = vrot.lane.b32.xlu0 %v3719, 64
  %v3721 = vpop.permute.xlu0 %3720
  %v3723 = vsel %vm132, %v3598, %v3514
  %v3724 = vsel %vm3709, %v3723, %v3716
  %v3725 = vsel %vm3711, %v3724, %v3721
  %3727 = vrot.lane.b32.xlu0 %v3695, 32
  %v3728 = vpop.permute.xlu0 %3727
  %v3730 = vrot.slane %v3695, 1
  %3731 = vrot.lane.b32.xlu0 %v3730, 96
  %v3732 = vpop.permute.xlu0 %3731
  %v3735 = vrot.slane %v3689, 1
  %3736 = vrot.lane.b32.xlu0 %v3735, 64
  %v3737 = vpop.permute.xlu0 %3736
  %v3739 = vsel %vm132, %v3728, %v3689
  %v3740 = vsel %vm3709, %v3739, %v3732
  %v3741 = vsel %vm3711, %v3740, %v3737
  %v3743 = vrot.slane %v3712, 6
  %v3746 = vrot.slane %v3725, 7
  %v3749 = vrot.slane %v3741, 6
  %vm3751 = vcmask 1040384
  %v3752 = vsel %vm3751, %v3743, %v3746
  %vm3753 = vcmask 1041408
  %v3754 = vsel %vm3753, %v3752, %v3749
  %3755 = vst [vmem:[%s2] sm:$0x7] %v3754
  // Predicated region
  $region10: #{encoder_forward.1} parent=0 // pred_check
    _
  $region11: #{encoder_forward.1} parent=0 // pred_check_branch
    %3757 = sbr.rel (0) target = $region13
  $region12: #{encoder_forward.1} parent=0 // pred_region
    _
  $region13: #{encoder_forward.1} parent=0 // pred_fallthru
    _
  // Predicated region
  $region14: #{encoder_forward.1} parent=0 // pred_check
    _
  $region15: #{encoder_forward.1} parent=0 // pred_check_branch
    %3759 = sbr.rel (0) target = $region17
  $region16: #{encoder_forward.1} parent=0 // pred_region
    _
  $region17: #{encoder_forward.1} parent=0 // pred_fallthru
    _

</llo_original>
